<compile_context>
chip_gen: v5e
topology: v5e:2x2
jax: 0.10.0
libtpu: 0.0.40
codegen_flags: <defaults>
</compile_context>

<pallas_src>
import jax
import jax.numpy as jnp
from jax.experimental import pallas as pl
from jax.experimental.pallas import tpu as pltpu

# ---------------- model hyper-parameters ------------------------------------------
# Kept SMALL but lane/sublane aligned (multiples of (8, 128)); structure identical to
# the PyTorch module (embed -> 3-layer LSTM -> linear over the flattened sequence).
NUM_LAYERS = 3
SEQ_LEN = 8
BATCH = 8            # sublane-aligned
EMBED_DIM = 128      # lane-aligned
HIDDEN_DIM = 128     # lane-aligned
VOCAB_SIZE = 128     # lane-aligned


# ---------------- fused Pallas kernel ----------------------------------------------
def poetry_fwd_kernel(tok_ref, emb_ref,
                      w_ih0_ref, w_hh0_ref, b0_ref,
                      w_ih1_ref, w_hh1_ref, b1_ref,
                      w_ih2_ref, w_hh2_ref, b2_ref,
                      w_out_ref, b_out_ref,
                      h0_ref, c0_ref,
                      logits_ref, hN_ref, cN_ref,
                      y_sc):
    """Whole forward pass in one kernel invocation (no grid)."""
    TB = tok_ref.shape[0]
    V = emb_ref.shape[0]
    _L, B, H = h0_ref.shape
    T = TB // B

    # ---- Embedding gather fused as a one-hot MXU matmul (table resident in VMEM) ----
    col = jax.lax.broadcasted_iota(jnp.int32, (TB, V), 1)
    one_hot = (col == tok_ref[...]).astype(jnp.float32)                      # (TB, V)
    x = jnp.dot(one_hot, emb_ref[...], preferred_element_type=jnp.float32)   # (TB, E)

    layer_params = ((w_ih0_ref, w_hh0_ref, b0_ref),
                    (w_ih1_ref, w_hh1_ref, b1_ref),
                    (w_ih2_ref, w_hh2_ref, b2_ref))

    for layer, (w_ih_ref, w_hh_ref, b_ref) in enumerate(layer_params):
        # Hoisted input projection + bias: one big matmul per layer (not per step).
        xg = (jnp.dot(x, w_ih_ref[...], preferred_element_type=jnp.float32)
              + b_ref[...])                                                   # (TB, 4H)
        w_hh = w_hh_ref[...]                                                  # (H, 4H)
        h = h0_ref[layer]                                                     # (B, H)
        c = c0_ref[layer]                                                     # (B, H)

        # Serial recurrence: only the h @ W_hh matmul + gate math per step.
        for t in range(T):                       # static, fully unrolled
            gates = xg[t * B:(t + 1) * B, :] + jnp.dot(
                h, w_hh, preferred_element_type=jnp.float32)                  # (B, 4H)
            # gate column order is (i, f, o, g): one sigmoid over 3H lanes, one tanh.
            sig = jax.nn.sigmoid(gates[:, :3 * H])
            g = jnp.tanh(gates[:, 3 * H:])
            i_g = sig[:, :H]
            f_g = sig[:, H:2 * H]
            o_g = sig[:, 2 * H:3 * H]
            c = f_g * c + i_g * g
            h = o_g * jnp.tanh(c)
            y_sc[t * B:(t + 1) * B, :] = h       # static, exact (8,128)-tile store

        hN_ref[layer] = h
        cN_ref[layer] = c
        x = y_sc[...]                            # (TB, H) input to the next layer

    # ---- Final linear over the whole flattened sequence at once ----
    logits_ref[...] = (jnp.dot(x, w_out_ref[...], preferred_element_type=jnp.float32)
                       + b_out_ref[...])


# ---------------- wrapper ------------------------------------------------------------
@jax.jit
def poetry_model_forward(params, tokens, h0, c0):
    """tokens: (T, B) int32. Returns (logits (T*B, V), (h_n, c_n))."""
    T, B = tokens.shape
    tok = tokens.reshape(T * B, 1).astype(jnp.int32)

    args = [tok, params["embedding"]]
    for lp in params["lstm"]:
        args += [lp["w_ih_t"], lp["w_hh_t"], lp["b"]]
    args += [params["linear_w_t"], params["linear_b"], h0, c0]

    logits, h_n, c_n = pl.pallas_call(
        poetry_fwd_kernel,
        out_shape=(
            jax.ShapeDtypeStruct((T * B, VOCAB_SIZE), jnp.float32),
            jax.ShapeDtypeStruct((NUM_LAYERS, B, HIDDEN_DIM), jnp.float32),
            jax.ShapeDtypeStruct((NUM_LAYERS, B, HIDDEN_DIM), jnp.float32),
        ),
        scratch_shapes=[pltpu.VMEM((T * B, HIDDEN_DIM), jnp.float32)],
    )(*args)
    return logits, (h_n, c_n)


# ---------------- parameter prep -------------------------------------------------------
def _permute_gates(w):
    """Reorder gate blocks along the last axis from PyTorch (i,f,g,o) to (i,f,o,g)."""
    i, f, g, o = jnp.split(w, 4, axis=-1)
    return jnp.concatenate([i, f, o, g], axis=-1)


def init_params(key, vocab_size, embedding_dim, hidden_dim, num_layers):
    """Deterministic init (uniform(-1/sqrt(H), 1/sqrt(H)) like PyTorch nn.LSTM/Linear)."""
    params = {}
    k = 1.0 / jnp.sqrt(jnp.float32(hidden_dim))
    keys = jax.random.split(key, 2 + 6 * num_layers)
    ki = iter(keys)
    params["embedding"] = jax.random.normal(next(ki), (vocab_size, embedding_dim),
                                            jnp.float32) * 0.1
    lstm = []
    for layer in range(num_layers):
        in_dim = embedding_dim if layer == 0 else hidden_dim
        w_ih = jax.random.uniform(next(ki), (4 * hidden_dim, in_dim), jnp.float32, -k, k)
        w_hh = jax.random.uniform(next(ki), (4 * hidden_dim, hidden_dim), jnp.float32, -k, k)
        b_ih = jax.random.uniform(next(ki), (4 * hidden_dim,), jnp.float32, -k, k)
        b_hh = jax.random.uniform(next(ki), (4 * hidden_dim,), jnp.float32, -k, k)
        lstm.append({
            "w_ih_t": _permute_gates(w_ih.T),                       # (in_dim, 4H), (i,f,o,g)
            "w_hh_t": _permute_gates(w_hh.T),                       # (H, 4H),      (i,f,o,g)
            "b": _permute_gates((b_ih + b_hh).reshape(1, -1)),      # (1, 4H),      (i,f,o,g)
        })
    params["lstm"] = lstm
    w1 = jax.random.uniform(next(ki), (vocab_size, hidden_dim), jnp.float32, -k, k)
    b1 = jax.random.uniform(next(ki), (vocab_size,), jnp.float32, -k, k)
    params["linear_w_t"] = w1.T                       # (H, V)
    params["linear_b"] = b1.reshape(1, -1)            # (1, V)
    return params


# ---------------- pure-JAX reference (same permuted-gate convention) --------------------
def reference_forward(params, tokens, h0, c0):
    T, B = tokens.shape
    H = HIDDEN_DIM
    x = jnp.take(params["embedding"], tokens, axis=0)        # (T, B, E)
    h_n, c_n = [], []
    for layer in range(NUM_LAYERS):
        p = params["lstm"][layer]

        def step(carry, xt, p=p):
            h, c = carry
            gates = xt @ p["w_ih_t"] + h @ p["w_hh_t"] + p["b"]
            i = jax.nn.sigmoid(gates[:, 0 * H:1 * H])
            f = jax.nn.sigmoid(gates[:, 1 * H:2 * H])
            o = jax.nn.sigmoid(gates[:, 2 * H:3 * H])
            g = jnp.tanh(gates[:, 3 * H:4 * H])
            c = f * c + i * g
            h = o * jnp.tanh(c)
            return (h, c), h

        (h, c), ys = jax.lax.scan(step, (h0[layer], c0[layer]), x)
        x = ys
        h_n.append(h)
        c_n.append(c)
    logits = x.reshape(T * B, H) @ params["linear_w_t"] + params["linear_b"]
    return logits, (jnp.stack(h_n, 0), jnp.stack(c_n, 0))


if __name__ == "__main__":
    key = jax.random.PRNGKey(0)
    pkey, tkey = jax.random.split(key)
    params = init_params(pkey, VOCAB_SIZE, EMBED_DIM, HIDDEN_DIM, NUM_LAYERS)

    tokens = jax.random.randint(tkey, (SEQ_LEN, BATCH), 0, VOCAB_SIZE, dtype=jnp.int32)
    # hidden=None path in the PyTorch module: zero-initialized h_0 / c_0.
    h0 = jnp.zeros((NUM_LAYERS, BATCH, HIDDEN_DIM), jnp.float32)
    c0 = jnp.zeros((NUM_LAYERS, BATCH, HIDDEN_DIM), jnp.float32)

    logits, (h_n, c_n) = poetry_model_forward(params, tokens, h0, c0)
    jax.block_until_ready((logits, h_n, c_n))

    assert logits.shape == (SEQ_LEN * BATCH, VOCAB_SIZE)
    assert h_n.shape == (NUM_LAYERS, BATCH, HIDDEN_DIM)
    assert c_n.shape == (NUM_LAYERS, BATCH, HIDDEN_DIM)

    # Correctness vs. pure-JAX reference of the same forward pass.
    ref_logits, (ref_h, ref_c) = reference_forward(params, tokens, h0, c0)
    assert jnp.allclose(logits, ref_logits, atol=1e-3, rtol=1e-3)
    assert jnp.allclose(h_n, ref_h, atol=1e-3, rtol=1e-3)
    assert jnp.allclose(c_n, ref_c, atol=1e-3, rtol=1e-3)

    print("KERNEL_OK")
</pallas_src>

<mosaic_0001>
module attributes {stable_mosaic.version = 11 : i64} {
  func.func @poetry_fwd_kernel(%arg0: memref<64x1xi32, #tpu.memory_space<vmem>>, %arg1: memref<128x128xf32, #tpu.memory_space<vmem>>, %arg2: memref<128x512xf32, #tpu.memory_space<vmem>>, %arg3: memref<128x512xf32, #tpu.memory_space<vmem>>, %arg4: memref<1x512xf32, #tpu.memory_space<vmem>>, %arg5: memref<128x512xf32, #tpu.memory_space<vmem>>, %arg6: memref<128x512xf32, #tpu.memory_space<vmem>>, %arg7: memref<1x512xf32, #tpu.memory_space<vmem>>, %arg8: memref<128x512xf32, #tpu.memory_space<vmem>>, %arg9: memref<128x512xf32, #tpu.memory_space<vmem>>, %arg10: memref<1x512xf32, #tpu.memory_space<vmem>>, %arg11: memref<128x128xf32, #tpu.memory_space<vmem>>, %arg12: memref<1x128xf32, #tpu.memory_space<vmem>>, %arg13: memref<3x8x128xf32, #tpu.memory_space<vmem>>, %arg14: memref<3x8x128xf32, #tpu.memory_space<vmem>>, %arg15: memref<64x128xf32, #tpu.memory_space<vmem>>, %arg16: memref<3x8x128xf32, #tpu.memory_space<vmem>>, %arg17: memref<3x8x128xf32, #tpu.memory_space<vmem>>, %arg18: memref<64x128xf32, #tpu.memory_space<vmem>>) attributes {dimension_semantics = [], scalar_prefetch = 0 : i64, scratch_operands = 1 : i64, tpu.core_type = #tpu.core_type<tc>} {
    %0 = tpu.iota {dimensions = array<i32: 1>} : vector<64x128xi32>
    %c0 = arith.constant 0 : index
    %c0_0 = arith.constant 0 : index
    %1 = vector.load %arg0[%c0, %c0_0] : memref<64x1xi32, #tpu.memory_space<vmem>>, vector<64x1xi32>
    %2 = vector.broadcast %1 : vector<64x1xi32> to vector<64x128xi32>
    %3 = arith.cmpi eq, %0, %2 : vector<64x128xi32>
    %4 = arith.extui %3 : vector<64x128xi1> to vector<64x128xi32>
    %5 = arith.sitofp %4 : vector<64x128xi32> to vector<64x128xf32>
    %c0_1 = arith.constant 0 : index
    %c0_2 = arith.constant 0 : index
    %6 = vector.load %arg1[%c0_1, %c0_2] : memref<128x128xf32, #tpu.memory_space<vmem>>, vector<128x128xf32>
    %cst = arith.constant dense<0.000000e+00> : vector<64x128xf32>
    %7 = tpu.matmul %5, %6, %cst {dimension_numbers = #tpu.dot_dimension_numbers<[1], [0], [0], [1], [0, 0, 1, 1], [], []>} : vector<64x128xf32>, vector<128x128xf32>, vector<64x128xf32> -> vector<64x128xf32>
    %c0_3 = arith.constant 0 : index
    %c0_4 = arith.constant 0 : index
    %8 = vector.load %arg2[%c0_3, %c0_4] : memref<128x512xf32, #tpu.memory_space<vmem>>, vector<128x512xf32>
    %cst_5 = arith.constant dense<0.000000e+00> : vector<64x512xf32>
    %9 = tpu.matmul %7, %8, %cst_5 {dimension_numbers = #tpu.dot_dimension_numbers<[1], [0], [0], [1], [0, 0, 1, 1], [], []>} : vector<64x128xf32>, vector<128x512xf32>, vector<64x512xf32> -> vector<64x512xf32>
    %c0_6 = arith.constant 0 : index
    %c0_7 = arith.constant 0 : index
    %10 = vector.load %arg4[%c0_6, %c0_7] : memref<1x512xf32, #tpu.memory_space<vmem>>, vector<1x512xf32>
    %11 = vector.broadcast %10 : vector<1x512xf32> to vector<64x512xf32>
    %12 = arith.addf %9, %11 : vector<64x512xf32>
    %c0_8 = arith.constant 0 : index
    %c0_9 = arith.constant 0 : index
    %13 = vector.load %arg3[%c0_8, %c0_9] : memref<128x512xf32, #tpu.memory_space<vmem>>, vector<128x512xf32>
    %c0_10 = arith.constant 0 : index
    %c0_11 = arith.constant 0 : index
    %c0_12 = arith.constant 0 : index
    %14 = vector.load %arg13[%c0_10, %c0_11, %c0_12] : memref<3x8x128xf32, #tpu.memory_space<vmem>>, vector<1x8x128xf32>
    %15 = vector.shape_cast %14 : vector<1x8x128xf32> to vector<8x128xf32>
    %c0_13 = arith.constant 0 : index
    %c0_14 = arith.constant 0 : index
    %c0_15 = arith.constant 0 : index
    %16 = vector.load %arg14[%c0_13, %c0_14, %c0_15] : memref<3x8x128xf32, #tpu.memory_space<vmem>>, vector<1x8x128xf32>
    %17 = vector.shape_cast %16 : vector<1x8x128xf32> to vector<8x128xf32>
    %18 = vector.extract_strided_slice %12 {offsets = [0, 0], sizes = [8, 512], strides = [1, 1]} : vector<64x512xf32> to vector<8x512xf32>
    %cst_16 = arith.constant dense<0.000000e+00> : vector<8x512xf32>
    %19 = tpu.matmul %15, %13, %cst_16 {dimension_numbers = #tpu.dot_dimension_numbers<[1], [0], [0], [1], [0, 0, 1, 1], [], []>} : vector<8x128xf32>, vector<128x512xf32>, vector<8x512xf32> -> vector<8x512xf32>
    %20 = arith.addf %18, %19 : vector<8x512xf32>
    %21 = vector.extract_strided_slice %20 {offsets = [0, 0], sizes = [8, 384], strides = [1, 1]} : vector<8x512xf32> to vector<8x384xf32>
    %22 = arith.negf %21 : vector<8x384xf32>
    %23 = math.exp %22 : vector<8x384xf32>
    %cst_17 = arith.constant 1.000000e+00 : f32
    %24 = vector.broadcast %cst_17 : f32 to vector<8x384xf32>
    %25 = arith.addf %24, %23 : vector<8x384xf32>
    %26 = arith.divf %24, %25 : vector<8x384xf32>
    %27 = vector.extract_strided_slice %20 {offsets = [0, 384], sizes = [8, 128], strides = [1, 1]} : vector<8x512xf32> to vector<8x128xf32>
    %28 = math.tanh %27 : vector<8x128xf32>
    %29 = vector.extract_strided_slice %26 {offsets = [0, 0], sizes = [8, 128], strides = [1, 1]} : vector<8x384xf32> to vector<8x128xf32>
    %30 = vector.extract_strided_slice %26 {offsets = [0, 128], sizes = [8, 128], strides = [1, 1]} : vector<8x384xf32> to vector<8x128xf32>
    %31 = vector.extract_strided_slice %26 {offsets = [0, 256], sizes = [8, 128], strides = [1, 1]} : vector<8x384xf32> to vector<8x128xf32>
    %32 = arith.mulf %30, %17 : vector<8x128xf32>
    %33 = arith.mulf %29, %28 : vector<8x128xf32>
    %34 = arith.addf %32, %33 : vector<8x128xf32>
    %35 = math.tanh %34 : vector<8x128xf32>
    %36 = arith.mulf %31, %35 : vector<8x128xf32>
    %c0_18 = arith.constant 0 : index
    %c0_19 = arith.constant 0 : index
    %37 = vector.load %arg18[%c0_18, %c0_19] : memref<64x128xf32, #tpu.memory_space<vmem>>, vector<8x128xf32>
    tpu.vector_store %arg18[%c0_18, %c0_19], %36 {strides = array<i32>} : memref<64x128xf32, #tpu.memory_space<vmem>>, vector<8x128xf32>,
    %38 = vector.extract_strided_slice %12 {offsets = [8, 0], sizes = [8, 512], strides = [1, 1]} : vector<64x512xf32> to vector<8x512xf32>
    %cst_20 = arith.constant dense<0.000000e+00> : vector<8x512xf32>
    %39 = tpu.matmul %36, %13, %cst_20 {dimension_numbers = #tpu.dot_dimension_numbers<[1], [0], [0], [1], [0, 0, 1, 1], [], []>} : vector<8x128xf32>, vector<128x512xf32>, vector<8x512xf32> -> vector<8x512xf32>
    %40 = arith.addf %38, %39 : vector<8x512xf32>
    %41 = vector.extract_strided_slice %40 {offsets = [0, 0], sizes = [8, 384], strides = [1, 1]} : vector<8x512xf32> to vector<8x384xf32>
    %42 = arith.negf %41 : vector<8x384xf32>
    %43 = math.exp %42 : vector<8x384xf32>
    %cst_21 = arith.constant 1.000000e+00 : f32
    %44 = vector.broadcast %cst_21 : f32 to vector<8x384xf32>
    %45 = arith.addf %44, %43 : vector<8x384xf32>
    %46 = arith.divf %44, %45 : vector<8x384xf32>
    %47 = vector.extract_strided_slice %40 {offsets = [0, 384], sizes = [8, 128], strides = [1, 1]} : vector<8x512xf32> to vector<8x128xf32>
    %48 = math.tanh %47 : vector<8x128xf32>
    %49 = vector.extract_strided_slice %46 {offsets = [0, 0], sizes = [8, 128], strides = [1, 1]} : vector<8x384xf32> to vector<8x128xf32>
    %50 = vector.extract_strided_slice %46 {offsets = [0, 128], sizes = [8, 128], strides = [1, 1]} : vector<8x384xf32> to vector<8x128xf32>
    %51 = vector.extract_strided_slice %46 {offsets = [0, 256], sizes = [8, 128], strides = [1, 1]} : vector<8x384xf32> to vector<8x128xf32>
    %52 = arith.mulf %50, %34 : vector<8x128xf32>
    %53 = arith.mulf %49, %48 : vector<8x128xf32>
    %54 = arith.addf %52, %53 : vector<8x128xf32>
    %55 = math.tanh %54 : vector<8x128xf32>
    %56 = arith.mulf %51, %55 : vector<8x128xf32>
    %c8 = arith.constant 8 : index
    %c0_22 = arith.constant 0 : index
    %57 = vector.load %arg18[%c8, %c0_22] : memref<64x128xf32, #tpu.memory_space<vmem>>, vector<8x128xf32>
    tpu.vector_store %arg18[%c8, %c0_22], %56 {strides = array<i32>} : memref<64x128xf32, #tpu.memory_space<vmem>>, vector<8x128xf32>,
    %58 = vector.extract_strided_slice %12 {offsets = [16, 0], sizes = [8, 512], strides = [1, 1]} : vector<64x512xf32> to vector<8x512xf32>
    %cst_23 = arith.constant dense<0.000000e+00> : vector<8x512xf32>
    %59 = tpu.matmul %56, %13, %cst_23 {dimension_numbers = #tpu.dot_dimension_numbers<[1], [0], [0], [1], [0, 0, 1, 1], [], []>} : vector<8x128xf32>, vector<128x512xf32>, vector<8x512xf32> -> vector<8x512xf32>
    %60 = arith.addf %58, %59 : vector<8x512xf32>
    %61 = vector.extract_strided_slice %60 {offsets = [0, 0], sizes = [8, 384], strides = [1, 1]} : vector<8x512xf32> to vector<8x384xf32>
    %62 = arith.negf %61 : vector<8x384xf32>
    %63 = math.exp %62 : vector<8x384xf32>
    %cst_24 = arith.constant 1.000000e+00 : f32
    %64 = vector.broadcast %cst_24 : f32 to vector<8x384xf32>
    %65 = arith.addf %64, %63 : vector<8x384xf32>
    %66 = arith.divf %64, %65 : vector<8x384xf32>
    %67 = vector.extract_strided_slice %60 {offsets = [0, 384], sizes = [8, 128], strides = [1, 1]} : vector<8x512xf32> to vector<8x128xf32>
    %68 = math.tanh %67 : vector<8x128xf32>
    %69 = vector.extract_strided_slice %66 {offsets = [0, 0], sizes = [8, 128], strides = [1, 1]} : vector<8x384xf32> to vector<8x128xf32>
    %70 = vector.extract_strided_slice %66 {offsets = [0, 128], sizes = [8, 128], strides = [1, 1]} : vector<8x384xf32> to vector<8x128xf32>
    %71 = vector.extract_strided_slice %66 {offsets = [0, 256], sizes = [8, 128], strides = [1, 1]} : vector<8x384xf32> to vector<8x128xf32>
    %72 = arith.mulf %70, %54 : vector<8x128xf32>
    %73 = arith.mulf %69, %68 : vector<8x128xf32>
    %74 = arith.addf %72, %73 : vector<8x128xf32>
    %75 = math.tanh %74 : vector<8x128xf32>
    %76 = arith.mulf %71, %75 : vector<8x128xf32>
    %c16 = arith.constant 16 : index
    %c0_25 = arith.constant 0 : index
    %77 = vector.load %arg18[%c16, %c0_25] : memref<64x128xf32, #tpu.memory_space<vmem>>, vector<8x128xf32>
    tpu.vector_store %arg18[%c16, %c0_25], %76 {strides = array<i32>} : memref<64x128xf32, #tpu.memory_space<vmem>>, vector<8x128xf32>,
    %78 = vector.extract_strided_slice %12 {offsets = [24, 0], sizes = [8, 512], strides = [1, 1]} : vector<64x512xf32> to vector<8x512xf32>
    %cst_26 = arith.constant dense<0.000000e+00> : vector<8x512xf32>
    %79 = tpu.matmul %76, %13, %cst_26 {dimension_numbers = #tpu.dot_dimension_numbers<[1], [0], [0], [1], [0, 0, 1, 1], [], []>} : vector<8x128xf32>, vector<128x512xf32>, vector<8x512xf32> -> vector<8x512xf32>
    %80 = arith.addf %78, %79 : vector<8x512xf32>
    %81 = vector.extract_strided_slice %80 {offsets = [0, 0], sizes = [8, 384], strides = [1, 1]} : vector<8x512xf32> to vector<8x384xf32>
    %82 = arith.negf %81 : vector<8x384xf32>
    %83 = math.exp %82 : vector<8x384xf32>
    %cst_27 = arith.constant 1.000000e+00 : f32
    %84 = vector.broadcast %cst_27 : f32 to vector<8x384xf32>
    %85 = arith.addf %84, %83 : vector<8x384xf32>
    %86 = arith.divf %84, %85 : vector<8x384xf32>
    %87 = vector.extract_strided_slice %80 {offsets = [0, 384], sizes = [8, 128], strides = [1, 1]} : vector<8x512xf32> to vector<8x128xf32>
    %88 = math.tanh %87 : vector<8x128xf32>
    %89 = vector.extract_strided_slice %86 {offsets = [0, 0], sizes = [8, 128], strides = [1, 1]} : vector<8x384xf32> to vector<8x128xf32>
    %90 = vector.extract_strided_slice %86 {offsets = [0, 128], sizes = [8, 128], strides = [1, 1]} : vector<8x384xf32> to vector<8x128xf32>
    %91 = vector.extract_strided_slice %86 {offsets = [0, 256], sizes = [8, 128], strides = [1, 1]} : vector<8x384xf32> to vector<8x128xf32>
    %92 = arith.mulf %90, %74 : vector<8x128xf32>
    %93 = arith.mulf %89, %88 : vector<8x128xf32>
    %94 = arith.addf %92, %93 : vector<8x128xf32>
    %95 = math.tanh %94 : vector<8x128xf32>
    %96 = arith.mulf %91, %95 : vector<8x128xf32>
    %c24 = arith.constant 24 : index
    %c0_28 = arith.constant 0 : index
    %97 = vector.load %arg18[%c24, %c0_28] : memref<64x128xf32, #tpu.memory_space<vmem>>, vector<8x128xf32>
    tpu.vector_store %arg18[%c24, %c0_28], %96 {strides = array<i32>} : memref<64x128xf32, #tpu.memory_space<vmem>>, vector<8x128xf32>,
    %98 = vector.extract_strided_slice %12 {offsets = [32, 0], sizes = [8, 512], strides = [1, 1]} : vector<64x512xf32> to vector<8x512xf32>
    %cst_29 = arith.constant dense<0.000000e+00> : vector<8x512xf32>
    %99 = tpu.matmul %96, %13, %cst_29 {dimension_numbers = #tpu.dot_dimension_numbers<[1], [0], [0], [1], [0, 0, 1, 1], [], []>} : vector<8x128xf32>, vector<128x512xf32>, vector<8x512xf32> -> vector<8x512xf32>
    %100 = arith.addf %98, %99 : vector<8x512xf32>
    %101 = vector.extract_strided_slice %100 {offsets = [0, 0], sizes = [8, 384], strides = [1, 1]} : vector<8x512xf32> to vector<8x384xf32>
    %102 = arith.negf %101 : vector<8x384xf32>
    %103 = math.exp %102 : vector<8x384xf32>
    %cst_30 = arith.constant 1.000000e+00 : f32
    %104 = vector.broadcast %cst_30 : f32 to vector<8x384xf32>
    %105 = arith.addf %104, %103 : vector<8x384xf32>
    %106 = arith.divf %104, %105 : vector<8x384xf32>
    %107 = vector.extract_strided_slice %100 {offsets = [0, 384], sizes = [8, 128], strides = [1, 1]} : vector<8x512xf32> to vector<8x128xf32>
    %108 = math.tanh %107 : vector<8x128xf32>
    %109 = vector.extract_strided_slice %106 {offsets = [0, 0], sizes = [8, 128], strides = [1, 1]} : vector<8x384xf32> to vector<8x128xf32>
    %110 = vector.extract_strided_slice %106 {offsets = [0, 128], sizes = [8, 128], strides = [1, 1]} : vector<8x384xf32> to vector<8x128xf32>
    %111 = vector.extract_strided_slice %106 {offsets = [0, 256], sizes = [8, 128], strides = [1, 1]} : vector<8x384xf32> to vector<8x128xf32>
    %112 = arith.mulf %110, %94 : vector<8x128xf32>
    %113 = arith.mulf %109, %108 : vector<8x128xf32>
    %114 = arith.addf %112, %113 : vector<8x128xf32>
    %115 = math.tanh %114 : vector<8x128xf32>
    %116 = arith.mulf %111, %115 : vector<8x128xf32>
    %c32 = arith.constant 32 : index
    %c0_31 = arith.constant 0 : index
    %117 = vector.load %arg18[%c32, %c0_31] : memref<64x128xf32, #tpu.memory_space<vmem>>, vector<8x128xf32>
    tpu.vector_store %arg18[%c32, %c0_31], %116 {strides = array<i32>} : memref<64x128xf32, #tpu.memory_space<vmem>>, vector<8x128xf32>,
    %118 = vector.extract_strided_slice %12 {offsets = [40, 0], sizes = [8, 512], strides = [1, 1]} : vector<64x512xf32> to vector<8x512xf32>
    %cst_32 = arith.constant dense<0.000000e+00> : vector<8x512xf32>
    %119 = tpu.matmul %116, %13, %cst_32 {dimension_numbers = #tpu.dot_dimension_numbers<[1], [0], [0], [1], [0, 0, 1, 1], [], []>} : vector<8x128xf32>, vector<128x512xf32>, vector<8x512xf32> -> vector<8x512xf32>
    %120 = arith.addf %118, %119 : vector<8x512xf32>
    %121 = vector.extract_strided_slice %120 {offsets = [0, 0], sizes = [8, 384], strides = [1, 1]} : vector<8x512xf32> to vector<8x384xf32>
    %122 = arith.negf %121 : vector<8x384xf32>
    %123 = math.exp %122 : vector<8x384xf32>
    %cst_33 = arith.constant 1.000000e+00 : f32
    %124 = vector.broadcast %cst_33 : f32 to vector<8x384xf32>
    %125 = arith.addf %124, %123 : vector<8x384xf32>
    %126 = arith.divf %124, %125 : vector<8x384xf32>
    %127 = vector.extract_strided_slice %120 {offsets = [0, 384], sizes = [8, 128], strides = [1, 1]} : vector<8x512xf32> to vector<8x128xf32>
    %128 = math.tanh %127 : vector<8x128xf32>
    %129 = vector.extract_strided_slice %126 {offsets = [0, 0], sizes = [8, 128], strides = [1, 1]} : vector<8x384xf32> to vector<8x128xf32>
    %130 = vector.extract_strided_slice %126 {offsets = [0, 128], sizes = [8, 128], strides = [1, 1]} : vector<8x384xf32> to vector<8x128xf32>
    %131 = vector.extract_strided_slice %126 {offsets = [0, 256], sizes = [8, 128], strides = [1, 1]} : vector<8x384xf32> to vector<8x128xf32>
    %132 = arith.mulf %130, %114 : vector<8x128xf32>
    %133 = arith.mulf %129, %128 : vector<8x128xf32>
    %134 = arith.addf %132, %133 : vector<8x128xf32>
    %135 = math.tanh %134 : vector<8x128xf32>
    %136 = arith.mulf %131, %135 : vector<8x128xf32>
    %c40 = arith.constant 40 : index
    %c0_34 = arith.constant 0 : index
    %137 = vector.load %arg18[%c40, %c0_34] : memref<64x128xf32, #tpu.memory_space<vmem>>, vector<8x128xf32>
    tpu.vector_store %arg18[%c40, %c0_34], %136 {strides = array<i32>} : memref<64x128xf32, #tpu.memory_space<vmem>>, vector<8x128xf32>,
    %138 = vector.extract_strided_slice %12 {offsets = [48, 0], sizes = [8, 512], strides = [1, 1]} : vector<64x512xf32> to vector<8x512xf32>
    %cst_35 = arith.constant dense<0.000000e+00> : vector<8x512xf32>
    %139 = tpu.matmul %136, %13, %cst_35 {dimension_numbers = #tpu.dot_dimension_numbers<[1], [0], [0], [1], [0, 0, 1, 1], [], []>} : vector<8x128xf32>, vector<128x512xf32>, vector<8x512xf32> -> vector<8x512xf32>
    %140 = arith.addf %138, %139 : vector<8x512xf32>
    %141 = vector.extract_strided_slice %140 {offsets = [0, 0], sizes = [8, 384], strides = [1, 1]} : vector<8x512xf32> to vector<8x384xf32>
    %142 = arith.negf %141 : vector<8x384xf32>
    %143 = math.exp %142 : vector<8x384xf32>
    %cst_36 = arith.constant 1.000000e+00 : f32
    %144 = vector.broadcast %cst_36 : f32 to vector<8x384xf32>
    %145 = arith.addf %144, %143 : vector<8x384xf32>
    %146 = arith.divf %144, %145 : vector<8x384xf32>
    %147 = vector.extract_strided_slice %140 {offsets = [0, 384], sizes = [8, 128], strides = [1, 1]} : vector<8x512xf32> to vector<8x128xf32>
    %148 = math.tanh %147 : vector<8x128xf32>
    %149 = vector.extract_strided_slice %146 {offsets = [0, 0], sizes = [8, 128], strides = [1, 1]} : vector<8x384xf32> to vector<8x128xf32>
    %150 = vector.extract_strided_slice %146 {offsets = [0, 128], sizes = [8, 128], strides = [1, 1]} : vector<8x384xf32> to vector<8x128xf32>
    %151 = vector.extract_strided_slice %146 {offsets = [0, 256], sizes = [8, 128], strides = [1, 1]} : vector<8x384xf32> to vector<8x128xf32>
    %152 = arith.mulf %150, %134 : vector<8x128xf32>
    %153 = arith.mulf %149, %148 : vector<8x128xf32>
    %154 = arith.addf %152, %153 : vector<8x128xf32>
    %155 = math.tanh %154 : vector<8x128xf32>
    %156 = arith.mulf %151, %155 : vector<8x128xf32>
    %c48 = arith.constant 48 : index
    %c0_37 = arith.constant 0 : index
    %157 = vector.load %arg18[%c48, %c0_37] : memref<64x128xf32, #tpu.memory_space<vmem>>, vector<8x128xf32>
    tpu.vector_store %arg18[%c48, %c0_37], %156 {strides = array<i32>} : memref<64x128xf32, #tpu.memory_space<vmem>>, vector<8x128xf32>,
    %158 = vector.extract_strided_slice %12 {offsets = [56, 0], sizes = [8, 512], strides = [1, 1]} : vector<64x512xf32> to vector<8x512xf32>
    %cst_38 = arith.constant dense<0.000000e+00> : vector<8x512xf32>
    %159 = tpu.matmul %156, %13, %cst_38 {dimension_numbers = #tpu.dot_dimension_numbers<[1], [0], [0], [1], [0, 0, 1, 1], [], []>} : vector<8x128xf32>, vector<128x512xf32>, vector<8x512xf32> -> vector<8x512xf32>
    %160 = arith.addf %158, %159 : vector<8x512xf32>
    %161 = vector.extract_strided_slice %160 {offsets = [0, 0], sizes = [8, 384], strides = [1, 1]} : vector<8x512xf32> to vector<8x384xf32>
    %162 = arith.negf %161 : vector<8x384xf32>
    %163 = math.exp %162 : vector<8x384xf32>
    %cst_39 = arith.constant 1.000000e+00 : f32
    %164 = vector.broadcast %cst_39 : f32 to vector<8x384xf32>
    %165 = arith.addf %164, %163 : vector<8x384xf32>
    %166 = arith.divf %164, %165 : vector<8x384xf32>
    %167 = vector.extract_strided_slice %160 {offsets = [0, 384], sizes = [8, 128], strides = [1, 1]} : vector<8x512xf32> to vector<8x128xf32>
    %168 = math.tanh %167 : vector<8x128xf32>
    %169 = vector.extract_strided_slice %166 {offsets = [0, 0], sizes = [8, 128], strides = [1, 1]} : vector<8x384xf32> to vector<8x128xf32>
    %170 = vector.extract_strided_slice %166 {offsets = [0, 128], sizes = [8, 128], strides = [1, 1]} : vector<8x384xf32> to vector<8x128xf32>
    %171 = vector.extract_strided_slice %166 {offsets = [0, 256], sizes = [8, 128], strides = [1, 1]} : vector<8x384xf32> to vector<8x128xf32>
    %172 = arith.mulf %170, %154 : vector<8x128xf32>
    %173 = arith.mulf %169, %168 : vector<8x128xf32>
    %174 = arith.addf %172, %173 : vector<8x128xf32>
    %175 = math.tanh %174 : vector<8x128xf32>
    %176 = arith.mulf %171, %175 : vector<8x128xf32>
    %c56 = arith.constant 56 : index
    %c0_40 = arith.constant 0 : index
    %177 = vector.load %arg18[%c56, %c0_40] : memref<64x128xf32, #tpu.memory_space<vmem>>, vector<8x128xf32>
    tpu.vector_store %arg18[%c56, %c0_40], %176 {strides = array<i32>} : memref<64x128xf32, #tpu.memory_space<vmem>>, vector<8x128xf32>,
    %c0_41 = arith.constant 0 : index
    %c0_42 = arith.constant 0 : index
    %c0_43 = arith.constant 0 : index
    %178 = vector.load %arg16[%c0_41, %c0_42, %c0_43] : memref<3x8x128xf32, #tpu.memory_space<vmem>>, vector<1x8x128xf32>
    %179 = vector.shape_cast %178 : vector<1x8x128xf32> to vector<8x128xf32>
    %180 = vector.shape_cast %176 : vector<8x128xf32> to vector<1x8x128xf32>
    tpu.vector_store %arg16[%c0_41, %c0_42, %c0_43], %180 {strides = array<i32>} : memref<3x8x128xf32, #tpu.memory_space<vmem>>, vector<1x8x128xf32>,
    %c0_44 = arith.constant 0 : index
    %c0_45 = arith.constant 0 : index
    %c0_46 = arith.constant 0 : index
    %181 = vector.load %arg17[%c0_44, %c0_45, %c0_46] : memref<3x8x128xf32, #tpu.memory_space<vmem>>, vector<1x8x128xf32>
    %182 = vector.shape_cast %181 : vector<1x8x128xf32> to vector<8x128xf32>
    %183 = vector.shape_cast %174 : vector<8x128xf32> to vector<1x8x128xf32>
    tpu.vector_store %arg17[%c0_44, %c0_45, %c0_46], %183 {strides = array<i32>} : memref<3x8x128xf32, #tpu.memory_space<vmem>>, vector<1x8x128xf32>,
    %c0_47 = arith.constant 0 : index
    %c0_48 = arith.constant 0 : index
    %184 = vector.load %arg18[%c0_47, %c0_48] : memref<64x128xf32, #tpu.memory_space<vmem>>, vector<64x128xf32>
    %c0_49 = arith.constant 0 : index
    %c0_50 = arith.constant 0 : index
    %185 = vector.load %arg5[%c0_49, %c0_50] : memref<128x512xf32, #tpu.memory_space<vmem>>, vector<128x512xf32>
    %cst_51 = arith.constant dense<0.000000e+00> : vector<64x512xf32>
    %186 = tpu.matmul %184, %185, %cst_51 {dimension_numbers = #tpu.dot_dimension_numbers<[1], [0], [0], [1], [0, 0, 1, 1], [], []>} : vector<64x128xf32>, vector<128x512xf32>, vector<64x512xf32> -> vector<64x512xf32>
    %c0_52 = arith.constant 0 : index
    %c0_53 = arith.constant 0 : index
    %187 = vector.load %arg7[%c0_52, %c0_53] : memref<1x512xf32, #tpu.memory_space<vmem>>, vector<1x512xf32>
    %188 = vector.broadcast %187 : vector<1x512xf32> to vector<64x512xf32>
    %189 = arith.addf %186, %188 : vector<64x512xf32>
    %c0_54 = arith.constant 0 : index
    %c0_55 = arith.constant 0 : index
    %190 = vector.load %arg6[%c0_54, %c0_55] : memref<128x512xf32, #tpu.memory_space<vmem>>, vector<128x512xf32>
    %c1 = arith.constant 1 : index
    %c0_56 = arith.constant 0 : index
    %c0_57 = arith.constant 0 : index
    %191 = vector.load %arg13[%c1, %c0_56, %c0_57] : memref<3x8x128xf32, #tpu.memory_space<vmem>>, vector<1x8x128xf32>
    %192 = vector.shape_cast %191 : vector<1x8x128xf32> to vector<8x128xf32>
    %c1_58 = arith.constant 1 : index
    %c0_59 = arith.constant 0 : index
    %c0_60 = arith.constant 0 : index
    %193 = vector.load %arg14[%c1_58, %c0_59, %c0_60] : memref<3x8x128xf32, #tpu.memory_space<vmem>>, vector<1x8x128xf32>
    %194 = vector.shape_cast %193 : vector<1x8x128xf32> to vector<8x128xf32>
    %195 = vector.extract_strided_slice %189 {offsets = [0, 0], sizes = [8, 512], strides = [1, 1]} : vector<64x512xf32> to vector<8x512xf32>
    %cst_61 = arith.constant dense<0.000000e+00> : vector<8x512xf32>
    %196 = tpu.matmul %192, %190, %cst_61 {dimension_numbers = #tpu.dot_dimension_numbers<[1], [0], [0], [1], [0, 0, 1, 1], [], []>} : vector<8x128xf32>, vector<128x512xf32>, vector<8x512xf32> -> vector<8x512xf32>
    %197 = arith.addf %195, %196 : vector<8x512xf32>
    %198 = vector.extract_strided_slice %197 {offsets = [0, 0], sizes = [8, 384], strides = [1, 1]} : vector<8x512xf32> to vector<8x384xf32>
    %199 = arith.negf %198 : vector<8x384xf32>
    %200 = math.exp %199 : vector<8x384xf32>
    %cst_62 = arith.constant 1.000000e+00 : f32
    %201 = vector.broadcast %cst_62 : f32 to vector<8x384xf32>
    %202 = arith.addf %201, %200 : vector<8x384xf32>
    %203 = arith.divf %201, %202 : vector<8x384xf32>
    %204 = vector.extract_strided_slice %197 {offsets = [0, 384], sizes = [8, 128], strides = [1, 1]} : vector<8x512xf32> to vector<8x128xf32>
    %205 = math.tanh %204 : vector<8x128xf32>
    %206 = vector.extract_strided_slice %203 {offsets = [0, 0], sizes = [8, 128], strides = [1, 1]} : vector<8x384xf32> to vector<8x128xf32>
    %207 = vector.extract_strided_slice %203 {offsets = [0, 128], sizes = [8, 128], strides = [1, 1]} : vector<8x384xf32> to vector<8x128xf32>
    %208 = vector.extract_strided_slice %203 {offsets = [0, 256], sizes = [8, 128], strides = [1, 1]} : vector<8x384xf32> to vector<8x128xf32>
    %209 = arith.mulf %207, %194 : vector<8x128xf32>
    %210 = arith.mulf %206, %205 : vector<8x128xf32>
    %211 = arith.addf %209, %210 : vector<8x128xf32>
    %212 = math.tanh %211 : vector<8x128xf32>
    %213 = arith.mulf %208, %212 : vector<8x128xf32>
    %c0_63 = arith.constant 0 : index
    %c0_64 = arith.constant 0 : index
    %214 = vector.load %arg18[%c0_63, %c0_64] : memref<64x128xf32, #tpu.memory_space<vmem>>, vector<8x128xf32>
    tpu.vector_store %arg18[%c0_63, %c0_64], %213 {strides = array<i32>} : memref<64x128xf32, #tpu.memory_space<vmem>>, vector<8x128xf32>,
    %215 = vector.extract_strided_slice %189 {offsets = [8, 0], sizes = [8, 512], strides = [1, 1]} : vector<64x512xf32> to vector<8x512xf32>
    %cst_65 = arith.constant dense<0.000000e+00> : vector<8x512xf32>
    %216 = tpu.matmul %213, %190, %cst_65 {dimension_numbers = #tpu.dot_dimension_numbers<[1], [0], [0], [1], [0, 0, 1, 1], [], []>} : vector<8x128xf32>, vector<128x512xf32>, vector<8x512xf32> -> vector<8x512xf32>
    %217 = arith.addf %215, %216 : vector<8x512xf32>
    %218 = vector.extract_strided_slice %217 {offsets = [0, 0], sizes = [8, 384], strides = [1, 1]} : vector<8x512xf32> to vector<8x384xf32>
    %219 = arith.negf %218 : vector<8x384xf32>
    %220 = math.exp %219 : vector<8x384xf32>
    %cst_66 = arith.constant 1.000000e+00 : f32
    %221 = vector.broadcast %cst_66 : f32 to vector<8x384xf32>
    %222 = arith.addf %221, %220 : vector<8x384xf32>
    %223 = arith.divf %221, %222 : vector<8x384xf32>
    %224 = vector.extract_strided_slice %217 {offsets = [0, 384], sizes = [8, 128], strides = [1, 1]} : vector<8x512xf32> to vector<8x128xf32>
    %225 = math.tanh %224 : vector<8x128xf32>
    %226 = vector.extract_strided_slice %223 {offsets = [0, 0], sizes = [8, 128], strides = [1, 1]} : vector<8x384xf32> to vector<8x128xf32>
    %227 = vector.extract_strided_slice %223 {offsets = [0, 128], sizes = [8, 128], strides = [1, 1]} : vector<8x384xf32> to vector<8x128xf32>
    %228 = vector.extract_strided_slice %223 {offsets = [0, 256], sizes = [8, 128], strides = [1, 1]} : vector<8x384xf32> to vector<8x128xf32>
    %229 = arith.mulf %227, %211 : vector<8x128xf32>
    %230 = arith.mulf %226, %225 : vector<8x128xf32>
    %231 = arith.addf %229, %230 : vector<8x128xf32>
    %232 = math.tanh %231 : vector<8x128xf32>
    %233 = arith.mulf %228, %232 : vector<8x128xf32>
    %c8_67 = arith.constant 8 : index
    %c0_68 = arith.constant 0 : index
    %234 = vector.load %arg18[%c8_67, %c0_68] : memref<64x128xf32, #tpu.memory_space<vmem>>, vector<8x128xf32>
    tpu.vector_store %arg18[%c8_67, %c0_68], %233 {strides = array<i32>} : memref<64x128xf32, #tpu.memory_space<vmem>>, vector<8x128xf32>,
    %235 = vector.extract_strided_slice %189 {offsets = [16, 0], sizes = [8, 512], strides = [1, 1]} : vector<64x512xf32> to vector<8x512xf32>
    %cst_69 = arith.constant dense<0.000000e+00> : vector<8x512xf32>
    %236 = tpu.matmul %233, %190, %cst_69 {dimension_numbers = #tpu.dot_dimension_numbers<[1], [0], [0], [1], [0, 0, 1, 1], [], []>} : vector<8x128xf32>, vector<128x512xf32>, vector<8x512xf32> -> vector<8x512xf32>
    %237 = arith.addf %235, %236 : vector<8x512xf32>
    %238 = vector.extract_strided_slice %237 {offsets = [0, 0], sizes = [8, 384], strides = [1, 1]} : vector<8x512xf32> to vector<8x384xf32>
    %239 = arith.negf %238 : vector<8x384xf32>
    %240 = math.exp %239 : vector<8x384xf32>
    %cst_70 = arith.constant 1.000000e+00 : f32
    %241 = vector.broadcast %cst_70 : f32 to vector<8x384xf32>
    %242 = arith.addf %241, %240 : vector<8x384xf32>
    %243 = arith.divf %241, %242 : vector<8x384xf32>
    %244 = vector.extract_strided_slice %237 {offsets = [0, 384], sizes = [8, 128], strides = [1, 1]} : vector<8x512xf32> to vector<8x128xf32>
    %245 = math.tanh %244 : vector<8x128xf32>
    %246 = vector.extract_strided_slice %243 {offsets = [0, 0], sizes = [8, 128], strides = [1, 1]} : vector<8x384xf32> to vector<8x128xf32>
    %247 = vector.extract_strided_slice %243 {offsets = [0, 128], sizes = [8, 128], strides = [1, 1]} : vector<8x384xf32> to vector<8x128xf32>
    %248 = vector.extract_strided_slice %243 {offsets = [0, 256], sizes = [8, 128], strides = [1, 1]} : vector<8x384xf32> to vector<8x128xf32>
    %249 = arith.mulf %247, %231 : vector<8x128xf32>
    %250 = arith.mulf %246, %245 : vector<8x128xf32>
    %251 = arith.addf %249, %250 : vector<8x128xf32>
    %252 = math.tanh %251 : vector<8x128xf32>
    %253 = arith.mulf %248, %252 : vector<8x128xf32>
    %c16_71 = arith.constant 16 : index
    %c0_72 = arith.constant 0 : index
    %254 = vector.load %arg18[%c16_71, %c0_72] : memref<64x128xf32, #tpu.memory_space<vmem>>, vector<8x128xf32>
    tpu.vector_store %arg18[%c16_71, %c0_72], %253 {strides = array<i32>} : memref<64x128xf32, #tpu.memory_space<vmem>>, vector<8x128xf32>,
    %255 = vector.extract_strided_slice %189 {offsets = [24, 0], sizes = [8, 512], strides = [1, 1]} : vector<64x512xf32> to vector<8x512xf32>
    %cst_73 = arith.constant dense<0.000000e+00> : vector<8x512xf32>
    %256 = tpu.matmul %253, %190, %cst_73 {dimension_numbers = #tpu.dot_dimension_numbers<[1], [0], [0], [1], [0, 0, 1, 1], [], []>} : vector<8x128xf32>, vector<128x512xf32>, vector<8x512xf32> -> vector<8x512xf32>
    %257 = arith.addf %255, %256 : vector<8x512xf32>
    %258 = vector.extract_strided_slice %257 {offsets = [0, 0], sizes = [8, 384], strides = [1, 1]} : vector<8x512xf32> to vector<8x384xf32>
    %259 = arith.negf %258 : vector<8x384xf32>
    %260 = math.exp %259 : vector<8x384xf32>
    %cst_74 = arith.constant 1.000000e+00 : f32
    %261 = vector.broadcast %cst_74 : f32 to vector<8x384xf32>
    %262 = arith.addf %261, %260 : vector<8x384xf32>
    %263 = arith.divf %261, %262 : vector<8x384xf32>
    %264 = vector.extract_strided_slice %257 {offsets = [0, 384], sizes = [8, 128], strides = [1, 1]} : vector<8x512xf32> to vector<8x128xf32>
    %265 = math.tanh %264 : vector<8x128xf32>
    %266 = vector.extract_strided_slice %263 {offsets = [0, 0], sizes = [8, 128], strides = [1, 1]} : vector<8x384xf32> to vector<8x128xf32>
    %267 = vector.extract_strided_slice %263 {offsets = [0, 128], sizes = [8, 128], strides = [1, 1]} : vector<8x384xf32> to vector<8x128xf32>
    %268 = vector.extract_strided_slice %263 {offsets = [0, 256], sizes = [8, 128], strides = [1, 1]} : vector<8x384xf32> to vector<8x128xf32>
    %269 = arith.mulf %267, %251 : vector<8x128xf32>
    %270 = arith.mulf %266, %265 : vector<8x128xf32>
    %271 = arith.addf %269, %270 : vector<8x128xf32>
    %272 = math.tanh %271 : vector<8x128xf32>
    %273 = arith.mulf %268, %272 : vector<8x128xf32>
    %c24_75 = arith.constant 24 : index
    %c0_76 = arith.constant 0 : index
    %274 = vector.load %arg18[%c24_75, %c0_76] : memref<64x128xf32, #tpu.memory_space<vmem>>, vector<8x128xf32>
    tpu.vector_store %arg18[%c24_75, %c0_76], %273 {strides = array<i32>} : memref<64x128xf32, #tpu.memory_space<vmem>>, vector<8x128xf32>,
    %275 = vector.extract_strided_slice %189 {offsets = [32, 0], sizes = [8, 512], strides = [1, 1]} : vector<64x512xf32> to vector<8x512xf32>
    %cst_77 = arith.constant dense<0.000000e+00> : vector<8x512xf32>
    %276 = tpu.matmul %273, %190, %cst_77 {dimension_numbers = #tpu.dot_dimension_numbers<[1], [0], [0], [1], [0, 0, 1, 1], [], []>} : vector<8x128xf32>, vector<128x512xf32>, vector<8x512xf32> -> vector<8x512xf32>
    %277 = arith.addf %275, %276 : vector<8x512xf32>
    %278 = vector.extract_strided_slice %277 {offsets = [0, 0], sizes = [8, 384], strides = [1, 1]} : vector<8x512xf32> to vector<8x384xf32>
    %279 = arith.negf %278 : vector<8x384xf32>
    %280 = math.exp %279 : vector<8x384xf32>
    %cst_78 = arith.constant 1.000000e+00 : f32
    %281 = vector.broadcast %cst_78 : f32 to vector<8x384xf32>
    %282 = arith.addf %281, %280 : vector<8x384xf32>
    %283 = arith.divf %281, %282 : vector<8x384xf32>
    %284 = vector.extract_strided_slice %277 {offsets = [0, 384], sizes = [8, 128], strides = [1, 1]} : vector<8x512xf32> to vector<8x128xf32>
    %285 = math.tanh %284 : vector<8x128xf32>
    %286 = vector.extract_strided_slice %283 {offsets = [0, 0], sizes = [8, 128], strides = [1, 1]} : vector<8x384xf32> to vector<8x128xf32>
    %287 = vector.extract_strided_slice %283 {offsets = [0, 128], sizes = [8, 128], strides = [1, 1]} : vector<8x384xf32> to vector<8x128xf32>
    %288 = vector.extract_strided_slice %283 {offsets = [0, 256], sizes = [8, 128], strides = [1, 1]} : vector<8x384xf32> to vector<8x128xf32>
    %289 = arith.mulf %287, %271 : vector<8x128xf32>
    %290 = arith.mulf %286, %285 : vector<8x128xf32>
    %291 = arith.addf %289, %290 : vector<8x128xf32>
    %292 = math.tanh %291 : vector<8x128xf32>
    %293 = arith.mulf %288, %292 : vector<8x128xf32>
    %c32_79 = arith.constant 32 : index
    %c0_80 = arith.constant 0 : index
    %294 = vector.load %arg18[%c32_79, %c0_80] : memref<64x128xf32, #tpu.memory_space<vmem>>, vector<8x128xf32>
    tpu.vector_store %arg18[%c32_79, %c0_80], %293 {strides = array<i32>} : memref<64x128xf32, #tpu.memory_space<vmem>>, vector<8x128xf32>,
    %295 = vector.extract_strided_slice %189 {offsets = [40, 0], sizes = [8, 512], strides = [1, 1]} : vector<64x512xf32> to vector<8x512xf32>
    %cst_81 = arith.constant dense<0.000000e+00> : vector<8x512xf32>
    %296 = tpu.matmul %293, %190, %cst_81 {dimension_numbers = #tpu.dot_dimension_numbers<[1], [0], [0], [1], [0, 0, 1, 1], [], []>} : vector<8x128xf32>, vector<128x512xf32>, vector<8x512xf32> -> vector<8x512xf32>
    %297 = arith.addf %295, %296 : vector<8x512xf32>
    %298 = vector.extract_strided_slice %297 {offsets = [0, 0], sizes = [8, 384], strides = [1, 1]} : vector<8x512xf32> to vector<8x384xf32>
    %299 = arith.negf %298 : vector<8x384xf32>
    %300 = math.exp %299 : vector<8x384xf32>
    %cst_82 = arith.constant 1.000000e+00 : f32
    %301 = vector.broadcast %cst_82 : f32 to vector<8x384xf32>
    %302 = arith.addf %301, %300 : vector<8x384xf32>
    %303 = arith.divf %301, %302 : vector<8x384xf32>
    %304 = vector.extract_strided_slice %297 {offsets = [0, 384], sizes = [8, 128], strides = [1, 1]} : vector<8x512xf32> to vector<8x128xf32>
    %305 = math.tanh %304 : vector<8x128xf32>
    %306 = vector.extract_strided_slice %303 {offsets = [0, 0], sizes = [8, 128], strides = [1, 1]} : vector<8x384xf32> to vector<8x128xf32>
    %307 = vector.extract_strided_slice %303 {offsets = [0, 128], sizes = [8, 128], strides = [1, 1]} : vector<8x384xf32> to vector<8x128xf32>
    %308 = vector.extract_strided_slice %303 {offsets = [0, 256], sizes = [8, 128], strides = [1, 1]} : vector<8x384xf32> to vector<8x128xf32>
    %309 = arith.mulf %307, %291 : vector<8x128xf32>
    %310 = arith.mulf %306, %305 : vector<8x128xf32>
    %311 = arith.addf %309, %310 : vector<8x128xf32>
    %312 = math.tanh %311 : vector<8x128xf32>
    %313 = arith.mulf %308, %312 : vector<8x128xf32>
    %c40_83 = arith.constant 40 : index
    %c0_84 = arith.constant 0 : index
    %314 = vector.load %arg18[%c40_83, %c0_84] : memref<64x128xf32, #tpu.memory_space<vmem>>, vector<8x128xf32>
    tpu.vector_store %arg18[%c40_83, %c0_84], %313 {strides = array<i32>} : memref<64x128xf32, #tpu.memory_space<vmem>>, vector<8x128xf32>,
    %315 = vector.extract_strided_slice %189 {offsets = [48, 0], sizes = [8, 512], strides = [1, 1]} : vector<64x512xf32> to vector<8x512xf32>
    %cst_85 = arith.constant dense<0.000000e+00> : vector<8x512xf32>
    %316 = tpu.matmul %313, %190, %cst_85 {dimension_numbers = #tpu.dot_dimension_numbers<[1], [0], [0], [1], [0, 0, 1, 1], [], []>} : vector<8x128xf32>, vector<128x512xf32>, vector<8x512xf32> -> vector<8x512xf32>
    %317 = arith.addf %315, %316 : vector<8x512xf32>
    %318 = vector.extract_strided_slice %317 {offsets = [0, 0], sizes = [8, 384], strides = [1, 1]} : vector<8x512xf32> to vector<8x384xf32>
    %319 = arith.negf %318 : vector<8x384xf32>
    %320 = math.exp %319 : vector<8x384xf32>
    %cst_86 = arith.constant 1.000000e+00 : f32
    %321 = vector.broadcast %cst_86 : f32 to vector<8x384xf32>
    %322 = arith.addf %321, %320 : vector<8x384xf32>
    %323 = arith.divf %321, %322 : vector<8x384xf32>
    %324 = vector.extract_strided_slice %317 {offsets = [0, 384], sizes = [8, 128], strides = [1, 1]} : vector<8x512xf32> to vector<8x128xf32>
    %325 = math.tanh %324 : vector<8x128xf32>
    %326 = vector.extract_strided_slice %323 {offsets = [0, 0], sizes = [8, 128], strides = [1, 1]} : vector<8x384xf32> to vector<8x128xf32>
    %327 = vector.extract_strided_slice %323 {offsets = [0, 128], sizes = [8, 128], strides = [1, 1]} : vector<8x384xf32> to vector<8x128xf32>
    %328 = vector.extract_strided_slice %323 {offsets = [0, 256], sizes = [8, 128], strides = [1, 1]} : vector<8x384xf32> to vector<8x128xf32>
    %329 = arith.mulf %327, %311 : vector<8x128xf32>
    %330 = arith.mulf %326, %325 : vector<8x128xf32>
    %331 = arith.addf %329, %330 : vector<8x128xf32>
    %332 = math.tanh %331 : vector<8x128xf32>
    %333 = arith.mulf %328, %332 : vector<8x128xf32>
    %c48_87 = arith.constant 48 : index
    %c0_88 = arith.constant 0 : index
    %334 = vector.load %arg18[%c48_87, %c0_88] : memref<64x128xf32, #tpu.memory_space<vmem>>, vector<8x128xf32>
    tpu.vector_store %arg18[%c48_87, %c0_88], %333 {strides = array<i32>} : memref<64x128xf32, #tpu.memory_space<vmem>>, vector<8x128xf32>,
    %335 = vector.extract_strided_slice %189 {offsets = [56, 0], sizes = [8, 512], strides = [1, 1]} : vector<64x512xf32> to vector<8x512xf32>
    %cst_89 = arith.constant dense<0.000000e+00> : vector<8x512xf32>
    %336 = tpu.matmul %333, %190, %cst_89 {dimension_numbers = #tpu.dot_dimension_numbers<[1], [0], [0], [1], [0, 0, 1, 1], [], []>} : vector<8x128xf32>, vector<128x512xf32>, vector<8x512xf32> -> vector<8x512xf32>
    %337 = arith.addf %335, %336 : vector<8x512xf32>
    %338 = vector.extract_strided_slice %337 {offsets = [0, 0], sizes = [8, 384], strides = [1, 1]} : vector<8x512xf32> to vector<8x384xf32>
    %339 = arith.negf %338 : vector<8x384xf32>
    %340 = math.exp %339 : vector<8x384xf32>
    %cst_90 = arith.constant 1.000000e+00 : f32
    %341 = vector.broadcast %cst_90 : f32 to vector<8x384xf32>
    %342 = arith.addf %341, %340 : vector<8x384xf32>
    %343 = arith.divf %341, %342 : vector<8x384xf32>
    %344 = vector.extract_strided_slice %337 {offsets = [0, 384], sizes = [8, 128], strides = [1, 1]} : vector<8x512xf32> to vector<8x128xf32>
    %345 = math.tanh %344 : vector<8x128xf32>
    %346 = vector.extract_strided_slice %343 {offsets = [0, 0], sizes = [8, 128], strides = [1, 1]} : vector<8x384xf32> to vector<8x128xf32>
    %347 = vector.extract_strided_slice %343 {offsets = [0, 128], sizes = [8, 128], strides = [1, 1]} : vector<8x384xf32> to vector<8x128xf32>
    %348 = vector.extract_strided_slice %343 {offsets = [0, 256], sizes = [8, 128], strides = [1, 1]} : vector<8x384xf32> to vector<8x128xf32>
    %349 = arith.mulf %347, %331 : vector<8x128xf32>
    %350 = arith.mulf %346, %345 : vector<8x128xf32>
    %351 = arith.addf %349, %350 : vector<8x128xf32>
    %352 = math.tanh %351 : vector<8x128xf32>
    %353 = arith.mulf %348, %352 : vector<8x128xf32>
    %c56_91 = arith.constant 56 : index
    %c0_92 = arith.constant 0 : index
    %354 = vector.load %arg18[%c56_91, %c0_92] : memref<64x128xf32, #tpu.memory_space<vmem>>, vector<8x128xf32>
    tpu.vector_store %arg18[%c56_91, %c0_92], %353 {strides = array<i32>} : memref<64x128xf32, #tpu.memory_space<vmem>>, vector<8x128xf32>,
    %c1_93 = arith.constant 1 : index
    %c0_94 = arith.constant 0 : index
    %c0_95 = arith.constant 0 : index
    %355 = vector.load %arg16[%c1_93, %c0_94, %c0_95] : memref<3x8x128xf32, #tpu.memory_space<vmem>>, vector<1x8x128xf32>
    %356 = vector.shape_cast %355 : vector<1x8x128xf32> to vector<8x128xf32>
    %357 = vector.shape_cast %353 : vector<8x128xf32> to vector<1x8x128xf32>
    tpu.vector_store %arg16[%c1_93, %c0_94, %c0_95], %357 {strides = array<i32>} : memref<3x8x128xf32, #tpu.memory_space<vmem>>, vector<1x8x128xf32>,
    %c1_96 = arith.constant 1 : index
    %c0_97 = arith.constant 0 : index
    %c0_98 = arith.constant 0 : index
    %358 = vector.load %arg17[%c1_96, %c0_97, %c0_98] : memref<3x8x128xf32, #tpu.memory_space<vmem>>, vector<1x8x128xf32>
    %359 = vector.shape_cast %358 : vector<1x8x128xf32> to vector<8x128xf32>
    %360 = vector.shape_cast %351 : vector<8x128xf32> to vector<1x8x128xf32>
    tpu.vector_store %arg17[%c1_96, %c0_97, %c0_98], %360 {strides = array<i32>} : memref<3x8x128xf32, #tpu.memory_space<vmem>>, vector<1x8x128xf32>,
    %c0_99 = arith.constant 0 : index
    %c0_100 = arith.constant 0 : index
    %361 = vector.load %arg18[%c0_99, %c0_100] : memref<64x128xf32, #tpu.memory_space<vmem>>, vector<64x128xf32>
    %c0_101 = arith.constant 0 : index
    %c0_102 = arith.constant 0 : index
    %362 = vector.load %arg8[%c0_101, %c0_102] : memref<128x512xf32, #tpu.memory_space<vmem>>, vector<128x512xf32>
    %cst_103 = arith.constant dense<0.000000e+00> : vector<64x512xf32>
    %363 = tpu.matmul %361, %362, %cst_103 {dimension_numbers = #tpu.dot_dimension_numbers<[1], [0], [0], [1], [0, 0, 1, 1], [], []>} : vector<64x128xf32>, vector<128x512xf32>, vector<64x512xf32> -> vector<64x512xf32>
    %c0_104 = arith.constant 0 : index
    %c0_105 = arith.constant 0 : index
    %364 = vector.load %arg10[%c0_104, %c0_105] : memref<1x512xf32, #tpu.memory_space<vmem>>, vector<1x512xf32>
    %365 = vector.broadcast %364 : vector<1x512xf32> to vector<64x512xf32>
    %366 = arith.addf %363, %365 : vector<64x512xf32>
    %c0_106 = arith.constant 0 : index
    %c0_107 = arith.constant 0 : index
    %367 = vector.load %arg9[%c0_106, %c0_107] : memref<128x512xf32, #tpu.memory_space<vmem>>, vector<128x512xf32>
    %c2 = arith.constant 2 : index
    %c0_108 = arith.constant 0 : index
    %c0_109 = arith.constant 0 : index
    %368 = vector.load %arg13[%c2, %c0_108, %c0_109] : memref<3x8x128xf32, #tpu.memory_space<vmem>>, vector<1x8x128xf32>
    %369 = vector.shape_cast %368 : vector<1x8x128xf32> to vector<8x128xf32>
    %c2_110 = arith.constant 2 : index
    %c0_111 = arith.constant 0 : index
    %c0_112 = arith.constant 0 : index
    %370 = vector.load %arg14[%c2_110, %c0_111, %c0_112] : memref<3x8x128xf32, #tpu.memory_space<vmem>>, vector<1x8x128xf32>
    %371 = vector.shape_cast %370 : vector<1x8x128xf32> to vector<8x128xf32>
    %372 = vector.extract_strided_slice %366 {offsets = [0, 0], sizes = [8, 512], strides = [1, 1]} : vector<64x512xf32> to vector<8x512xf32>
    %cst_113 = arith.constant dense<0.000000e+00> : vector<8x512xf32>
    %373 = tpu.matmul %369, %367, %cst_113 {dimension_numbers = #tpu.dot_dimension_numbers<[1], [0], [0], [1], [0, 0, 1, 1], [], []>} : vector<8x128xf32>, vector<128x512xf32>, vector<8x512xf32> -> vector<8x512xf32>
    %374 = arith.addf %372, %373 : vector<8x512xf32>
    %375 = vector.extract_strided_slice %374 {offsets = [0, 0], sizes = [8, 384], strides = [1, 1]} : vector<8x512xf32> to vector<8x384xf32>
    %376 = arith.negf %375 : vector<8x384xf32>
    %377 = math.exp %376 : vector<8x384xf32>
    %cst_114 = arith.constant 1.000000e+00 : f32
    %378 = vector.broadcast %cst_114 : f32 to vector<8x384xf32>
    %379 = arith.addf %378, %377 : vector<8x384xf32>
    %380 = arith.divf %378, %379 : vector<8x384xf32>
    %381 = vector.extract_strided_slice %374 {offsets = [0, 384], sizes = [8, 128], strides = [1, 1]} : vector<8x512xf32> to vector<8x128xf32>
    %382 = math.tanh %381 : vector<8x128xf32>
    %383 = vector.extract_strided_slice %380 {offsets = [0, 0], sizes = [8, 128], strides = [1, 1]} : vector<8x384xf32> to vector<8x128xf32>
    %384 = vector.extract_strided_slice %380 {offsets = [0, 128], sizes = [8, 128], strides = [1, 1]} : vector<8x384xf32> to vector<8x128xf32>
    %385 = vector.extract_strided_slice %380 {offsets = [0, 256], sizes = [8, 128], strides = [1, 1]} : vector<8x384xf32> to vector<8x128xf32>
    %386 = arith.mulf %384, %371 : vector<8x128xf32>
    %387 = arith.mulf %383, %382 : vector<8x128xf32>
    %388 = arith.addf %386, %387 : vector<8x128xf32>
    %389 = math.tanh %388 : vector<8x128xf32>
    %390 = arith.mulf %385, %389 : vector<8x128xf32>
    %c0_115 = arith.constant 0 : index
    %c0_116 = arith.constant 0 : index
    %391 = vector.load %arg18[%c0_115, %c0_116] : memref<64x128xf32, #tpu.memory_space<vmem>>, vector<8x128xf32>
    tpu.vector_store %arg18[%c0_115, %c0_116], %390 {strides = array<i32>} : memref<64x128xf32, #tpu.memory_space<vmem>>, vector<8x128xf32>,
    %392 = vector.extract_strided_slice %366 {offsets = [8, 0], sizes = [8, 512], strides = [1, 1]} : vector<64x512xf32> to vector<8x512xf32>
    %cst_117 = arith.constant dense<0.000000e+00> : vector<8x512xf32>
    %393 = tpu.matmul %390, %367, %cst_117 {dimension_numbers = #tpu.dot_dimension_numbers<[1], [0], [0], [1], [0, 0, 1, 1], [], []>} : vector<8x128xf32>, vector<128x512xf32>, vector<8x512xf32> -> vector<8x512xf32>
    %394 = arith.addf %392, %393 : vector<8x512xf32>
    %395 = vector.extract_strided_slice %394 {offsets = [0, 0], sizes = [8, 384], strides = [1, 1]} : vector<8x512xf32> to vector<8x384xf32>
    %396 = arith.negf %395 : vector<8x384xf32>
    %397 = math.exp %396 : vector<8x384xf32>
    %cst_118 = arith.constant 1.000000e+00 : f32
    %398 = vector.broadcast %cst_118 : f32 to vector<8x384xf32>
    %399 = arith.addf %398, %397 : vector<8x384xf32>
    %400 = arith.divf %398, %399 : vector<8x384xf32>
    %401 = vector.extract_strided_slice %394 {offsets = [0, 384], sizes = [8, 128], strides = [1, 1]} : vector<8x512xf32> to vector<8x128xf32>
    %402 = math.tanh %401 : vector<8x128xf32>
    %403 = vector.extract_strided_slice %400 {offsets = [0, 0], sizes = [8, 128], strides = [1, 1]} : vector<8x384xf32> to vector<8x128xf32>
    %404 = vector.extract_strided_slice %400 {offsets = [0, 128], sizes = [8, 128], strides = [1, 1]} : vector<8x384xf32> to vector<8x128xf32>
    %405 = vector.extract_strided_slice %400 {offsets = [0, 256], sizes = [8, 128], strides = [1, 1]} : vector<8x384xf32> to vector<8x128xf32>
    %406 = arith.mulf %404, %388 : vector<8x128xf32>
    %407 = arith.mulf %403, %402 : vector<8x128xf32>
    %408 = arith.addf %406, %407 : vector<8x128xf32>
    %409 = math.tanh %408 : vector<8x128xf32>
    %410 = arith.mulf %405, %409 : vector<8x128xf32>
    %c8_119 = arith.constant 8 : index
    %c0_120 = arith.constant 0 : index
    %411 = vector.load %arg18[%c8_119, %c0_120] : memref<64x128xf32, #tpu.memory_space<vmem>>, vector<8x128xf32>
    tpu.vector_store %arg18[%c8_119, %c0_120], %410 {strides = array<i32>} : memref<64x128xf32, #tpu.memory_space<vmem>>, vector<8x128xf32>,
    %412 = vector.extract_strided_slice %366 {offsets = [16, 0], sizes = [8, 512], strides = [1, 1]} : vector<64x512xf32> to vector<8x512xf32>
    %cst_121 = arith.constant dense<0.000000e+00> : vector<8x512xf32>
    %413 = tpu.matmul %410, %367, %cst_121 {dimension_numbers = #tpu.dot_dimension_numbers<[1], [0], [0], [1], [0, 0, 1, 1], [], []>} : vector<8x128xf32>, vector<128x512xf32>, vector<8x512xf32> -> vector<8x512xf32>
    %414 = arith.addf %412, %413 : vector<8x512xf32>
    %415 = vector.extract_strided_slice %414 {offsets = [0, 0], sizes = [8, 384], strides = [1, 1]} : vector<8x512xf32> to vector<8x384xf32>
    %416 = arith.negf %415 : vector<8x384xf32>
    %417 = math.exp %416 : vector<8x384xf32>
    %cst_122 = arith.constant 1.000000e+00 : f32
    %418 = vector.broadcast %cst_122 : f32 to vector<8x384xf32>
    %419 = arith.addf %418, %417 : vector<8x384xf32>
    %420 = arith.divf %418, %419 : vector<8x384xf32>
    %421 = vector.extract_strided_slice %414 {offsets = [0, 384], sizes = [8, 128], strides = [1, 1]} : vector<8x512xf32> to vector<8x128xf32>
    %422 = math.tanh %421 : vector<8x128xf32>
    %423 = vector.extract_strided_slice %420 {offsets = [0, 0], sizes = [8, 128], strides = [1, 1]} : vector<8x384xf32> to vector<8x128xf32>
    %424 = vector.extract_strided_slice %420 {offsets = [0, 128], sizes = [8, 128], strides = [1, 1]} : vector<8x384xf32> to vector<8x128xf32>
    %425 = vector.extract_strided_slice %420 {offsets = [0, 256], sizes = [8, 128], strides = [1, 1]} : vector<8x384xf32> to vector<8x128xf32>
    %426 = arith.mulf %424, %408 : vector<8x128xf32>
    %427 = arith.mulf %423, %422 : vector<8x128xf32>
    %428 = arith.addf %426, %427 : vector<8x128xf32>
    %429 = math.tanh %428 : vector<8x128xf32>
    %430 = arith.mulf %425, %429 : vector<8x128xf32>
    %c16_123 = arith.constant 16 : index
    %c0_124 = arith.constant 0 : index
    %431 = vector.load %arg18[%c16_123, %c0_124] : memref<64x128xf32, #tpu.memory_space<vmem>>, vector<8x128xf32>
    tpu.vector_store %arg18[%c16_123, %c0_124], %430 {strides = array<i32>} : memref<64x128xf32, #tpu.memory_space<vmem>>, vector<8x128xf32>,
    %432 = vector.extract_strided_slice %366 {offsets = [24, 0], sizes = [8, 512], strides = [1, 1]} : vector<64x512xf32> to vector<8x512xf32>
    %cst_125 = arith.constant dense<0.000000e+00> : vector<8x512xf32>
    %433 = tpu.matmul %430, %367, %cst_125 {dimension_numbers = #tpu.dot_dimension_numbers<[1], [0], [0], [1], [0, 0, 1, 1], [], []>} : vector<8x128xf32>, vector<128x512xf32>, vector<8x512xf32> -> vector<8x512xf32>
    %434 = arith.addf %432, %433 : vector<8x512xf32>
    %435 = vector.extract_strided_slice %434 {offsets = [0, 0], sizes = [8, 384], strides = [1, 1]} : vector<8x512xf32> to vector<8x384xf32>
    %436 = arith.negf %435 : vector<8x384xf32>
    %437 = math.exp %436 : vector<8x384xf32>
    %cst_126 = arith.constant 1.000000e+00 : f32
    %438 = vector.broadcast %cst_126 : f32 to vector<8x384xf32>
    %439 = arith.addf %438, %437 : vector<8x384xf32>
    %440 = arith.divf %438, %439 : vector<8x384xf32>
    %441 = vector.extract_strided_slice %434 {offsets = [0, 384], sizes = [8, 128], strides = [1, 1]} : vector<8x512xf32> to vector<8x128xf32>
    %442 = math.tanh %441 : vector<8x128xf32>
    %443 = vector.extract_strided_slice %440 {offsets = [0, 0], sizes = [8, 128], strides = [1, 1]} : vector<8x384xf32> to vector<8x128xf32>
    %444 = vector.extract_strided_slice %440 {offsets = [0, 128], sizes = [8, 128], strides = [1, 1]} : vector<8x384xf32> to vector<8x128xf32>
    %445 = vector.extract_strided_slice %440 {offsets = [0, 256], sizes = [8, 128], strides = [1, 1]} : vector<8x384xf32> to vector<8x128xf32>
    %446 = arith.mulf %444, %428 : vector<8x128xf32>
    %447 = arith.mulf %443, %442 : vector<8x128xf32>
    %448 = arith.addf %446, %447 : vector<8x128xf32>
    %449 = math.tanh %448 : vector<8x128xf32>
    %450 = arith.mulf %445, %449 : vector<8x128xf32>
    %c24_127 = arith.constant 24 : index
    %c0_128 = arith.constant 0 : index
    %451 = vector.load %arg18[%c24_127, %c0_128] : memref<64x128xf32, #tpu.memory_space<vmem>>, vector<8x128xf32>
    tpu.vector_store %arg18[%c24_127, %c0_128], %450 {strides = array<i32>} : memref<64x128xf32, #tpu.memory_space<vmem>>, vector<8x128xf32>,
    %452 = vector.extract_strided_slice %366 {offsets = [32, 0], sizes = [8, 512], strides = [1, 1]} : vector<64x512xf32> to vector<8x512xf32>
    %cst_129 = arith.constant dense<0.000000e+00> : vector<8x512xf32>
    %453 = tpu.matmul %450, %367, %cst_129 {dimension_numbers = #tpu.dot_dimension_numbers<[1], [0], [0], [1], [0, 0, 1, 1], [], []>} : vector<8x128xf32>, vector<128x512xf32>, vector<8x512xf32> -> vector<8x512xf32>
    %454 = arith.addf %452, %453 : vector<8x512xf32>
    %455 = vector.extract_strided_slice %454 {offsets = [0, 0], sizes = [8, 384], strides = [1, 1]} : vector<8x512xf32> to vector<8x384xf32>
    %456 = arith.negf %455 : vector<8x384xf32>
    %457 = math.exp %456 : vector<8x384xf32>
    %cst_130 = arith.constant 1.000000e+00 : f32
    %458 = vector.broadcast %cst_130 : f32 to vector<8x384xf32>
    %459 = arith.addf %458, %457 : vector<8x384xf32>
    %460 = arith.divf %458, %459 : vector<8x384xf32>
    %461 = vector.extract_strided_slice %454 {offsets = [0, 384], sizes = [8, 128], strides = [1, 1]} : vector<8x512xf32> to vector<8x128xf32>
    %462 = math.tanh %461 : vector<8x128xf32>
    %463 = vector.extract_strided_slice %460 {offsets = [0, 0], sizes = [8, 128], strides = [1, 1]} : vector<8x384xf32> to vector<8x128xf32>
    %464 = vector.extract_strided_slice %460 {offsets = [0, 128], sizes = [8, 128], strides = [1, 1]} : vector<8x384xf32> to vector<8x128xf32>
    %465 = vector.extract_strided_slice %460 {offsets = [0, 256], sizes = [8, 128], strides = [1, 1]} : vector<8x384xf32> to vector<8x128xf32>
    %466 = arith.mulf %464, %448 : vector<8x128xf32>
    %467 = arith.mulf %463, %462 : vector<8x128xf32>
    %468 = arith.addf %466, %467 : vector<8x128xf32>
    %469 = math.tanh %468 : vector<8x128xf32>
    %470 = arith.mulf %465, %469 : vector<8x128xf32>
    %c32_131 = arith.constant 32 : index
    %c0_132 = arith.constant 0 : index
    %471 = vector.load %arg18[%c32_131, %c0_132] : memref<64x128xf32, #tpu.memory_space<vmem>>, vector<8x128xf32>
    tpu.vector_store %arg18[%c32_131, %c0_132], %470 {strides = array<i32>} : memref<64x128xf32, #tpu.memory_space<vmem>>, vector<8x128xf32>,
    %472 = vector.extract_strided_slice %366 {offsets = [40, 0], sizes = [8, 512], strides = [1, 1]} : vector<64x512xf32> to vector<8x512xf32>
    %cst_133 = arith.constant dense<0.000000e+00> : vector<8x512xf32>
    %473 = tpu.matmul %470, %367, %cst_133 {dimension_numbers = #tpu.dot_dimension_numbers<[1], [0], [0], [1], [0, 0, 1, 1], [], []>} : vector<8x128xf32>, vector<128x512xf32>, vector<8x512xf32> -> vector<8x512xf32>
    %474 = arith.addf %472, %473 : vector<8x512xf32>
    %475 = vector.extract_strided_slice %474 {offsets = [0, 0], sizes = [8, 384], strides = [1, 1]} : vector<8x512xf32> to vector<8x384xf32>
    %476 = arith.negf %475 : vector<8x384xf32>
    %477 = math.exp %476 : vector<8x384xf32>
    %cst_134 = arith.constant 1.000000e+00 : f32
    %478 = vector.broadcast %cst_134 : f32 to vector<8x384xf32>
    %479 = arith.addf %478, %477 : vector<8x384xf32>
    %480 = arith.divf %478, %479 : vector<8x384xf32>
    %481 = vector.extract_strided_slice %474 {offsets = [0, 384], sizes = [8, 128], strides = [1, 1]} : vector<8x512xf32> to vector<8x128xf32>
    %482 = math.tanh %481 : vector<8x128xf32>
    %483 = vector.extract_strided_slice %480 {offsets = [0, 0], sizes = [8, 128], strides = [1, 1]} : vector<8x384xf32> to vector<8x128xf32>
    %484 = vector.extract_strided_slice %480 {offsets = [0, 128], sizes = [8, 128], strides = [1, 1]} : vector<8x384xf32> to vector<8x128xf32>
    %485 = vector.extract_strided_slice %480 {offsets = [0, 256], sizes = [8, 128], strides = [1, 1]} : vector<8x384xf32> to vector<8x128xf32>
    %486 = arith.mulf %484, %468 : vector<8x128xf32>
    %487 = arith.mulf %483, %482 : vector<8x128xf32>
    %488 = arith.addf %486, %487 : vector<8x128xf32>
    %489 = math.tanh %488 : vector<8x128xf32>
    %490 = arith.mulf %485, %489 : vector<8x128xf32>
    %c40_135 = arith.constant 40 : index
    %c0_136 = arith.constant 0 : index
    %491 = vector.load %arg18[%c40_135, %c0_136] : memref<64x128xf32, #tpu.memory_space<vmem>>, vector<8x128xf32>
    tpu.vector_store %arg18[%c40_135, %c0_136], %490 {strides = array<i32>} : memref<64x128xf32, #tpu.memory_space<vmem>>, vector<8x128xf32>,
    %492 = vector.extract_strided_slice %366 {offsets = [48, 0], sizes = [8, 512], strides = [1, 1]} : vector<64x512xf32> to vector<8x512xf32>
    %cst_137 = arith.constant dense<0.000000e+00> : vector<8x512xf32>
    %493 = tpu.matmul %490, %367, %cst_137 {dimension_numbers = #tpu.dot_dimension_numbers<[1], [0], [0], [1], [0, 0, 1, 1], [], []>} : vector<8x128xf32>, vector<128x512xf32>, vector<8x512xf32> -> vector<8x512xf32>
    %494 = arith.addf %492, %493 : vector<8x512xf32>
    %495 = vector.extract_strided_slice %494 {offsets = [0, 0], sizes = [8, 384], strides = [1, 1]} : vector<8x512xf32> to vector<8x384xf32>
    %496 = arith.negf %495 : vector<8x384xf32>
    %497 = math.exp %496 : vector<8x384xf32>
    %cst_138 = arith.constant 1.000000e+00 : f32
    %498 = vector.broadcast %cst_138 : f32 to vector<8x384xf32>
    %499 = arith.addf %498, %497 : vector<8x384xf32>
    %500 = arith.divf %498, %499 : vector<8x384xf32>
    %501 = vector.extract_strided_slice %494 {offsets = [0, 384], sizes = [8, 128], strides = [1, 1]} : vector<8x512xf32> to vector<8x128xf32>
    %502 = math.tanh %501 : vector<8x128xf32>
    %503 = vector.extract_strided_slice %500 {offsets = [0, 0], sizes = [8, 128], strides = [1, 1]} : vector<8x384xf32> to vector<8x128xf32>
    %504 = vector.extract_strided_slice %500 {offsets = [0, 128], sizes = [8, 128], strides = [1, 1]} : vector<8x384xf32> to vector<8x128xf32>
    %505 = vector.extract_strided_slice %500 {offsets = [0, 256], sizes = [8, 128], strides = [1, 1]} : vector<8x384xf32> to vector<8x128xf32>
    %506 = arith.mulf %504, %488 : vector<8x128xf32>
    %507 = arith.mulf %503, %502 : vector<8x128xf32>
    %508 = arith.addf %506, %507 : vector<8x128xf32>
    %509 = math.tanh %508 : vector<8x128xf32>
    %510 = arith.mulf %505, %509 : vector<8x128xf32>
    %c48_139 = arith.constant 48 : index
    %c0_140 = arith.constant 0 : index
    %511 = vector.load %arg18[%c48_139, %c0_140] : memref<64x128xf32, #tpu.memory_space<vmem>>, vector<8x128xf32>
    tpu.vector_store %arg18[%c48_139, %c0_140], %510 {strides = array<i32>} : memref<64x128xf32, #tpu.memory_space<vmem>>, vector<8x128xf32>,
    %512 = vector.extract_strided_slice %366 {offsets = [56, 0], sizes = [8, 512], strides = [1, 1]} : vector<64x512xf32> to vector<8x512xf32>
    %cst_141 = arith.constant dense<0.000000e+00> : vector<8x512xf32>
    %513 = tpu.matmul %510, %367, %cst_141 {dimension_numbers = #tpu.dot_dimension_numbers<[1], [0], [0], [1], [0, 0, 1, 1], [], []>} : vector<8x128xf32>, vector<128x512xf32>, vector<8x512xf32> -> vector<8x512xf32>
    %514 = arith.addf %512, %513 : vector<8x512xf32>
    %515 = vector.extract_strided_slice %514 {offsets = [0, 0], sizes = [8, 384], strides = [1, 1]} : vector<8x512xf32> to vector<8x384xf32>
    %516 = arith.negf %515 : vector<8x384xf32>
    %517 = math.exp %516 : vector<8x384xf32>
    %cst_142 = arith.constant 1.000000e+00 : f32
    %518 = vector.broadcast %cst_142 : f32 to vector<8x384xf32>
    %519 = arith.addf %518, %517 : vector<8x384xf32>
    %520 = arith.divf %518, %519 : vector<8x384xf32>
    %521 = vector.extract_strided_slice %514 {offsets = [0, 384], sizes = [8, 128], strides = [1, 1]} : vector<8x512xf32> to vector<8x128xf32>
    %522 = math.tanh %521 : vector<8x128xf32>
    %523 = vector.extract_strided_slice %520 {offsets = [0, 0], sizes = [8, 128], strides = [1, 1]} : vector<8x384xf32> to vector<8x128xf32>
    %524 = vector.extract_strided_slice %520 {offsets = [0, 128], sizes = [8, 128], strides = [1, 1]} : vector<8x384xf32> to vector<8x128xf32>
    %525 = vector.extract_strided_slice %520 {offsets = [0, 256], sizes = [8, 128], strides = [1, 1]} : vector<8x384xf32> to vector<8x128xf32>
    %526 = arith.mulf %524, %508 : vector<8x128xf32>
    %527 = arith.mulf %523, %522 : vector<8x128xf32>
    %528 = arith.addf %526, %527 : vector<8x128xf32>
    %529 = math.tanh %528 : vector<8x128xf32>
    %530 = arith.mulf %525, %529 : vector<8x128xf32>
    %c56_143 = arith.constant 56 : index
    %c0_144 = arith.constant 0 : index
    %531 = vector.load %arg18[%c56_143, %c0_144] : memref<64x128xf32, #tpu.memory_space<vmem>>, vector<8x128xf32>
    tpu.vector_store %arg18[%c56_143, %c0_144], %530 {strides = array<i32>} : memref<64x128xf32, #tpu.memory_space<vmem>>, vector<8x128xf32>,
    %c2_145 = arith.constant 2 : index
    %c0_146 = arith.constant 0 : index
    %c0_147 = arith.constant 0 : index
    %532 = vector.load %arg16[%c2_145, %c0_146, %c0_147] : memref<3x8x128xf32, #tpu.memory_space<vmem>>, vector<1x8x128xf32>
    %533 = vector.shape_cast %532 : vector<1x8x128xf32> to vector<8x128xf32>
    %534 = vector.shape_cast %530 : vector<8x128xf32> to vector<1x8x128xf32>
    tpu.vector_store %arg16[%c2_145, %c0_146, %c0_147], %534 {strides = array<i32>} : memref<3x8x128xf32, #tpu.memory_space<vmem>>, vector<1x8x128xf32>,
    %c2_148 = arith.constant 2 : index
    %c0_149 = arith.constant 0 : index
    %c0_150 = arith.constant 0 : index
    %535 = vector.load %arg17[%c2_148, %c0_149, %c0_150] : memref<3x8x128xf32, #tpu.memory_space<vmem>>, vector<1x8x128xf32>
    %536 = vector.shape_cast %535 : vector<1x8x128xf32> to vector<8x128xf32>
    %537 = vector.shape_cast %528 : vector<8x128xf32> to vector<1x8x128xf32>
    tpu.vector_store %arg17[%c2_148, %c0_149, %c0_150], %537 {strides = array<i32>} : memref<3x8x128xf32, #tpu.memory_space<vmem>>, vector<1x8x128xf32>,
    %c0_151 = arith.constant 0 : index
    %c0_152 = arith.constant 0 : index
    %538 = vector.load %arg18[%c0_151, %c0_152] : memref<64x128xf32, #tpu.memory_space<vmem>>, vector<64x128xf32>
    %c0_153 = arith.constant 0 : index
    %c0_154 = arith.constant 0 : index
    %539 = vector.load %arg11[%c0_153, %c0_154] : memref<128x128xf32, #tpu.memory_space<vmem>>, vector<128x128xf32>
    %cst_155 = arith.constant dense<0.000000e+00> : vector<64x128xf32>
    %540 = tpu.matmul %538, %539, %cst_155 {dimension_numbers = #tpu.dot_dimension_numbers<[1], [0], [0], [1], [0, 0, 1, 1], [], []>} : vector<64x128xf32>, vector<128x128xf32>, vector<64x128xf32> -> vector<64x128xf32>
    %c0_156 = arith.constant 0 : index
    %c0_157 = arith.constant 0 : index
    %541 = vector.load %arg12[%c0_156, %c0_157] : memref<1x128xf32, #tpu.memory_space<vmem>>, vector<1x128xf32>
    %542 = vector.broadcast %541 : vector<1x128xf32> to vector<64x128xf32>
    %543 = arith.addf %540, %542 : vector<64x128xf32>
    %c0_158 = arith.constant 0 : index
    %c0_159 = arith.constant 0 : index
    %544 = vector.load %arg15[%c0_158, %c0_159] : memref<64x128xf32, #tpu.memory_space<vmem>>, vector<64x128xf32>
    tpu.vector_store %arg15[%c0_158, %c0_159], %543 {strides = array<i32>} : memref<64x128xf32, #tpu.memory_space<vmem>>, vector<64x128xf32>,
    return
  }
}

</mosaic_0001>

<llo_original>
// kernel: poetry_model_forward.1
$region0: #{poetry_model_forward.1}
  #allocation0 [shape = 'u32[]', space=smem, size = 0x4, offset = 0x4, fixed_abs, tag = 'smem constant byte address 0x4 - core index']
  #allocation1 [shape = 'u32[72,128]{1,0:T(1,128)}', space=vmem, size = 0x9000, scoped, tag = 'internal scratch']
  #allocation2 [shape = 'f32[64,128]{1,0:T(8,128)}', space=vmem, size = 0x8000, scoped, tag = 'scratch operand']
  %s0 = inlined_call_operand.vmem [shape: s32[64,1], index: 0, kind: input, shape index: {}]
  %s1 = inlined_call_operand.hbm [shape: f32[128,128], index: 1, kind: input, shape index: {}]
  %s2 = inlined_call_operand.hbm [shape: f32[128,512], index: 2, kind: input, shape index: {}]
  %s3 = inlined_call_operand.hbm [shape: f32[128,512], index: 3, kind: input, shape index: {}]
  %s4 = inlined_call_operand.vmem [shape: f32[1,512], index: 4, kind: input, shape index: {}]
  %s5 = inlined_call_operand.hbm [shape: f32[128,512], index: 5, kind: input, shape index: {}]
  %s6 = inlined_call_operand.hbm [shape: f32[128,512], index: 6, kind: input, shape index: {}]
  %s7 = inlined_call_operand.vmem [shape: f32[1,512], index: 7, kind: input, shape index: {}]
  %s8 = inlined_call_operand.hbm [shape: f32[128,512], index: 8, kind: input, shape index: {}]
  %s9 = inlined_call_operand.hbm [shape: f32[128,512], index: 9, kind: input, shape index: {}]
  %s10 = inlined_call_operand.vmem [shape: f32[1,512], index: 10, kind: input, shape index: {}]
  %s11 = inlined_call_operand.hbm [shape: f32[128,128], index: 11, kind: input, shape index: {}]
  %s12 = inlined_call_operand.vmem [shape: f32[1,128], index: 12, kind: input, shape index: {}]
  %s13 = inlined_call_operand.vmem [shape: f32[3,8,128], index: 13, kind: input, shape index: {}]
  %s14 = inlined_call_operand.vmem [shape: f32[3,8,128], index: 14, kind: input, shape index: {}]
  %s15 = inlined_call_operand.hbm [shape: f32[64,128], index: 15, kind: output, shape index: {0}]
  %s16 = inlined_call_operand.hbm [shape: f32[3,8,128], index: 16, kind: output, shape index: {1}]
  %s17 = inlined_call_operand.hbm [shape: f32[3,8,128], index: 17, kind: output, shape index: {2}]
  %18 = xla_tuple %s15, %s16, %s17
  %s19 = sld [smem:[#allocation0]]
  $region118: #{poetry_model_forward.1} parent=0
    _
  %s21 = ssub.s32 1, %s19
  %s22 = scalar_select 0, %s21, %s19
  $region1: #{poetry_model_forward.1} parent=0
    #allocation3 [shape = 'u8[65536]{0}', space=vmem, size = 0x10000, scoped, tag = 'input window, operand 1, single buffered']
    #allocation4 [shape = 's32[1]{0}', space=sflag, size = 0x4, scoped, tag = 'scoped memory for poetry_model_forward.1']
    #allocation5 [shape = 's32[1]{0}', space=sflag, size = 0x4, scoped, tag = 'scoped memory for poetry_model_forward.1']
    #allocation6 [shape = 'u8[262144]{0}', space=vmem, size = 0x40000, scoped, tag = 'input window, operand 2, single buffered']
    #allocation7 [shape = 's32[1]{0}', space=sflag, size = 0x4, scoped, tag = 'scoped memory for poetry_model_forward.1']
    #allocation8 [shape = 'u8[262144]{0}', space=vmem, size = 0x40000, scoped, tag = 'input window, operand 3, single buffered']
    #allocation9 [shape = 'u8[262144]{0}', space=vmem, size = 0x40000, scoped, tag = 'input window, operand 5, single buffered']
    #allocation10 [shape = 's32[1]{0}', space=sflag, size = 0x4, scoped, tag = 'scoped memory for poetry_model_forward.1']
    #allocation11 [shape = 'u8[262144]{0}', space=vmem, size = 0x40000, scoped, tag = 'input window, operand 6, single buffered']
    #allocation12 [shape = 'u8[262144]{0}', space=vmem, size = 0x40000, scoped, tag = 'input window, operand 8, single buffered']
    #allocation13 [shape = 's32[1]{0}', space=sflag, size = 0x4, scoped, tag = 'scoped memory for poetry_model_forward.1']
    #allocation14 [shape = 'u8[262144]{0}', space=vmem, size = 0x40000, scoped, tag = 'input window, operand 9, single buffered']
    #allocation15 [shape = 'u8[65536]{0}', space=vmem, size = 0x10000, scoped, tag = 'input window, operand 11, single buffered']
    #allocation16 [shape = 's32[1]{0}', space=sflag, size = 0x4, scoped, tag = 'scoped memory for poetry_model_forward.1']
    #allocation17 [shape = 'u8[32768]{0}', space=vmem, size = 0x8000, scoped, tag = 'output window, operand 0, single buffered']
    #allocation18 [shape = 'u8[12288]{0}', space=vmem, size = 0x3000, scoped, tag = 'output window, operand 1, single buffered']
    #allocation19 [shape = 's32[1]{0}', space=sflag, size = 0x4, scoped, tag = 'scoped memory for poetry_model_forward.1']
    #allocation20 [shape = 'u8[12288]{0}', space=vmem, size = 0x3000, scoped, tag = 'output window, operand 2, single buffered']
    %23 = vsyncpa [#allocation4], 0
    %24 = vsyncpa [#allocation7], 0
    %25 = vsyncpa [#allocation10], 0
    %26 = vsyncpa [#allocation13], 0
    %27 = vsyncpa [#allocation16], 0
    %28 = vsyncpa [#allocation5], 0
    %29 = vsyncpa [#allocation19], 0
    // Predicated region
    $region2: #{poetry_model_forward.1} parent=1 // pred_check
      _
    $region3: #{poetry_model_forward.1} parent=1 // pred_check_branch
      %31 = sbr.rel (0) target = $region5
    $region4: #{poetry_model_forward.1} parent=1 // pred_region
      _
    $region5: #{poetry_model_forward.1} parent=1 // pred_fallthru
      _
    // Predicated region
    $region6: #{poetry_model_forward.1} parent=1 // pred_check
      _
    $region7: #{poetry_model_forward.1} parent=1 // pred_check_branch
      %33 = sbr.rel (0) target = $region9
    $region8: #{poetry_model_forward.1} parent=1 // pred_region
      %35 = vsyncadd [#allocation4], 0
      %s36 = sshll.u32 %s1, 4
      %s37 = int_to_ptr.hbm [resolvable:$true] %s36
      %s38 = sshll.u32 [#allocation3], 4
      %s39 = int_to_ptr.vmem [resolvable:$true] %s38
      %44 = dma.hbm_to_vmem [thread:$0]  %s37, 2048, %s39, [#allocation4], 128, 128, 8
    $region9: #{poetry_model_forward.1} parent=1 // pred_fallthru
      _
    // Predicated region
    $region10: #{poetry_model_forward.1} parent=1 // pred_check
      _
    $region11: #{poetry_model_forward.1} parent=1 // pred_check_branch
      %46 = sbr.rel (0) target = $region13
    $region12: #{poetry_model_forward.1} parent=1 // pred_region
      %48 = vsyncadd [#allocation7], 0
      %s49 = sshll.u32 %s2, 4
      %s50 = int_to_ptr.hbm [resolvable:$true] %s49
      %s51 = sshll.u32 [#allocation6], 4
      %s52 = int_to_ptr.vmem [resolvable:$true] %s51
      %57 = dma.hbm_to_vmem [thread:$0]  %s50, 8192, %s52, [#allocation7], 512, 512, 32
    $region13: #{poetry_model_forward.1} parent=1 // pred_fallthru
      _
    // Predicated region
    $region14: #{poetry_model_forward.1} parent=1 // pred_check
      _
    $region15: #{poetry_model_forward.1} parent=1 // pred_check_branch
      %59 = sbr.rel (0) target = $region17
    $region16: #{poetry_model_forward.1} parent=1 // pred_region
      %61 = vsyncadd [#allocation7], 0
      %s62 = sshll.u32 %s3, 4
      %s63 = int_to_ptr.hbm [resolvable:$true] %s62
      %s64 = sshll.u32 [#allocation8], 4
      %s65 = int_to_ptr.vmem [resolvable:$true] %s64
      %70 = dma.hbm_to_vmem [thread:$0]  %s63, 8192, %s65, [#allocation7], 512, 512, 32
    $region17: #{poetry_model_forward.1} parent=1 // pred_fallthru
      _
    // Predicated region
    $region18: #{poetry_model_forward.1} parent=1 // pred_check
      _
    $region19: #{poetry_model_forward.1} parent=1 // pred_check_branch
      %72 = sbr.rel (0) target = $region21
    $region20: #{poetry_model_forward.1} parent=1 // pred_region
      _
    $region21: #{poetry_model_forward.1} parent=1 // pred_fallthru
      _
    // Predicated region
    $region22: #{poetry_model_forward.1} parent=1 // pred_check
      _
    $region23: #{poetry_model_forward.1} parent=1 // pred_check_branch
      %74 = sbr.rel (0) target = $region25
    $region24: #{poetry_model_forward.1} parent=1 // pred_region
      %76 = vsyncadd [#allocation10], 0
      %s77 = sshll.u32 %s5, 4
      %s78 = int_to_ptr.hbm [resolvable:$true] %s77
      %s79 = sshll.u32 [#allocation9], 4
      %s80 = int_to_ptr.vmem [resolvable:$true] %s79
      %85 = dma.hbm_to_vmem [thread:$0]  %s78, 8192, %s80, [#allocation10], 512, 512, 32
    $region25: #{poetry_model_forward.1} parent=1 // pred_fallthru
      _
    // Predicated region
    $region26: #{poetry_model_forward.1} parent=1 // pred_check
      _
    $region27: #{poetry_model_forward.1} parent=1 // pred_check_branch
      %87 = sbr.rel (0) target = $region29
    $region28: #{poetry_model_forward.1} parent=1 // pred_region
      %89 = vsyncadd [#allocation10], 0
      %s90 = sshll.u32 %s6, 4
      %s91 = int_to_ptr.hbm [resolvable:$true] %s90
      %s92 = sshll.u32 [#allocation11], 4
      %s93 = int_to_ptr.vmem [resolvable:$true] %s92
      %98 = dma.hbm_to_vmem [thread:$0]  %s91, 8192, %s93, [#allocation10], 512, 512, 32
    $region29: #{poetry_model_forward.1} parent=1 // pred_fallthru
      _
    // Predicated region
    $region30: #{poetry_model_forward.1} parent=1 // pred_check
      _
    $region31: #{poetry_model_forward.1} parent=1 // pred_check_branch
      %100 = sbr.rel (0) target = $region33
    $region32: #{poetry_model_forward.1} parent=1 // pred_region
      _
    $region33: #{poetry_model_forward.1} parent=1 // pred_fallthru
      _
    // Predicated region
    $region34: #{poetry_model_forward.1} parent=1 // pred_check
      _
    $region35: #{poetry_model_forward.1} parent=1 // pred_check_branch
      %102 = sbr.rel (0) target = $region37
    $region36: #{poetry_model_forward.1} parent=1 // pred_region
      %104 = vsyncadd [#allocation13], 0
      %s105 = sshll.u32 %s8, 4
      %s106 = int_to_ptr.hbm [resolvable:$true] %s105
      %s107 = sshll.u32 [#allocation12], 4
      %s108 = int_to_ptr.vmem [resolvable:$true] %s107
      %113 = dma.hbm_to_vmem [thread:$0]  %s106, 8192, %s108, [#allocation13], 512, 512, 32
    $region37: #{poetry_model_forward.1} parent=1 // pred_fallthru
      _
    // Predicated region
    $region38: #{poetry_model_forward.1} parent=1 // pred_check
      _
    $region39: #{poetry_model_forward.1} parent=1 // pred_check_branch
      %115 = sbr.rel (0) target = $region41
    $region40: #{poetry_model_forward.1} parent=1 // pred_region
      %117 = vsyncadd [#allocation13], 0
      %s118 = sshll.u32 %s9, 4
      %s119 = int_to_ptr.hbm [resolvable:$true] %s118
      %s120 = sshll.u32 [#allocation14], 4
      %s121 = int_to_ptr.vmem [resolvable:$true] %s120
      %126 = dma.hbm_to_vmem [thread:$0]  %s119, 8192, %s121, [#allocation13], 512, 512, 32
    $region41: #{poetry_model_forward.1} parent=1 // pred_fallthru
      _
    // Predicated region
    $region42: #{poetry_model_forward.1} parent=1 // pred_check
      _
    $region43: #{poetry_model_forward.1} parent=1 // pred_check_branch
      %128 = sbr.rel (0) target = $region45
    $region44: #{poetry_model_forward.1} parent=1 // pred_region
      _
    $region45: #{poetry_model_forward.1} parent=1 // pred_fallthru
      _
    // Predicated region
    $region46: #{poetry_model_forward.1} parent=1 // pred_check
      _
    $region47: #{poetry_model_forward.1} parent=1 // pred_check_branch
      %130 = sbr.rel (0) target = $region49
    $region48: #{poetry_model_forward.1} parent=1 // pred_region
      %132 = vsyncadd [#allocation16], 0
      %s133 = sshll.u32 %s11, 4
      %s134 = int_to_ptr.hbm [resolvable:$true] %s133
      %s135 = sshll.u32 [#allocation15], 4
      %s136 = int_to_ptr.vmem [resolvable:$true] %s135
      %141 = dma.hbm_to_vmem [thread:$0]  %s134, 2048, %s136, [#allocation16], 128, 128, 8
    $region49: #{poetry_model_forward.1} parent=1 // pred_fallthru
      _
    // Predicated region
    $region50: #{poetry_model_forward.1} parent=1 // pred_check
      _
    $region51: #{poetry_model_forward.1} parent=1 // pred_check_branch
      %143 = sbr.rel (0) target = $region53
    $region52: #{poetry_model_forward.1} parent=1 // pred_region
      _
    $region53: #{poetry_model_forward.1} parent=1 // pred_fallthru
      _
    // Predicated region
    $region54: #{poetry_model_forward.1} parent=1 // pred_check
      _
    $region55: #{poetry_model_forward.1} parent=1 // pred_check_branch
      %145 = sbr.rel (0) target = $region57
    $region56: #{poetry_model_forward.1} parent=1 // pred_region
      _
    $region57: #{poetry_model_forward.1} parent=1 // pred_fallthru
      _
    // Predicated region
    $region58: #{poetry_model_forward.1} parent=1 // pred_check
      _
    $region59: #{poetry_model_forward.1} parent=1 // pred_check_branch
      %147 = sbr.rel (0) target = $region61
    $region60: #{poetry_model_forward.1} parent=1 // pred_region
      _
    $region61: #{poetry_model_forward.1} parent=1 // pred_fallthru
      _
    // Predicated region
    $region62: #{poetry_model_forward.1} parent=1 // pred_check
      _
    $region63: #{poetry_model_forward.1} parent=1 // pred_check_branch
      %149 = sbr.rel (0) target = $region65
    $region64: #{poetry_model_forward.1} parent=1 // pred_region
      %151 = dma.done [#allocation4], 2048
    $region65: #{poetry_model_forward.1} parent=1 // pred_fallthru
      _
    // Predicated region
    $region66: #{poetry_model_forward.1} parent=1 // pred_check
      _
    $region67: #{poetry_model_forward.1} parent=1 // pred_check_branch
      %153 = sbr.rel (0) target = $region69
    $region68: #{poetry_model_forward.1} parent=1 // pred_region
      %155 = dma.done [#allocation7], 8192
    $region69: #{poetry_model_forward.1} parent=1 // pred_fallthru
      _
    // Predicated region
    $region70: #{poetry_model_forward.1} parent=1 // pred_check
      _
    $region71: #{poetry_model_forward.1} parent=1 // pred_check_branch
      %157 = sbr.rel (0) target = $region73
    $region72: #{poetry_model_forward.1} parent=1 // pred_region
      %159 = dma.done [#allocation7], 8192
    $region73: #{poetry_model_forward.1} parent=1 // pred_fallthru
      _
    // Predicated region
    $region74: #{poetry_model_forward.1} parent=1 // pred_check
      _
    $region75: #{poetry_model_forward.1} parent=1 // pred_check_branch
      %161 = sbr.rel (0) target = $region77
    $region76: #{poetry_model_forward.1} parent=1 // pred_region
      %163 = dma.done [#allocation10], 8192
    $region77: #{poetry_model_forward.1} parent=1 // pred_fallthru
      _
    // Predicated region
    $region78: #{poetry_model_forward.1} parent=1 // pred_check
      _
    $region79: #{poetry_model_forward.1} parent=1 // pred_check_branch
      %165 = sbr.rel (0) target = $region81
    $region80: #{poetry_model_forward.1} parent=1 // pred_region
      %167 = dma.done [#allocation10], 8192
    $region81: #{poetry_model_forward.1} parent=1 // pred_fallthru
      _
    // Predicated region
    $region82: #{poetry_model_forward.1} parent=1 // pred_check
      _
    $region83: #{poetry_model_forward.1} parent=1 // pred_check_branch
      %169 = sbr.rel (0) target = $region85
    $region84: #{poetry_model_forward.1} parent=1 // pred_region
      %171 = dma.done [#allocation13], 8192
    $region85: #{poetry_model_forward.1} parent=1 // pred_fallthru
      _
    // Predicated region
    $region86: #{poetry_model_forward.1} parent=1 // pred_check
      _
    $region87: #{poetry_model_forward.1} parent=1 // pred_check_branch
      %173 = sbr.rel (0) target = $region89
    $region88: #{poetry_model_forward.1} parent=1 // pred_region
      %175 = dma.done [#allocation13], 8192
    $region89: #{poetry_model_forward.1} parent=1 // pred_fallthru
      _
    // Predicated region
    $region90: #{poetry_model_forward.1} parent=1 // pred_check
      _
    $region91: #{poetry_model_forward.1} parent=1 // pred_check_branch
      %177 = sbr.rel (0) target = $region93
    $region92: #{poetry_model_forward.1} parent=1 // pred_region
      %179 = dma.done [#allocation16], 2048
    $region93: #{poetry_model_forward.1} parent=1 // pred_fallthru
      _
    %v180 = vlaneseq
    %v181 = vand.u32 %v180, 127
    %v182 = vld [vmem:[%s0] sm:$0xff]
    %v183 = vld [vmem:[%s0 + $0x8] sm:$0xff]
    %v184 = vld [vmem:[%s0 + $0x10] sm:$0xff]
    %v185 = vld [vmem:[%s0 + $0x18] sm:$0xff]
    %v186 = vld [vmem:[%s0 + $0x20] sm:$0xff]
    %v187 = vld [vmem:[%s0 + $0x28] sm:$0xff]
    %v188 = vld [vmem:[%s0 + $0x30] sm:$0xff]
    %v189 = vld [vmem:[%s0 + $0x38] sm:$0xff]
    %190 = vset.pattern.permute.xlu0 0
    %191 = vperm.xlu0 %190, %v182
    %v192 = vpop.permute.xlu0 %191
    %193 = vset.pattern.permute.xlu0 0
    %194 = vperm.xlu0 %193, %v183
    %v195 = vpop.permute.xlu0 %194
    %196 = vset.pattern.permute.xlu0 0
    %197 = vperm.xlu0 %196, %v184
    %v198 = vpop.permute.xlu0 %197
    %199 = vset.pattern.permute.xlu0 0
    %200 = vperm.xlu0 %199, %v185
    %v201 = vpop.permute.xlu0 %200
    %202 = vset.pattern.permute.xlu0 0
    %203 = vperm.xlu0 %202, %v186
    %v204 = vpop.permute.xlu0 %203
    %205 = vset.pattern.permute.xlu0 0
    %206 = vperm.xlu0 %205, %v187
    %v207 = vpop.permute.xlu0 %206
    %208 = vset.pattern.permute.xlu0 0
    %209 = vperm.xlu0 %208, %v188
    %v210 = vpop.permute.xlu0 %209
    %211 = vset.pattern.permute.xlu0 0
    %212 = vperm.xlu0 %211, %v189
    %v213 = vpop.permute.xlu0 %212
    %vm214 = vcmp.eq.s32.totalorder %v181, %v192
    %vm215 = vcmp.eq.s32.totalorder %v181, %v195
    %vm216 = vcmp.eq.s32.totalorder %v181, %v198
    %vm217 = vcmp.eq.s32.totalorder %v181, %v201
    %vm218 = vcmp.eq.s32.totalorder %v181, %v204
    %vm219 = vcmp.eq.s32.totalorder %v181, %v207
    %vm220 = vcmp.eq.s32.totalorder %v181, %v210
    %vm221 = vcmp.eq.s32.totalorder %v181, %v213
    %v222 = vsel %vm214, 1, 0
    %v223 = vsel %vm215, 1, 0
    %v224 = vsel %vm216, 1, 0
    %v225 = vsel %vm217, 1, 0
    %v226 = vsel %vm218, 1, 0
    %v227 = vsel %vm219, 1, 0
    %v228 = vsel %vm220, 1, 0
    %v229 = vsel %vm221, 1, 0
    %v230 = vcvt.s32.f32 %v222
    %v231 = vcvt.s32.f32 %v223
    %v232 = vcvt.s32.f32 %v224
    %v233 = vcvt.s32.f32 %v225
    %v234 = vcvt.s32.f32 %v226
    %v235 = vcvt.s32.f32 %v227
    %v236 = vcvt.s32.f32 %v228
    %v237 = vcvt.s32.f32 %v229
    %v238 = vld [vmem:[#allocation3] sm:$0xff]
    %v239 = vld [vmem:[#allocation3 + $0x8] sm:$0xff]
    %v240 = vld [vmem:[#allocation3 + $0x10] sm:$0xff]
    %v241 = vld [vmem:[#allocation3 + $0x18] sm:$0xff]
    %v242 = vld [vmem:[#allocation3 + $0x20] sm:$0xff]
    %v243 = vld [vmem:[#allocation3 + $0x28] sm:$0xff]
    %v244 = vld [vmem:[#allocation3 + $0x30] sm:$0xff]
    %v245 = vld [vmem:[#allocation3 + $0x38] sm:$0xff]
    %v246 = vld [vmem:[#allocation3 + $0x40] sm:$0xff]
    %v247 = vld [vmem:[#allocation3 + $0x48] sm:$0xff]
    %v248 = vld [vmem:[#allocation3 + $0x50] sm:$0xff]
    %v249 = vld [vmem:[#allocation3 + $0x58] sm:$0xff]
    %v250 = vld [vmem:[#allocation3 + $0x60] sm:$0xff]
    %v251 = vld [vmem:[#allocation3 + $0x68] sm:$0xff]
    %v252 = vld [vmem:[#allocation3 + $0x70] sm:$0xff]
    %v253 = vld [vmem:[#allocation3 + $0x78] sm:$0xff]
    %254 = vmatpush.msra.mxu0 %v253
    %255 = vmatpush.msra.mxu0 %v252
    %256 = vmatpush.msra.mxu0 %v251
    %257 = vmatpush.msra.mxu0 %v250
    %258 = vmatpush.msra.mxu0 %v249
    %259 = vmatpush.msra.mxu0 %v248
    %260 = vmatpush.msra.mxu0 %v247
    %261 = vmatpush.msra.mxu0 %v246
    %262 = vmatpush.msra.mxu0 %v245
    %263 = vmatpush.msra.mxu0 %v244
    %264 = vmatpush.msra.mxu0 %v243
    %265 = vmatpush.msra.mxu0 %v242
    %266 = vmatpush.msra.mxu0 %v241
    %267 = vmatpush.msra.mxu0 %v240
    %268 = vmatpush.msra.mxu0 %v239
    %269 = vmatpush.msra.mxu0 %v238
    %270 = vmatmul.f32.gmra.mxu0 %v230
    %v271 = vpop.f32.mrf.mxu0
    %v272 = vadd.f32 0.0, %v271
    %273 = vmatmul.f32.gmra.mxu0 %v231
    %v274 = vpop.f32.mrf.mxu0
    %v275 = vadd.f32 0.0, %v274
    %276 = vmatmul.f32.gmra.mxu0 %v232
    %v277 = vpop.f32.mrf.mxu0
    %v278 = vadd.f32 0.0, %v277
    %279 = vmatmul.f32.gmra.mxu0 %v233
    %v280 = vpop.f32.mrf.mxu0
    %v281 = vadd.f32 0.0, %v280
    %282 = vmatmul.f32.gmra.mxu0 %v234
    %v283 = vpop.f32.mrf.mxu0
    %v284 = vadd.f32 0.0, %v283
    %285 = vmatmul.f32.gmra.mxu0 %v235
    %v286 = vpop.f32.mrf.mxu0
    %v287 = vadd.f32 0.0, %v286
    %288 = vmatmul.f32.gmra.mxu0 %v236
    %v289 = vpop.f32.mrf.mxu0
    %v290 = vadd.f32 0.0, %v289
    %291 = vmatmul.f32.gmra.mxu0 %v237
    %v292 = vpop.f32.mrf.mxu0
    %v293 = vadd.f32 0.0, %v292
    %294 = vdwg.mxu0
    %v295 = vld [vmem:[#allocation6] sm:$0xff]
    %v296 = vld [vmem:[#allocation6 + $0x8] sm:$0xff]
    %v297 = vld [vmem:[#allocation6 + $0x10] sm:$0xff]
    %v298 = vld [vmem:[#allocation6 + $0x18] sm:$0xff]
    %v299 = vld [vmem:[#allocation6 + $0x20] sm:$0xff]
    %v300 = vld [vmem:[#allocation6 + $0x28] sm:$0xff]
    %v301 = vld [vmem:[#allocation6 + $0x30] sm:$0xff]
    %v302 = vld [vmem:[#allocation6 + $0x38] sm:$0xff]
    %v303 = vld [vmem:[#allocation6 + $0x40] sm:$0xff]
    %v304 = vld [vmem:[#allocation6 + $0x48] sm:$0xff]
    %v305 = vld [vmem:[#allocation6 + $0x50] sm:$0xff]
    %v306 = vld [vmem:[#allocation6 + $0x58] sm:$0xff]
    %v307 = vld [vmem:[#allocation6 + $0x60] sm:$0xff]
    %v308 = vld [vmem:[#allocation6 + $0x68] sm:$0xff]
    %v309 = vld [vmem:[#allocation6 + $0x70] sm:$0xff]
    %v310 = vld [vmem:[#allocation6 + $0x78] sm:$0xff]
    %v311 = vld [vmem:[#allocation6 + $0x80] sm:$0xff]
    %v312 = vld [vmem:[#allocation6 + $0x88] sm:$0xff]
    %v313 = vld [vmem:[#allocation6 + $0x90] sm:$0xff]
    %v314 = vld [vmem:[#allocation6 + $0x98] sm:$0xff]
    %v315 = vld [vmem:[#allocation6 + $0xa0] sm:$0xff]
    %v316 = vld [vmem:[#allocation6 + $0xa8] sm:$0xff]
    %v317 = vld [vmem:[#allocation6 + $0xb0] sm:$0xff]
    %v318 = vld [vmem:[#allocation6 + $0xb8] sm:$0xff]
    %v319 = vld [vmem:[#allocation6 + $0xc0] sm:$0xff]
    %v320 = vld [vmem:[#allocation6 + $0xc8] sm:$0xff]
    %v321 = vld [vmem:[#allocation6 + $0xd0] sm:$0xff]
    %v322 = vld [vmem:[#allocation6 + $0xd8] sm:$0xff]
    %v323 = vld [vmem:[#allocation6 + $0xe0] sm:$0xff]
    %v324 = vld [vmem:[#allocation6 + $0xe8] sm:$0xff]
    %v325 = vld [vmem:[#allocation6 + $0xf0] sm:$0xff]
    %v326 = vld [vmem:[#allocation6 + $0xf8] sm:$0xff]
    %v327 = vld [vmem:[#allocation6 + $0x100] sm:$0xff]
    %v328 = vld [vmem:[#allocation6 + $0x108] sm:$0xff]
    %v329 = vld [vmem:[#allocation6 + $0x110] sm:$0xff]
    %v330 = vld [vmem:[#allocation6 + $0x118] sm:$0xff]
    %v331 = vld [vmem:[#allocation6 + $0x120] sm:$0xff]
    %v332 = vld [vmem:[#allocation6 + $0x128] sm:$0xff]
    %v333 = vld [vmem:[#allocation6 + $0x130] sm:$0xff]
    %v334 = vld [vmem:[#allocation6 + $0x138] sm:$0xff]
    %v335 = vld [vmem:[#allocation6 + $0x140] sm:$0xff]
    %v336 = vld [vmem:[#allocation6 + $0x148] sm:$0xff]
    %v337 = vld [vmem:[#allocation6 + $0x150] sm:$0xff]
    %v338 = vld [vmem:[#allocation6 + $0x158] sm:$0xff]
    %v339 = vld [vmem:[#allocation6 + $0x160] sm:$0xff]
    %v340 = vld [vmem:[#allocation6 + $0x168] sm:$0xff]
    %v341 = vld [vmem:[#allocation6 + $0x170] sm:$0xff]
    %v342 = vld [vmem:[#allocation6 + $0x178] sm:$0xff]
    %v343 = vld [vmem:[#allocation6 + $0x180] sm:$0xff]
    %v344 = vld [vmem:[#allocation6 + $0x188] sm:$0xff]
    %v345 = vld [vmem:[#allocation6 + $0x190] sm:$0xff]
    %v346 = vld [vmem:[#allocation6 + $0x198] sm:$0xff]
    %v347 = vld [vmem:[#allocation6 + $0x1a0] sm:$0xff]
    %v348 = vld [vmem:[#allocation6 + $0x1a8] sm:$0xff]
    %v349 = vld [vmem:[#allocation6 + $0x1b0] sm:$0xff]
    %v350 = vld [vmem:[#allocation6 + $0x1b8] sm:$0xff]
    %v351 = vld [vmem:[#allocation6 + $0x1c0] sm:$0xff]
    %v352 = vld [vmem:[#allocation6 + $0x1c8] sm:$0xff]
    %v353 = vld [vmem:[#allocation6 + $0x1d0] sm:$0xff]
    %v354 = vld [vmem:[#allocation6 + $0x1d8] sm:$0xff]
    %v355 = vld [vmem:[#allocation6 + $0x1e0] sm:$0xff]
    %v356 = vld [vmem:[#allocation6 + $0x1e8] sm:$0xff]
    %v357 = vld [vmem:[#allocation6 + $0x1f0] sm:$0xff]
    %v358 = vld [vmem:[#allocation6 + $0x1f8] sm:$0xff]
    %v359 = vld [vmem:[%s4] sm:$0xf]
    %v361 = vperm.slane %v359, 0
    %v362 = vperm.slane %v359, 1
    %v363 = vperm.slane %v359, 2
    %v364 = vperm.slane %v359, 3
    %369 = vmatpush.msra.mxu0 %v355
    %370 = vmatpush.msra.mxu0 %v351
    %371 = vmatpush.msra.mxu0 %v347
    %372 = vmatpush.msra.mxu0 %v343
    %373 = vmatpush.msra.mxu0 %v339
    %374 = vmatpush.msra.mxu0 %v335
    %375 = vmatpush.msra.mxu0 %v331
    %376 = vmatpush.msra.mxu0 %v327
    %377 = vmatpush.msra.mxu0 %v323
    %378 = vmatpush.msra.mxu0 %v319
    %379 = vmatpush.msra.mxu0 %v315
    %380 = vmatpush.msra.mxu0 %v311
    %381 = vmatpush.msra.mxu0 %v307
    %382 = vmatpush.msra.mxu0 %v303
    %383 = vmatpush.msra.mxu0 %v299
    %384 = vmatpush.msra.mxu0 %v295
    %385 = vmatmul.f32.gmra.mxu0 %v272
    %v386 = vpop.f32.mrf.mxu0
    %v387 = vadd.f32 %v361, %v386
    %388 = vmatmul.f32.gmra.mxu0 %v275
    %v389 = vpop.f32.mrf.mxu0
    %v390 = vadd.f32 %v361, %v389
    %391 = vmatmul.f32.gmra.mxu0 %v278
    %v392 = vpop.f32.mrf.mxu0
    %v393 = vadd.f32 %v361, %v392
    %394 = vmatmul.f32.gmra.mxu0 %v281
    %v395 = vpop.f32.mrf.mxu0
    %v396 = vadd.f32 %v361, %v395
    %397 = vmatmul.f32.gmra.mxu0 %v284
    %v398 = vpop.f32.mrf.mxu0
    %v399 = vadd.f32 %v361, %v398
    %400 = vmatmul.f32.gmra.mxu0 %v287
    %v401 = vpop.f32.mrf.mxu0
    %v402 = vadd.f32 %v361, %v401
    %403 = vmatmul.f32.gmra.mxu0 %v290
    %v404 = vpop.f32.mrf.mxu0
    %v405 = vadd.f32 %v361, %v404
    %406 = vmatmul.f32.gmra.mxu0 %v293
    %v407 = vpop.f32.mrf.mxu0
    %v408 = vadd.f32 %v361, %v407
    %409 = vdwg.mxu0
    %410 = vmatpush.msra.mxu0 %v356
    %411 = vmatpush.msra.mxu0 %v352
    %412 = vmatpush.msra.mxu0 %v348
    %413 = vmatpush.msra.mxu0 %v344
    %414 = vmatpush.msra.mxu0 %v340
    %415 = vmatpush.msra.mxu0 %v336
    %416 = vmatpush.msra.mxu0 %v332
    %417 = vmatpush.msra.mxu0 %v328
    %418 = vmatpush.msra.mxu0 %v324
    %419 = vmatpush.msra.mxu0 %v320
    %420 = vmatpush.msra.mxu0 %v316
    %421 = vmatpush.msra.mxu0 %v312
    %422 = vmatpush.msra.mxu0 %v308
    %423 = vmatpush.msra.mxu0 %v304
    %424 = vmatpush.msra.mxu0 %v300
    %425 = vmatpush.msra.mxu0 %v296
    %426 = vmatmul.f32.gmra.mxu0 %v272
    %v427 = vpop.f32.mrf.mxu0
    %v428 = vadd.f32 %v362, %v427
    %429 = vmatmul.f32.gmra.mxu0 %v275
    %v430 = vpop.f32.mrf.mxu0
    %v431 = vadd.f32 %v362, %v430
    %432 = vmatmul.f32.gmra.mxu0 %v278
    %v433 = vpop.f32.mrf.mxu0
    %v434 = vadd.f32 %v362, %v433
    %435 = vmatmul.f32.gmra.mxu0 %v281
    %v436 = vpop.f32.mrf.mxu0
    %v437 = vadd.f32 %v362, %v436
    %438 = vmatmul.f32.gmra.mxu0 %v284
    %v439 = vpop.f32.mrf.mxu0
    %v440 = vadd.f32 %v362, %v439
    %441 = vmatmul.f32.gmra.mxu0 %v287
    %v442 = vpop.f32.mrf.mxu0
    %v443 = vadd.f32 %v362, %v442
    %444 = vmatmul.f32.gmra.mxu0 %v290
    %v445 = vpop.f32.mrf.mxu0
    %v446 = vadd.f32 %v362, %v445
    %447 = vmatmul.f32.gmra.mxu0 %v293
    %v448 = vpop.f32.mrf.mxu0
    %v449 = vadd.f32 %v362, %v448
    %450 = vdwg.mxu0
    %451 = vmatpush.msra.mxu0 %v357
    %452 = vmatpush.msra.mxu0 %v353
    %453 = vmatpush.msra.mxu0 %v349
    %454 = vmatpush.msra.mxu0 %v345
    %455 = vmatpush.msra.mxu0 %v341
    %456 = vmatpush.msra.mxu0 %v337
    %457 = vmatpush.msra.mxu0 %v333
    %458 = vmatpush.msra.mxu0 %v329
    %459 = vmatpush.msra.mxu0 %v325
    %460 = vmatpush.msra.mxu0 %v321
    %461 = vmatpush.msra.mxu0 %v317
    %462 = vmatpush.msra.mxu0 %v313
    %463 = vmatpush.msra.mxu0 %v309
    %464 = vmatpush.msra.mxu0 %v305
    %465 = vmatpush.msra.mxu0 %v301
    %466 = vmatpush.msra.mxu0 %v297
    %467 = vmatmul.f32.gmra.mxu0 %v272
    %v468 = vpop.f32.mrf.mxu0
    %v469 = vadd.f32 %v363, %v468
    %470 = vmatmul.f32.gmra.mxu0 %v275
    %v471 = vpop.f32.mrf.mxu0
    %v472 = vadd.f32 %v363, %v471
    %473 = vmatmul.f32.gmra.mxu0 %v278
    %v474 = vpop.f32.mrf.mxu0
    %v475 = vadd.f32 %v363, %v474
    %476 = vmatmul.f32.gmra.mxu0 %v281
    %v477 = vpop.f32.mrf.mxu0
    %v478 = vadd.f32 %v363, %v477
    %479 = vmatmul.f32.gmra.mxu0 %v284
    %v480 = vpop.f32.mrf.mxu0
    %v481 = vadd.f32 %v363, %v480
    %482 = vmatmul.f32.gmra.mxu0 %v287
    %v483 = vpop.f32.mrf.mxu0
    %v484 = vadd.f32 %v363, %v483
    %485 = vmatmul.f32.gmra.mxu0 %v290
    %v486 = vpop.f32.mrf.mxu0
    %v487 = vadd.f32 %v363, %v486
    %488 = vmatmul.f32.gmra.mxu0 %v293
    %v489 = vpop.f32.mrf.mxu0
    %v490 = vadd.f32 %v363, %v489
    %491 = vdwg.mxu0
    %492 = vmatpush.msra.mxu0 %v358
    %493 = vmatpush.msra.mxu0 %v354
    %494 = vmatpush.msra.mxu0 %v350
    %495 = vmatpush.msra.mxu0 %v346
    %496 = vmatpush.msra.mxu0 %v342
    %497 = vmatpush.msra.mxu0 %v338
    %498 = vmatpush.msra.mxu0 %v334
    %499 = vmatpush.msra.mxu0 %v330
    %500 = vmatpush.msra.mxu0 %v326
    %501 = vmatpush.msra.mxu0 %v322
    %502 = vmatpush.msra.mxu0 %v318
    %503 = vmatpush.msra.mxu0 %v314
    %504 = vmatpush.msra.mxu0 %v310
    %505 = vmatpush.msra.mxu0 %v306
    %506 = vmatpush.msra.mxu0 %v302
    %507 = vmatpush.msra.mxu0 %v298
    %508 = vmatmul.f32.gmra.mxu0 %v272
    %v509 = vpop.f32.mrf.mxu0
    %v510 = vadd.f32 %v364, %v509
    %511 = vmatmul.f32.gmra.mxu0 %v275
    %v512 = vpop.f32.mrf.mxu0
    %v513 = vadd.f32 %v364, %v512
    %514 = vmatmul.f32.gmra.mxu0 %v278
    %v515 = vpop.f32.mrf.mxu0
    %v516 = vadd.f32 %v364, %v515
    %517 = vmatmul.f32.gmra.mxu0 %v281
    %v518 = vpop.f32.mrf.mxu0
    %v519 = vadd.f32 %v364, %v518
    %520 = vmatmul.f32.gmra.mxu0 %v284
    %v521 = vpop.f32.mrf.mxu0
    %v522 = vadd.f32 %v364, %v521
    %523 = vmatmul.f32.gmra.mxu0 %v287
    %v524 = vpop.f32.mrf.mxu0
    %v525 = vadd.f32 %v364, %v524
    %526 = vmatmul.f32.gmra.mxu0 %v290
    %v527 = vpop.f32.mrf.mxu0
    %v528 = vadd.f32 %v364, %v527
    %529 = vmatmul.f32.gmra.mxu0 %v293
    %v530 = vpop.f32.mrf.mxu0
    %v531 = vadd.f32 %v364, %v530
    %532 = vdwg.mxu0
    %v533 = vld [vmem:[#allocation8] sm:$0xff]
    %v534 = vld [vmem:[#allocation8 + $0x8] sm:$0xff]
    %v535 = vld [vmem:[#allocation8 + $0x10] sm:$0xff]
    %v536 = vld [vmem:[#allocation8 + $0x18] sm:$0xff]
    %v537 = vld [vmem:[#allocation8 + $0x20] sm:$0xff]
    %v538 = vld [vmem:[#allocation8 + $0x28] sm:$0xff]
    %v539 = vld [vmem:[#allocation8 + $0x30] sm:$0xff]
    %v540 = vld [vmem:[#allocation8 + $0x38] sm:$0xff]
    %v541 = vld [vmem:[#allocation8 + $0x40] sm:$0xff]
    %v542 = vld [vmem:[#allocation8 + $0x48] sm:$0xff]
    %v543 = vld [vmem:[#allocation8 + $0x50] sm:$0xff]
    %v544 = vld [vmem:[#allocation8 + $0x58] sm:$0xff]
    %v545 = vld [vmem:[#allocation8 + $0x60] sm:$0xff]
    %v546 = vld [vmem:[#allocation8 + $0x68] sm:$0xff]
    %v547 = vld [vmem:[#allocation8 + $0x70] sm:$0xff]
    %v548 = vld [vmem:[#allocation8 + $0x78] sm:$0xff]
    %v549 = vld [vmem:[#allocation8 + $0x80] sm:$0xff]
    %v550 = vld [vmem:[#allocation8 + $0x88] sm:$0xff]
    %v551 = vld [vmem:[#allocation8 + $0x90] sm:$0xff]
    %v552 = vld [vmem:[#allocation8 + $0x98] sm:$0xff]
    %v553 = vld [vmem:[#allocation8 + $0xa0] sm:$0xff]
    %v554 = vld [vmem:[#allocation8 + $0xa8] sm:$0xff]
    %v555 = vld [vmem:[#allocation8 + $0xb0] sm:$0xff]
    %v556 = vld [vmem:[#allocation8 + $0xb8] sm:$0xff]
    %v557 = vld [vmem:[#allocation8 + $0xc0] sm:$0xff]
    %v558 = vld [vmem:[#allocation8 + $0xc8] sm:$0xff]
    %v559 = vld [vmem:[#allocation8 + $0xd0] sm:$0xff]
    %v560 = vld [vmem:[#allocation8 + $0xd8] sm:$0xff]
    %v561 = vld [vmem:[#allocation8 + $0xe0] sm:$0xff]
    %v562 = vld [vmem:[#allocation8 + $0xe8] sm:$0xff]
    %v563 = vld [vmem:[#allocation8 + $0xf0] sm:$0xff]
    %v564 = vld [vmem:[#allocation8 + $0xf8] sm:$0xff]
    %v565 = vld [vmem:[#allocation8 + $0x100] sm:$0xff]
    %v566 = vld [vmem:[#allocation8 + $0x108] sm:$0xff]
    %v567 = vld [vmem:[#allocation8 + $0x110] sm:$0xff]
    %v568 = vld [vmem:[#allocation8 + $0x118] sm:$0xff]
    %v569 = vld [vmem:[#allocation8 + $0x120] sm:$0xff]
    %v570 = vld [vmem:[#allocation8 + $0x128] sm:$0xff]
    %v571 = vld [vmem:[#allocation8 + $0x130] sm:$0xff]
    %v572 = vld [vmem:[#allocation8 + $0x138] sm:$0xff]
    %v573 = vld [vmem:[#allocation8 + $0x140] sm:$0xff]
    %v574 = vld [vmem:[#allocation8 + $0x148] sm:$0xff]
    %v575 = vld [vmem:[#allocation8 + $0x150] sm:$0xff]
    %v576 = vld [vmem:[#allocation8 + $0x158] sm:$0xff]
    %v577 = vld [vmem:[#allocation8 + $0x160] sm:$0xff]
    %v578 = vld [vmem:[#allocation8 + $0x168] sm:$0xff]
    %v579 = vld [vmem:[#allocation8 + $0x170] sm:$0xff]
    %v580 = vld [vmem:[#allocation8 + $0x178] sm:$0xff]
    %v581 = vld [vmem:[#allocation8 + $0x180] sm:$0xff]
    %v582 = vld [vmem:[#allocation8 + $0x188] sm:$0xff]
    %v583 = vld [vmem:[#allocation8 + $0x190] sm:$0xff]
    %v584 = vld [vmem:[#allocation8 + $0x198] sm:$0xff]
    %v585 = vld [vmem:[#allocation8 + $0x1a0] sm:$0xff]
    %v586 = vld [vmem:[#allocation8 + $0x1a8] sm:$0xff]
    %v587 = vld [vmem:[#allocation8 + $0x1b0] sm:$0xff]
    %v588 = vld [vmem:[#allocation8 + $0x1b8] sm:$0xff]
    %v589 = vld [vmem:[#allocation8 + $0x1c0] sm:$0xff]
    %v590 = vld [vmem:[#allocation8 + $0x1c8] sm:$0xff]
    %v591 = vld [vmem:[#allocation8 + $0x1d0] sm:$0xff]
    %v592 = vld [vmem:[#allocation8 + $0x1d8] sm:$0xff]
    %v593 = vld [vmem:[#allocation8 + $0x1e0] sm:$0xff]
    %v594 = vld [vmem:[#allocation8 + $0x1e8] sm:$0xff]
    %v595 = vld [vmem:[#allocation8 + $0x1f0] sm:$0xff]
    %v596 = vld [vmem:[#allocation8 + $0x1f8] sm:$0xff]
    %v597 = vld [vmem:[%s13] sm:$0xff]
    %v598 = vld [vmem:[%s14] sm:$0xff]
    %599 = vmatpush.msra.mxu0 %v593
    %600 = vmatpush.msra.mxu0 %v589
    %601 = vmatpush.msra.mxu0 %v585
    %602 = vmatpush.msra.mxu0 %v581
    %603 = vmatpush.msra.mxu0 %v577
    %604 = vmatpush.msra.mxu0 %v573
    %605 = vmatpush.msra.mxu0 %v569
    %606 = vmatpush.msra.mxu0 %v565
    %607 = vmatpush.msra.mxu0 %v561
    %608 = vmatpush.msra.mxu0 %v557
    %609 = vmatpush.msra.mxu0 %v553
    %610 = vmatpush.msra.mxu0 %v549
    %611 = vmatpush.msra.mxu0 %v545
    %612 = vmatpush.msra.mxu0 %v541
    %613 = vmatpush.msra.mxu0 %v537
    %614 = vmatpush.msra.mxu0 %v533
    %615 = vmatmul.f32.gmra.mxu0 %v597
    %v616 = vpop.f32.mrf.mxu0
    %v617 = vadd.f32 0.0, %v616
    %618 = vdwg.mxu0
    %619 = vmatpush.msra.mxu0 %v594
    %620 = vmatpush.msra.mxu0 %v590
    %621 = vmatpush.msra.mxu0 %v586
    %622 = vmatpush.msra.mxu0 %v582
    %623 = vmatpush.msra.mxu0 %v578
    %624 = vmatpush.msra.mxu0 %v574
    %625 = vmatpush.msra.mxu0 %v570
    %626 = vmatpush.msra.mxu0 %v566
    %627 = vmatpush.msra.mxu0 %v562
    %628 = vmatpush.msra.mxu0 %v558
    %629 = vmatpush.msra.mxu0 %v554
    %630 = vmatpush.msra.mxu0 %v550
    %631 = vmatpush.msra.mxu0 %v546
    %632 = vmatpush.msra.mxu0 %v542
    %633 = vmatpush.msra.mxu0 %v538
    %634 = vmatpush.msra.mxu0 %v534
    %635 = vmatmul.f32.gmra.mxu0 %v597
    %v636 = vpop.f32.mrf.mxu0
    %v637 = vadd.f32 0.0, %v636
    %638 = vdwg.mxu0
    %639 = vmatpush.msra.mxu0 %v595
    %640 = vmatpush.msra.mxu0 %v591
    %641 = vmatpush.msra.mxu0 %v587
    %642 = vmatpush.msra.mxu0 %v583
    %643 = vmatpush.msra.mxu0 %v579
    %644 = vmatpush.msra.mxu0 %v575
    %645 = vmatpush.msra.mxu0 %v571
    %646 = vmatpush.msra.mxu0 %v567
    %647 = vmatpush.msra.mxu0 %v563
    %648 = vmatpush.msra.mxu0 %v559
    %649 = vmatpush.msra.mxu0 %v555
    %650 = vmatpush.msra.mxu0 %v551
    %651 = vmatpush.msra.mxu0 %v547
    %652 = vmatpush.msra.mxu0 %v543
    %653 = vmatpush.msra.mxu0 %v539
    %654 = vmatpush.msra.mxu0 %v535
    %655 = vmatmul.f32.gmra.mxu0 %v597
    %v656 = vpop.f32.mrf.mxu0
    %v657 = vadd.f32 0.0, %v656
    %658 = vdwg.mxu0
    %659 = vmatpush.msra.mxu0 %v596
    %660 = vmatpush.msra.mxu0 %v592
    %661 = vmatpush.msra.mxu0 %v588
    %662 = vmatpush.msra.mxu0 %v584
    %663 = vmatpush.msra.mxu0 %v580
    %664 = vmatpush.msra.mxu0 %v576
    %665 = vmatpush.msra.mxu0 %v572
    %666 = vmatpush.msra.mxu0 %v568
    %667 = vmatpush.msra.mxu0 %v564
    %668 = vmatpush.msra.mxu0 %v560
    %669 = vmatpush.msra.mxu0 %v556
    %670 = vmatpush.msra.mxu0 %v552
    %671 = vmatpush.msra.mxu0 %v548
    %672 = vmatpush.msra.mxu0 %v544
    %673 = vmatpush.msra.mxu0 %v540
    %674 = vmatpush.msra.mxu0 %v536
    %675 = vmatmul.f32.gmra.mxu0 %v597
    %v676 = vpop.f32.mrf.mxu0
    %v677 = vadd.f32 0.0, %v676
    %678 = vdwg.mxu0
    %v679 = vadd.f32 %v387, %v617
    %v680 = vadd.f32 %v428, %v637
    %v681 = vadd.f32 %v469, %v657
    %v682 = vadd.f32 %v510, %v677
    %v683 = vxor.u32 %v679, 2147483648
    %v684 = vxor.u32 %v680, 2147483648
    %v685 = vxor.u32 %v681, 2147483648
    %v686 = vmul.f32 %v683, 1.442695
    %v687 = vpow.pop %v686
    %v688 = vmul.f32 %v684, 1.442695
    %v689 = vpow.pop %v688
    %v690 = vmul.f32 %v685, 1.442695
    %v691 = vpow.pop %v690
    %v692 = vadd.f32 %v687, 1.0
    %v693 = vadd.f32 %v689, 1.0
    %v694 = vadd.f32 %v691, 1.0
    %v695 = vrcp.pop %v692
    %v696 = vmul.f32 %v692, %v695
    %v697 = vsub.f32 1.0, %v696
    %v698 = vmul.f32 %v695, %v697
    %v699 = vadd.f32 %v695, %v698
    %vm700 = vweird.f32 %v692
    %vm701 = vweird.f32 %v695
    %vm702 = vmor %vm700, %vm701
    %v703 = vsel %vm702, %v695, %v699
    %v704 = vand.u32 2147483647, %v692
    %vm705 = vcmp.eq.f32.partialorder %v704, 8.507059e+37
    %v706 = vand.u32 %v692, 2147483648
    %v707 = vor.u32 1.1754944e-38, %v706
    %v708 = vsel %vm705, %v707, %v703
    %v709 = vmul.f32 1.0, %v708
    %v710 = vrcp.pop %v693
    %v711 = vmul.f32 %v693, %v710
    %v712 = vsub.f32 1.0, %v711
    %v713 = vmul.f32 %v710, %v712
    %v714 = vadd.f32 %v710, %v713
    %vm715 = vweird.f32 %v693
    %vm716 = vweird.f32 %v710
    %vm717 = vmor %vm715, %vm716
    %v718 = vsel %vm717, %v710, %v714
    %v719 = vand.u32 2147483647, %v693
    %vm720 = vcmp.eq.f32.partialorder %v719, 8.507059e+37
    %v721 = vand.u32 %v693, 2147483648
    %v722 = vor.u32 1.1754944e-38, %v721
    %v723 = vsel %vm720, %v722, %v718
    %v724 = vmul.f32 1.0, %v723
    %v725 = vrcp.pop %v694
    %v726 = vmul.f32 %v694, %v725
    %v727 = vsub.f32 1.0, %v726
    %v728 = vmul.f32 %v725, %v727
    %v729 = vadd.f32 %v725, %v728
    %vm730 = vweird.f32 %v694
    %vm731 = vweird.f32 %v725
    %vm732 = vmor %vm730, %vm731
    %v733 = vsel %vm732, %v725, %v729
    %v734 = vand.u32 2147483647, %v694
    %vm735 = vcmp.eq.f32.partialorder %v734, 8.507059e+37
    %v736 = vand.u32 %v694, 2147483648
    %v737 = vor.u32 1.1754944e-38, %v736
    %v738 = vsel %vm735, %v737, %v733
    %v739 = vmul.f32 1.0, %v738
    %v740 = vtanh.pop %v682
    %v741 = vmul.f32 %v724, %v598
    %v742 = vmul.f32 %v709, %v740
    %v743 = vadd.f32 %v741, %v742
    %v744 = vtanh.pop %v743
    %v745 = vmul.f32 %v739, %v744
    %746 = vst [vmem:[#allocation2] sm:$0xff] %v745
    %747 = vmatpush.msra.mxu0 %v593
    %748 = vmatpush.msra.mxu0 %v589
    %749 = vmatpush.msra.mxu0 %v585
    %750 = vmatpush.msra.mxu0 %v581
    %751 = vmatpush.msra.mxu0 %v577
    %752 = vmatpush.msra.mxu0 %v573
    %753 = vmatpush.msra.mxu0 %v569
    %754 = vmatpush.msra.mxu0 %v565
    %755 = vmatpush.msra.mxu0 %v561
    %756 = vmatpush.msra.mxu0 %v557
    %757 = vmatpush.msra.mxu0 %v553
    %758 = vmatpush.msra.mxu0 %v549
    %759 = vmatpush.msra.mxu0 %v545
    %760 = vmatpush.msra.mxu0 %v541
    %761 = vmatpush.msra.mxu0 %v537
    %762 = vmatpush.msra.mxu0 %v533
    %763 = vmatmul.f32.gmra.mxu0 %v745
    %v764 = vpop.f32.mrf.mxu0
    %v765 = vadd.f32 0.0, %v764
    %766 = vdwg.mxu0
    %767 = vmatpush.msra.mxu0 %v594
    %768 = vmatpush.msra.mxu0 %v590
    %769 = vmatpush.msra.mxu0 %v586
    %770 = vmatpush.msra.mxu0 %v582
    %771 = vmatpush.msra.mxu0 %v578
    %772 = vmatpush.msra.mxu0 %v574
    %773 = vmatpush.msra.mxu0 %v570
    %774 = vmatpush.msra.mxu0 %v566
    %775 = vmatpush.msra.mxu0 %v562
    %776 = vmatpush.msra.mxu0 %v558
    %777 = vmatpush.msra.mxu0 %v554
    %778 = vmatpush.msra.mxu0 %v550
    %779 = vmatpush.msra.mxu0 %v546
    %780 = vmatpush.msra.mxu0 %v542
    %781 = vmatpush.msra.mxu0 %v538
    %782 = vmatpush.msra.mxu0 %v534
    %783 = vmatmul.f32.gmra.mxu0 %v745
    %v784 = vpop.f32.mrf.mxu0
    %v785 = vadd.f32 0.0, %v784
    %786 = vdwg.mxu0
    %787 = vmatpush.msra.mxu0 %v595
    %788 = vmatpush.msra.mxu0 %v591
    %789 = vmatpush.msra.mxu0 %v587
    %790 = vmatpush.msra.mxu0 %v583
    %791 = vmatpush.msra.mxu0 %v579
    %792 = vmatpush.msra.mxu0 %v575
    %793 = vmatpush.msra.mxu0 %v571
    %794 = vmatpush.msra.mxu0 %v567
    %795 = vmatpush.msra.mxu0 %v563
    %796 = vmatpush.msra.mxu0 %v559
    %797 = vmatpush.msra.mxu0 %v555
    %798 = vmatpush.msra.mxu0 %v551
    %799 = vmatpush.msra.mxu0 %v547
    %800 = vmatpush.msra.mxu0 %v543
    %801 = vmatpush.msra.mxu0 %v539
    %802 = vmatpush.msra.mxu0 %v535
    %803 = vmatmul.f32.gmra.mxu0 %v745
    %v804 = vpop.f32.mrf.mxu0
    %v805 = vadd.f32 0.0, %v804
    %806 = vdwg.mxu0
    %807 = vmatpush.msra.mxu0 %v596
    %808 = vmatpush.msra.mxu0 %v592
    %809 = vmatpush.msra.mxu0 %v588
    %810 = vmatpush.msra.mxu0 %v584
    %811 = vmatpush.msra.mxu0 %v580
    %812 = vmatpush.msra.mxu0 %v576
    %813 = vmatpush.msra.mxu0 %v572
    %814 = vmatpush.msra.mxu0 %v568
    %815 = vmatpush.msra.mxu0 %v564
    %816 = vmatpush.msra.mxu0 %v560
    %817 = vmatpush.msra.mxu0 %v556
    %818 = vmatpush.msra.mxu0 %v552
    %819 = vmatpush.msra.mxu0 %v548
    %820 = vmatpush.msra.mxu0 %v544
    %821 = vmatpush.msra.mxu0 %v540
    %822 = vmatpush.msra.mxu0 %v536
    %823 = vmatmul.f32.gmra.mxu0 %v745
    %v824 = vpop.f32.mrf.mxu0
    %v825 = vadd.f32 0.0, %v824
    %826 = vdwg.mxu0
    %v827 = vadd.f32 %v390, %v765
    %v828 = vadd.f32 %v431, %v785
    %v829 = vadd.f32 %v472, %v805
    %v830 = vadd.f32 %v513, %v825
    %v831 = vxor.u32 %v827, 2147483648
    %v832 = vxor.u32 %v828, 2147483648
    %v833 = vxor.u32 %v829, 2147483648
    %v834 = vmul.f32 %v831, 1.442695
    %v835 = vpow.pop %v834
    %v836 = vmul.f32 %v832, 1.442695
    %v837 = vpow.pop %v836
    %v838 = vmul.f32 %v833, 1.442695
    %v839 = vpow.pop %v838
    %v840 = vadd.f32 %v835, 1.0
    %v841 = vadd.f32 %v837, 1.0
    %v842 = vadd.f32 %v839, 1.0
    %v843 = vrcp.pop %v840
    %v844 = vmul.f32 %v840, %v843
    %v845 = vsub.f32 1.0, %v844
    %v846 = vmul.f32 %v843, %v845
    %v847 = vadd.f32 %v843, %v846
    %vm848 = vweird.f32 %v840
    %vm849 = vweird.f32 %v843
    %vm850 = vmor %vm848, %vm849
    %v851 = vsel %vm850, %v843, %v847
    %v852 = vand.u32 2147483647, %v840
    %vm853 = vcmp.eq.f32.partialorder %v852, 8.507059e+37
    %v854 = vand.u32 %v840, 2147483648
    %v855 = vor.u32 1.1754944e-38, %v854
    %v856 = vsel %vm853, %v855, %v851
    %v857 = vmul.f32 1.0, %v856
    %v858 = vrcp.pop %v841
    %v859 = vmul.f32 %v841, %v858
    %v860 = vsub.f32 1.0, %v859
    %v861 = vmul.f32 %v858, %v860
    %v862 = vadd.f32 %v858, %v861
    %vm863 = vweird.f32 %v841
    %vm864 = vweird.f32 %v858
    %vm865 = vmor %vm863, %vm864
    %v866 = vsel %vm865, %v858, %v862
    %v867 = vand.u32 2147483647, %v841
    %vm868 = vcmp.eq.f32.partialorder %v867, 8.507059e+37
    %v869 = vand.u32 %v841, 2147483648
    %v870 = vor.u32 1.1754944e-38, %v869
    %v871 = vsel %vm868, %v870, %v866
    %v872 = vmul.f32 1.0, %v871
    %v873 = vrcp.pop %v842
    %v874 = vmul.f32 %v842, %v873
    %v875 = vsub.f32 1.0, %v874
    %v876 = vmul.f32 %v873, %v875
    %v877 = vadd.f32 %v873, %v876
    %vm878 = vweird.f32 %v842
    %vm879 = vweird.f32 %v873
    %vm880 = vmor %vm878, %vm879
    %v881 = vsel %vm880, %v873, %v877
    %v882 = vand.u32 2147483647, %v842
    %vm883 = vcmp.eq.f32.partialorder %v882, 8.507059e+37
    %v884 = vand.u32 %v842, 2147483648
    %v885 = vor.u32 1.1754944e-38, %v884
    %v886 = vsel %vm883, %v885, %v881
    %v887 = vmul.f32 1.0, %v886
    %v888 = vtanh.pop %v830
    %v889 = vmul.f32 %v872, %v743
    %v890 = vmul.f32 %v857, %v888
    %v891 = vadd.f32 %v889, %v890
    %v892 = vtanh.pop %v891
    %v893 = vmul.f32 %v887, %v892
    %894 = vst [vmem:[#allocation2 + $0x8] sm:$0xff] %v893
    %895 = vmatpush.msra.mxu0 %v593
    %896 = vmatpush.msra.mxu0 %v589
    %897 = vmatpush.msra.mxu0 %v585
    %898 = vmatpush.msra.mxu0 %v581
    %899 = vmatpush.msra.mxu0 %v577
    %900 = vmatpush.msra.mxu0 %v573
    %901 = vmatpush.msra.mxu0 %v569
    %902 = vmatpush.msra.mxu0 %v565
    %903 = vmatpush.msra.mxu0 %v561
    %904 = vmatpush.msra.mxu0 %v557
    %905 = vmatpush.msra.mxu0 %v553
    %906 = vmatpush.msra.mxu0 %v549
    %907 = vmatpush.msra.mxu0 %v545
    %908 = vmatpush.msra.mxu0 %v541
    %909 = vmatpush.msra.mxu0 %v537
    %910 = vmatpush.msra.mxu0 %v533
    %911 = vmatmul.f32.gmra.mxu0 %v893
    %v912 = vpop.f32.mrf.mxu0
    %v913 = vadd.f32 0.0, %v912
    %914 = vdwg.mxu0
    %915 = vmatpush.msra.mxu0 %v594
    %916 = vmatpush.msra.mxu0 %v590
    %917 = vmatpush.msra.mxu0 %v586
    %918 = vmatpush.msra.mxu0 %v582
    %919 = vmatpush.msra.mxu0 %v578
    %920 = vmatpush.msra.mxu0 %v574
    %921 = vmatpush.msra.mxu0 %v570
    %922 = vmatpush.msra.mxu0 %v566
    %923 = vmatpush.msra.mxu0 %v562
    %924 = vmatpush.msra.mxu0 %v558
    %925 = vmatpush.msra.mxu0 %v554
    %926 = vmatpush.msra.mxu0 %v550
    %927 = vmatpush.msra.mxu0 %v546
    %928 = vmatpush.msra.mxu0 %v542
    %929 = vmatpush.msra.mxu0 %v538
    %930 = vmatpush.msra.mxu0 %v534
    %931 = vmatmul.f32.gmra.mxu0 %v893
    %v932 = vpop.f32.mrf.mxu0
    %v933 = vadd.f32 0.0, %v932
    %934 = vdwg.mxu0
    %935 = vmatpush.msra.mxu0 %v595
    %936 = vmatpush.msra.mxu0 %v591
    %937 = vmatpush.msra.mxu0 %v587
    %938 = vmatpush.msra.mxu0 %v583
    %939 = vmatpush.msra.mxu0 %v579
    %940 = vmatpush.msra.mxu0 %v575
    %941 = vmatpush.msra.mxu0 %v571
    %942 = vmatpush.msra.mxu0 %v567
    %943 = vmatpush.msra.mxu0 %v563
    %944 = vmatpush.msra.mxu0 %v559
    %945 = vmatpush.msra.mxu0 %v555
    %946 = vmatpush.msra.mxu0 %v551
    %947 = vmatpush.msra.mxu0 %v547
    %948 = vmatpush.msra.mxu0 %v543
    %949 = vmatpush.msra.mxu0 %v539
    %950 = vmatpush.msra.mxu0 %v535
    %951 = vmatmul.f32.gmra.mxu0 %v893
    %v952 = vpop.f32.mrf.mxu0
    %v953 = vadd.f32 0.0, %v952
    %954 = vdwg.mxu0
    %955 = vmatpush.msra.mxu0 %v596
    %956 = vmatpush.msra.mxu0 %v592
    %957 = vmatpush.msra.mxu0 %v588
    %958 = vmatpush.msra.mxu0 %v584
    %959 = vmatpush.msra.mxu0 %v580
    %960 = vmatpush.msra.mxu0 %v576
    %961 = vmatpush.msra.mxu0 %v572
    %962 = vmatpush.msra.mxu0 %v568
    %963 = vmatpush.msra.mxu0 %v564
    %964 = vmatpush.msra.mxu0 %v560
    %965 = vmatpush.msra.mxu0 %v556
    %966 = vmatpush.msra.mxu0 %v552
    %967 = vmatpush.msra.mxu0 %v548
    %968 = vmatpush.msra.mxu0 %v544
    %969 = vmatpush.msra.mxu0 %v540
    %970 = vmatpush.msra.mxu0 %v536
    %971 = vmatmul.f32.gmra.mxu0 %v893
    %v972 = vpop.f32.mrf.mxu0
    %v973 = vadd.f32 0.0, %v972
    %974 = vdwg.mxu0
    %v975 = vadd.f32 %v393, %v913
    %v976 = vadd.f32 %v434, %v933
    %v977 = vadd.f32 %v475, %v953
    %v978 = vadd.f32 %v516, %v973
    %v979 = vxor.u32 %v975, 2147483648
    %v980 = vxor.u32 %v976, 2147483648
    %v981 = vxor.u32 %v977, 2147483648
    %v982 = vmul.f32 %v979, 1.442695
    %v983 = vpow.pop %v982
    %v984 = vmul.f32 %v980, 1.442695
    %v985 = vpow.pop %v984
    %v986 = vmul.f32 %v981, 1.442695
    %v987 = vpow.pop %v986
    %v988 = vadd.f32 %v983, 1.0
    %v989 = vadd.f32 %v985, 1.0
    %v990 = vadd.f32 %v987, 1.0
    %v991 = vrcp.pop %v988
    %v992 = vmul.f32 %v988, %v991
    %v993 = vsub.f32 1.0, %v992
    %v994 = vmul.f32 %v991, %v993
    %v995 = vadd.f32 %v991, %v994
    %vm996 = vweird.f32 %v988
    %vm997 = vweird.f32 %v991
    %vm998 = vmor %vm996, %vm997
    %v999 = vsel %vm998, %v991, %v995
    %v1000 = vand.u32 2147483647, %v988
    %vm1001 = vcmp.eq.f32.partialorder %v1000, 8.507059e+37
    %v1002 = vand.u32 %v988, 2147483648
    %v1003 = vor.u32 1.1754944e-38, %v1002
    %v1004 = vsel %vm1001, %v1003, %v999
    %v1005 = vmul.f32 1.0, %v1004
    %v1006 = vrcp.pop %v989
    %v1007 = vmul.f32 %v989, %v1006
    %v1008 = vsub.f32 1.0, %v1007
    %v1009 = vmul.f32 %v1006, %v1008
    %v1010 = vadd.f32 %v1006, %v1009
    %vm1011 = vweird.f32 %v989
    %vm1012 = vweird.f32 %v1006
    %vm1013 = vmor %vm1011, %vm1012
    %v1014 = vsel %vm1013, %v1006, %v1010
    %v1015 = vand.u32 2147483647, %v989
    %vm1016 = vcmp.eq.f32.partialorder %v1015, 8.507059e+37
    %v1017 = vand.u32 %v989, 2147483648
    %v1018 = vor.u32 1.1754944e-38, %v1017
    %v1019 = vsel %vm1016, %v1018, %v1014
    %v1020 = vmul.f32 1.0, %v1019
    %v1021 = vrcp.pop %v990
    %v1022 = vmul.f32 %v990, %v1021
    %v1023 = vsub.f32 1.0, %v1022
    %v1024 = vmul.f32 %v1021, %v1023
    %v1025 = vadd.f32 %v1021, %v1024
    %vm1026 = vweird.f32 %v990
    %vm1027 = vweird.f32 %v1021
    %vm1028 = vmor %vm1026, %vm1027
    %v1029 = vsel %vm1028, %v1021, %v1025
    %v1030 = vand.u32 2147483647, %v990
    %vm1031 = vcmp.eq.f32.partialorder %v1030, 8.507059e+37
    %v1032 = vand.u32 %v990, 2147483648
    %v1033 = vor.u32 1.1754944e-38, %v1032
    %v1034 = vsel %vm1031, %v1033, %v1029
    %v1035 = vmul.f32 1.0, %v1034
    %v1036 = vtanh.pop %v978
    %v1037 = vmul.f32 %v1020, %v891
    %v1038 = vmul.f32 %v1005, %v1036
    %v1039 = vadd.f32 %v1037, %v1038
    %v1040 = vtanh.pop %v1039
    %v1041 = vmul.f32 %v1035, %v1040
    %1042 = vst [vmem:[#allocation2 + $0x10] sm:$0xff] %v1041
    %1043 = vmatpush.msra.mxu0 %v593
    %1044 = vmatpush.msra.mxu0 %v589
    %1045 = vmatpush.msra.mxu0 %v585
    %1046 = vmatpush.msra.mxu0 %v581
    %1047 = vmatpush.msra.mxu0 %v577
    %1048 = vmatpush.msra.mxu0 %v573
    %1049 = vmatpush.msra.mxu0 %v569
    %1050 = vmatpush.msra.mxu0 %v565
    %1051 = vmatpush.msra.mxu0 %v561
    %1052 = vmatpush.msra.mxu0 %v557
    %1053 = vmatpush.msra.mxu0 %v553
    %1054 = vmatpush.msra.mxu0 %v549
    %1055 = vmatpush.msra.mxu0 %v545
    %1056 = vmatpush.msra.mxu0 %v541
    %1057 = vmatpush.msra.mxu0 %v537
    %1058 = vmatpush.msra.mxu0 %v533
    %1059 = vmatmul.f32.gmra.mxu0 %v1041
    %v1060 = vpop.f32.mrf.mxu0
    %v1061 = vadd.f32 0.0, %v1060
    %1062 = vdwg.mxu0
    %1063 = vmatpush.msra.mxu0 %v594
    %1064 = vmatpush.msra.mxu0 %v590
    %1065 = vmatpush.msra.mxu0 %v586
    %1066 = vmatpush.msra.mxu0 %v582
    %1067 = vmatpush.msra.mxu0 %v578
    %1068 = vmatpush.msra.mxu0 %v574
    %1069 = vmatpush.msra.mxu0 %v570
    %1070 = vmatpush.msra.mxu0 %v566
    %1071 = vmatpush.msra.mxu0 %v562
    %1072 = vmatpush.msra.mxu0 %v558
    %1073 = vmatpush.msra.mxu0 %v554
    %1074 = vmatpush.msra.mxu0 %v550
    %1075 = vmatpush.msra.mxu0 %v546
    %1076 = vmatpush.msra.mxu0 %v542
    %1077 = vmatpush.msra.mxu0 %v538
    %1078 = vmatpush.msra.mxu0 %v534
    %1079 = vmatmul.f32.gmra.mxu0 %v1041
    %v1080 = vpop.f32.mrf.mxu0
    %v1081 = vadd.f32 0.0, %v1080
    %1082 = vdwg.mxu0
    %1083 = vmatpush.msra.mxu0 %v595
    %1084 = vmatpush.msra.mxu0 %v591
    %1085 = vmatpush.msra.mxu0 %v587
    %1086 = vmatpush.msra.mxu0 %v583
    %1087 = vmatpush.msra.mxu0 %v579
    %1088 = vmatpush.msra.mxu0 %v575
    %1089 = vmatpush.msra.mxu0 %v571
    %1090 = vmatpush.msra.mxu0 %v567
    %1091 = vmatpush.msra.mxu0 %v563
    %1092 = vmatpush.msra.mxu0 %v559
    %1093 = vmatpush.msra.mxu0 %v555
    %1094 = vmatpush.msra.mxu0 %v551
    %1095 = vmatpush.msra.mxu0 %v547
    %1096 = vmatpush.msra.mxu0 %v543
    %1097 = vmatpush.msra.mxu0 %v539
    %1098 = vmatpush.msra.mxu0 %v535
    %1099 = vmatmul.f32.gmra.mxu0 %v1041
    %v1100 = vpop.f32.mrf.mxu0
    %v1101 = vadd.f32 0.0, %v1100
    %1102 = vdwg.mxu0
    %1103 = vmatpush.msra.mxu0 %v596
    %1104 = vmatpush.msra.mxu0 %v592
    %1105 = vmatpush.msra.mxu0 %v588
    %1106 = vmatpush.msra.mxu0 %v584
    %1107 = vmatpush.msra.mxu0 %v580
    %1108 = vmatpush.msra.mxu0 %v576
    %1109 = vmatpush.msra.mxu0 %v572
    %1110 = vmatpush.msra.mxu0 %v568
    %1111 = vmatpush.msra.mxu0 %v564
    %1112 = vmatpush.msra.mxu0 %v560
    %1113 = vmatpush.msra.mxu0 %v556
    %1114 = vmatpush.msra.mxu0 %v552
    %1115 = vmatpush.msra.mxu0 %v548
    %1116 = vmatpush.msra.mxu0 %v544
    %1117 = vmatpush.msra.mxu0 %v540
    %1118 = vmatpush.msra.mxu0 %v536
    %1119 = vmatmul.f32.gmra.mxu0 %v1041
    %v1120 = vpop.f32.mrf.mxu0
    %v1121 = vadd.f32 0.0, %v1120
    %1122 = vdwg.mxu0
    %v1123 = vadd.f32 %v396, %v1061
    %v1124 = vadd.f32 %v437, %v1081
    %v1125 = vadd.f32 %v478, %v1101
    %v1126 = vadd.f32 %v519, %v1121
    %v1127 = vxor.u32 %v1123, 2147483648
    %v1128 = vxor.u32 %v1124, 2147483648
    %v1129 = vxor.u32 %v1125, 2147483648
    %v1130 = vmul.f32 %v1127, 1.442695
    %v1131 = vpow.pop %v1130
    %v1132 = vmul.f32 %v1128, 1.442695
    %v1133 = vpow.pop %v1132
    %v1134 = vmul.f32 %v1129, 1.442695
    %v1135 = vpow.pop %v1134
    %v1136 = vadd.f32 %v1131, 1.0
    %v1137 = vadd.f32 %v1133, 1.0
    %v1138 = vadd.f32 %v1135, 1.0
    %v1139 = vrcp.pop %v1136
    %v1140 = vmul.f32 %v1136, %v1139
    %v1141 = vsub.f32 1.0, %v1140
    %v1142 = vmul.f32 %v1139, %v1141
    %v1143 = vadd.f32 %v1139, %v1142
    %vm1144 = vweird.f32 %v1136
    %vm1145 = vweird.f32 %v1139
    %vm1146 = vmor %vm1144, %vm1145
    %v1147 = vsel %vm1146, %v1139, %v1143
    %v1148 = vand.u32 2147483647, %v1136
    %vm1149 = vcmp.eq.f32.partialorder %v1148, 8.507059e+37
    %v1150 = vand.u32 %v1136, 2147483648
    %v1151 = vor.u32 1.1754944e-38, %v1150
    %v1152 = vsel %vm1149, %v1151, %v1147
    %v1153 = vmul.f32 1.0, %v1152
    %v1154 = vrcp.pop %v1137
    %v1155 = vmul.f32 %v1137, %v1154
    %v1156 = vsub.f32 1.0, %v1155
    %v1157 = vmul.f32 %v1154, %v1156
    %v1158 = vadd.f32 %v1154, %v1157
    %vm1159 = vweird.f32 %v1137
    %vm1160 = vweird.f32 %v1154
    %vm1161 = vmor %vm1159, %vm1160
    %v1162 = vsel %vm1161, %v1154, %v1158
    %v1163 = vand.u32 2147483647, %v1137
    %vm1164 = vcmp.eq.f32.partialorder %v1163, 8.507059e+37
    %v1165 = vand.u32 %v1137, 2147483648
    %v1166 = vor.u32 1.1754944e-38, %v1165
    %v1167 = vsel %vm1164, %v1166, %v1162
    %v1168 = vmul.f32 1.0, %v1167
    %v1169 = vrcp.pop %v1138
    %v1170 = vmul.f32 %v1138, %v1169
    %v1171 = vsub.f32 1.0, %v1170
    %v1172 = vmul.f32 %v1169, %v1171
    %v1173 = vadd.f32 %v1169, %v1172
    %vm1174 = vweird.f32 %v1138
    %vm1175 = vweird.f32 %v1169
    %vm1176 = vmor %vm1174, %vm1175
    %v1177 = vsel %vm1176, %v1169, %v1173
    %v1178 = vand.u32 2147483647, %v1138
    %vm1179 = vcmp.eq.f32.partialorder %v1178, 8.507059e+37
    %v1180 = vand.u32 %v1138, 2147483648
    %v1181 = vor.u32 1.1754944e-38, %v1180
    %v1182 = vsel %vm1179, %v1181, %v1177
    %v1183 = vmul.f32 1.0, %v1182
    %v1184 = vtanh.pop %v1126
    %v1185 = vmul.f32 %v1168, %v1039
    %v1186 = vmul.f32 %v1153, %v1184
    %v1187 = vadd.f32 %v1185, %v1186
    %v1188 = vtanh.pop %v1187
    %v1189 = vmul.f32 %v1183, %v1188
    %1190 = vst [vmem:[#allocation2 + $0x18] sm:$0xff] %v1189
    %1191 = vmatpush.msra.mxu0 %v593
    %1192 = vmatpush.msra.mxu0 %v589
    %1193 = vmatpush.msra.mxu0 %v585
    %1194 = vmatpush.msra.mxu0 %v581
    %1195 = vmatpush.msra.mxu0 %v577
    %1196 = vmatpush.msra.mxu0 %v573
    %1197 = vmatpush.msra.mxu0 %v569
    %1198 = vmatpush.msra.mxu0 %v565
    %1199 = vmatpush.msra.mxu0 %v561
    %1200 = vmatpush.msra.mxu0 %v557
    %1201 = vmatpush.msra.mxu0 %v553
    %1202 = vmatpush.msra.mxu0 %v549
    %1203 = vmatpush.msra.mxu0 %v545
    %1204 = vmatpush.msra.mxu0 %v541
    %1205 = vmatpush.msra.mxu0 %v537
    %1206 = vmatpush.msra.mxu0 %v533
    %1207 = vmatmul.f32.gmra.mxu0 %v1189
    %v1208 = vpop.f32.mrf.mxu0
    %v1209 = vadd.f32 0.0, %v1208
    %1210 = vdwg.mxu0
    %1211 = vmatpush.msra.mxu0 %v594
    %1212 = vmatpush.msra.mxu0 %v590
    %1213 = vmatpush.msra.mxu0 %v586
    %1214 = vmatpush.msra.mxu0 %v582
    %1215 = vmatpush.msra.mxu0 %v578
    %1216 = vmatpush.msra.mxu0 %v574
    %1217 = vmatpush.msra.mxu0 %v570
    %1218 = vmatpush.msra.mxu0 %v566
    %1219 = vmatpush.msra.mxu0 %v562
    %1220 = vmatpush.msra.mxu0 %v558
    %1221 = vmatpush.msra.mxu0 %v554
    %1222 = vmatpush.msra.mxu0 %v550
    %1223 = vmatpush.msra.mxu0 %v546
    %1224 = vmatpush.msra.mxu0 %v542
    %1225 = vmatpush.msra.mxu0 %v538
    %1226 = vmatpush.msra.mxu0 %v534
    %1227 = vmatmul.f32.gmra.mxu0 %v1189
    %v1228 = vpop.f32.mrf.mxu0
    %v1229 = vadd.f32 0.0, %v1228
    %1230 = vdwg.mxu0
    %1231 = vmatpush.msra.mxu0 %v595
    %1232 = vmatpush.msra.mxu0 %v591
    %1233 = vmatpush.msra.mxu0 %v587
    %1234 = vmatpush.msra.mxu0 %v583
    %1235 = vmatpush.msra.mxu0 %v579
    %1236 = vmatpush.msra.mxu0 %v575
    %1237 = vmatpush.msra.mxu0 %v571
    %1238 = vmatpush.msra.mxu0 %v567
    %1239 = vmatpush.msra.mxu0 %v563
    %1240 = vmatpush.msra.mxu0 %v559
    %1241 = vmatpush.msra.mxu0 %v555
    %1242 = vmatpush.msra.mxu0 %v551
    %1243 = vmatpush.msra.mxu0 %v547
    %1244 = vmatpush.msra.mxu0 %v543
    %1245 = vmatpush.msra.mxu0 %v539
    %1246 = vmatpush.msra.mxu0 %v535
    %1247 = vmatmul.f32.gmra.mxu0 %v1189
    %v1248 = vpop.f32.mrf.mxu0
    %v1249 = vadd.f32 0.0, %v1248
    %1250 = vdwg.mxu0
    %1251 = vmatpush.msra.mxu0 %v596
    %1252 = vmatpush.msra.mxu0 %v592
    %1253 = vmatpush.msra.mxu0 %v588
    %1254 = vmatpush.msra.mxu0 %v584
    %1255 = vmatpush.msra.mxu0 %v580
    %1256 = vmatpush.msra.mxu0 %v576
    %1257 = vmatpush.msra.mxu0 %v572
    %1258 = vmatpush.msra.mxu0 %v568
    %1259 = vmatpush.msra.mxu0 %v564
    %1260 = vmatpush.msra.mxu0 %v560
    %1261 = vmatpush.msra.mxu0 %v556
    %1262 = vmatpush.msra.mxu0 %v552
    %1263 = vmatpush.msra.mxu0 %v548
    %1264 = vmatpush.msra.mxu0 %v544
    %1265 = vmatpush.msra.mxu0 %v540
    %1266 = vmatpush.msra.mxu0 %v536
    %1267 = vmatmul.f32.gmra.mxu0 %v1189
    %v1268 = vpop.f32.mrf.mxu0
    %v1269 = vadd.f32 0.0, %v1268
    %1270 = vdwg.mxu0
    %v1271 = vadd.f32 %v399, %v1209
    %v1272 = vadd.f32 %v440, %v1229
    %v1273 = vadd.f32 %v481, %v1249
    %v1274 = vadd.f32 %v522, %v1269
    %v1275 = vxor.u32 %v1271, 2147483648
    %v1276 = vxor.u32 %v1272, 2147483648
    %v1277 = vxor.u32 %v1273, 2147483648
    %v1278 = vmul.f32 %v1275, 1.442695
    %v1279 = vpow.pop %v1278
    %v1280 = vmul.f32 %v1276, 1.442695
    %v1281 = vpow.pop %v1280
    %v1282 = vmul.f32 %v1277, 1.442695
    %v1283 = vpow.pop %v1282
    %v1284 = vadd.f32 %v1279, 1.0
    %v1285 = vadd.f32 %v1281, 1.0
    %v1286 = vadd.f32 %v1283, 1.0
    %v1287 = vrcp.pop %v1284
    %v1288 = vmul.f32 %v1284, %v1287
    %v1289 = vsub.f32 1.0, %v1288
    %v1290 = vmul.f32 %v1287, %v1289
    %v1291 = vadd.f32 %v1287, %v1290
    %vm1292 = vweird.f32 %v1284
    %vm1293 = vweird.f32 %v1287
    %vm1294 = vmor %vm1292, %vm1293
    %v1295 = vsel %vm1294, %v1287, %v1291
    %v1296 = vand.u32 2147483647, %v1284
    %vm1297 = vcmp.eq.f32.partialorder %v1296, 8.507059e+37
    %v1298 = vand.u32 %v1284, 2147483648
    %v1299 = vor.u32 1.1754944e-38, %v1298
    %v1300 = vsel %vm1297, %v1299, %v1295
    %v1301 = vmul.f32 1.0, %v1300
    %v1302 = vrcp.pop %v1285
    %v1303 = vmul.f32 %v1285, %v1302
    %v1304 = vsub.f32 1.0, %v1303
    %v1305 = vmul.f32 %v1302, %v1304
    %v1306 = vadd.f32 %v1302, %v1305
    %vm1307 = vweird.f32 %v1285
    %vm1308 = vweird.f32 %v1302
    %vm1309 = vmor %vm1307, %vm1308
    %v1310 = vsel %vm1309, %v1302, %v1306
    %v1311 = vand.u32 2147483647, %v1285
    %vm1312 = vcmp.eq.f32.partialorder %v1311, 8.507059e+37
    %v1313 = vand.u32 %v1285, 2147483648
    %v1314 = vor.u32 1.1754944e-38, %v1313
    %v1315 = vsel %vm1312, %v1314, %v1310
    %v1316 = vmul.f32 1.0, %v1315
    %v1317 = vrcp.pop %v1286
    %v1318 = vmul.f32 %v1286, %v1317
    %v1319 = vsub.f32 1.0, %v1318
    %v1320 = vmul.f32 %v1317, %v1319
    %v1321 = vadd.f32 %v1317, %v1320
    %vm1322 = vweird.f32 %v1286
    %vm1323 = vweird.f32 %v1317
    %vm1324 = vmor %vm1322, %vm1323
    %v1325 = vsel %vm1324, %v1317, %v1321
    %v1326 = vand.u32 2147483647, %v1286
    %vm1327 = vcmp.eq.f32.partialorder %v1326, 8.507059e+37
    %v1328 = vand.u32 %v1286, 2147483648
    %v1329 = vor.u32 1.1754944e-38, %v1328
    %v1330 = vsel %vm1327, %v1329, %v1325
    %v1331 = vmul.f32 1.0, %v1330
    %v1332 = vtanh.pop %v1274
    %v1333 = vmul.f32 %v1316, %v1187
    %v1334 = vmul.f32 %v1301, %v1332
    %v1335 = vadd.f32 %v1333, %v1334
    %v1336 = vtanh.pop %v1335
    %v1337 = vmul.f32 %v1331, %v1336
    %1338 = vst [vmem:[#allocation2 + $0x20] sm:$0xff] %v1337
    %1339 = vmatpush.msra.mxu0 %v593
    %1340 = vmatpush.msra.mxu0 %v589
    %1341 = vmatpush.msra.mxu0 %v585
    %1342 = vmatpush.msra.mxu0 %v581
    %1343 = vmatpush.msra.mxu0 %v577
    %1344 = vmatpush.msra.mxu0 %v573
    %1345 = vmatpush.msra.mxu0 %v569
    %1346 = vmatpush.msra.mxu0 %v565
    %1347 = vmatpush.msra.mxu0 %v561
    %1348 = vmatpush.msra.mxu0 %v557
    %1349 = vmatpush.msra.mxu0 %v553
    %1350 = vmatpush.msra.mxu0 %v549
    %1351 = vmatpush.msra.mxu0 %v545
    %1352 = vmatpush.msra.mxu0 %v541
    %1353 = vmatpush.msra.mxu0 %v537
    %1354 = vmatpush.msra.mxu0 %v533
    %1355 = vmatmul.f32.gmra.mxu0 %v1337
    %v1356 = vpop.f32.mrf.mxu0
    %v1357 = vadd.f32 0.0, %v1356
    %1358 = vdwg.mxu0
    %1359 = vmatpush.msra.mxu0 %v594
    %1360 = vmatpush.msra.mxu0 %v590
    %1361 = vmatpush.msra.mxu0 %v586
    %1362 = vmatpush.msra.mxu0 %v582
    %1363 = vmatpush.msra.mxu0 %v578
    %1364 = vmatpush.msra.mxu0 %v574
    %1365 = vmatpush.msra.mxu0 %v570
    %1366 = vmatpush.msra.mxu0 %v566
    %1367 = vmatpush.msra.mxu0 %v562
    %1368 = vmatpush.msra.mxu0 %v558
    %1369 = vmatpush.msra.mxu0 %v554
    %1370 = vmatpush.msra.mxu0 %v550
    %1371 = vmatpush.msra.mxu0 %v546
    %1372 = vmatpush.msra.mxu0 %v542
    %1373 = vmatpush.msra.mxu0 %v538
    %1374 = vmatpush.msra.mxu0 %v534
    %1375 = vmatmul.f32.gmra.mxu0 %v1337
    %v1376 = vpop.f32.mrf.mxu0
    %v1377 = vadd.f32 0.0, %v1376
    %1378 = vdwg.mxu0
    %1379 = vmatpush.msra.mxu0 %v595
    %1380 = vmatpush.msra.mxu0 %v591
    %1381 = vmatpush.msra.mxu0 %v587
    %1382 = vmatpush.msra.mxu0 %v583
    %1383 = vmatpush.msra.mxu0 %v579
    %1384 = vmatpush.msra.mxu0 %v575
    %1385 = vmatpush.msra.mxu0 %v571
    %1386 = vmatpush.msra.mxu0 %v567
    %1387 = vmatpush.msra.mxu0 %v563
    %1388 = vmatpush.msra.mxu0 %v559
    %1389 = vmatpush.msra.mxu0 %v555
    %1390 = vmatpush.msra.mxu0 %v551
    %1391 = vmatpush.msra.mxu0 %v547
    %1392 = vmatpush.msra.mxu0 %v543
    %1393 = vmatpush.msra.mxu0 %v539
    %1394 = vmatpush.msra.mxu0 %v535
    %1395 = vmatmul.f32.gmra.mxu0 %v1337
    %v1396 = vpop.f32.mrf.mxu0
    %v1397 = vadd.f32 0.0, %v1396
    %1398 = vdwg.mxu0
    %1399 = vmatpush.msra.mxu0 %v596
    %1400 = vmatpush.msra.mxu0 %v592
    %1401 = vmatpush.msra.mxu0 %v588
    %1402 = vmatpush.msra.mxu0 %v584
    %1403 = vmatpush.msra.mxu0 %v580
    %1404 = vmatpush.msra.mxu0 %v576
    %1405 = vmatpush.msra.mxu0 %v572
    %1406 = vmatpush.msra.mxu0 %v568
    %1407 = vmatpush.msra.mxu0 %v564
    %1408 = vmatpush.msra.mxu0 %v560
    %1409 = vmatpush.msra.mxu0 %v556
    %1410 = vmatpush.msra.mxu0 %v552
    %1411 = vmatpush.msra.mxu0 %v548
    %1412 = vmatpush.msra.mxu0 %v544
    %1413 = vmatpush.msra.mxu0 %v540
    %1414 = vmatpush.msra.mxu0 %v536
    %1415 = vmatmul.f32.gmra.mxu0 %v1337
    %v1416 = vpop.f32.mrf.mxu0
    %v1417 = vadd.f32 0.0, %v1416
    %1418 = vdwg.mxu0
    %v1419 = vadd.f32 %v402, %v1357
    %v1420 = vadd.f32 %v443, %v1377
    %v1421 = vadd.f32 %v484, %v1397
    %v1422 = vadd.f32 %v525, %v1417
    %v1423 = vxor.u32 %v1419, 2147483648
    %v1424 = vxor.u32 %v1420, 2147483648
    %v1425 = vxor.u32 %v1421, 2147483648
    %v1426 = vmul.f32 %v1423, 1.442695
    %v1427 = vpow.pop %v1426
    %v1428 = vmul.f32 %v1424, 1.442695
    %v1429 = vpow.pop %v1428
    %v1430 = vmul.f32 %v1425, 1.442695
    %v1431 = vpow.pop %v1430
    %v1432 = vadd.f32 %v1427, 1.0
    %v1433 = vadd.f32 %v1429, 1.0
    %v1434 = vadd.f32 %v1431, 1.0
    %v1435 = vrcp.pop %v1432
    %v1436 = vmul.f32 %v1432, %v1435
    %v1437 = vsub.f32 1.0, %v1436
    %v1438 = vmul.f32 %v1435, %v1437
    %v1439 = vadd.f32 %v1435, %v1438
    %vm1440 = vweird.f32 %v1432
    %vm1441 = vweird.f32 %v1435
    %vm1442 = vmor %vm1440, %vm1441
    %v1443 = vsel %vm1442, %v1435, %v1439
    %v1444 = vand.u32 2147483647, %v1432
    %vm1445 = vcmp.eq.f32.partialorder %v1444, 8.507059e+37
    %v1446 = vand.u32 %v1432, 2147483648
    %v1447 = vor.u32 1.1754944e-38, %v1446
    %v1448 = vsel %vm1445, %v1447, %v1443
    %v1449 = vmul.f32 1.0, %v1448
    %v1450 = vrcp.pop %v1433
    %v1451 = vmul.f32 %v1433, %v1450
    %v1452 = vsub.f32 1.0, %v1451
    %v1453 = vmul.f32 %v1450, %v1452
    %v1454 = vadd.f32 %v1450, %v1453
    %vm1455 = vweird.f32 %v1433
    %vm1456 = vweird.f32 %v1450
    %vm1457 = vmor %vm1455, %vm1456
    %v1458 = vsel %vm1457, %v1450, %v1454
    %v1459 = vand.u32 2147483647, %v1433
    %vm1460 = vcmp.eq.f32.partialorder %v1459, 8.507059e+37
    %v1461 = vand.u32 %v1433, 2147483648
    %v1462 = vor.u32 1.1754944e-38, %v1461
    %v1463 = vsel %vm1460, %v1462, %v1458
    %v1464 = vmul.f32 1.0, %v1463
    %v1465 = vrcp.pop %v1434
    %v1466 = vmul.f32 %v1434, %v1465
    %v1467 = vsub.f32 1.0, %v1466
    %v1468 = vmul.f32 %v1465, %v1467
    %v1469 = vadd.f32 %v1465, %v1468
    %vm1470 = vweird.f32 %v1434
    %vm1471 = vweird.f32 %v1465
    %vm1472 = vmor %vm1470, %vm1471
    %v1473 = vsel %vm1472, %v1465, %v1469
    %v1474 = vand.u32 2147483647, %v1434
    %vm1475 = vcmp.eq.f32.partialorder %v1474, 8.507059e+37
    %v1476 = vand.u32 %v1434, 2147483648
    %v1477 = vor.u32 1.1754944e-38, %v1476
    %v1478 = vsel %vm1475, %v1477, %v1473
    %v1479 = vmul.f32 1.0, %v1478
    %v1480 = vtanh.pop %v1422
    %v1481 = vmul.f32 %v1464, %v1335
    %v1482 = vmul.f32 %v1449, %v1480
    %v1483 = vadd.f32 %v1481, %v1482
    %v1484 = vtanh.pop %v1483
    %v1485 = vmul.f32 %v1479, %v1484
    %1486 = vst [vmem:[#allocation2 + $0x28] sm:$0xff] %v1485
    %1487 = vmatpush.msra.mxu0 %v593
    %1488 = vmatpush.msra.mxu0 %v589
    %1489 = vmatpush.msra.mxu0 %v585
    %1490 = vmatpush.msra.mxu0 %v581
    %1491 = vmatpush.msra.mxu0 %v577
    %1492 = vmatpush.msra.mxu0 %v573
    %1493 = vmatpush.msra.mxu0 %v569
    %1494 = vmatpush.msra.mxu0 %v565
    %1495 = vmatpush.msra.mxu0 %v561
    %1496 = vmatpush.msra.mxu0 %v557
    %1497 = vmatpush.msra.mxu0 %v553
    %1498 = vmatpush.msra.mxu0 %v549
    %1499 = vmatpush.msra.mxu0 %v545
    %1500 = vmatpush.msra.mxu0 %v541
    %1501 = vmatpush.msra.mxu0 %v537
    %1502 = vmatpush.msra.mxu0 %v533
    %1503 = vmatmul.f32.gmra.mxu0 %v1485
    %v1504 = vpop.f32.mrf.mxu0
    %v1505 = vadd.f32 0.0, %v1504
    %1506 = vdwg.mxu0
    %1507 = vmatpush.msra.mxu0 %v594
    %1508 = vmatpush.msra.mxu0 %v590
    %1509 = vmatpush.msra.mxu0 %v586
    %1510 = vmatpush.msra.mxu0 %v582
    %1511 = vmatpush.msra.mxu0 %v578
    %1512 = vmatpush.msra.mxu0 %v574
    %1513 = vmatpush.msra.mxu0 %v570
    %1514 = vmatpush.msra.mxu0 %v566
    %1515 = vmatpush.msra.mxu0 %v562
    %1516 = vmatpush.msra.mxu0 %v558
    %1517 = vmatpush.msra.mxu0 %v554
    %1518 = vmatpush.msra.mxu0 %v550
    %1519 = vmatpush.msra.mxu0 %v546
    %1520 = vmatpush.msra.mxu0 %v542
    %1521 = vmatpush.msra.mxu0 %v538
    %1522 = vmatpush.msra.mxu0 %v534
    %1523 = vmatmul.f32.gmra.mxu0 %v1485
    %v1524 = vpop.f32.mrf.mxu0
    %v1525 = vadd.f32 0.0, %v1524
    %1526 = vdwg.mxu0
    %1527 = vmatpush.msra.mxu0 %v595
    %1528 = vmatpush.msra.mxu0 %v591
    %1529 = vmatpush.msra.mxu0 %v587
    %1530 = vmatpush.msra.mxu0 %v583
    %1531 = vmatpush.msra.mxu0 %v579
    %1532 = vmatpush.msra.mxu0 %v575
    %1533 = vmatpush.msra.mxu0 %v571
    %1534 = vmatpush.msra.mxu0 %v567
    %1535 = vmatpush.msra.mxu0 %v563
    %1536 = vmatpush.msra.mxu0 %v559
    %1537 = vmatpush.msra.mxu0 %v555
    %1538 = vmatpush.msra.mxu0 %v551
    %1539 = vmatpush.msra.mxu0 %v547
    %1540 = vmatpush.msra.mxu0 %v543
    %1541 = vmatpush.msra.mxu0 %v539
    %1542 = vmatpush.msra.mxu0 %v535
    %1543 = vmatmul.f32.gmra.mxu0 %v1485
    %v1544 = vpop.f32.mrf.mxu0
    %v1545 = vadd.f32 0.0, %v1544
    %1546 = vdwg.mxu0
    %1547 = vmatpush.msra.mxu0 %v596
    %1548 = vmatpush.msra.mxu0 %v592
    %1549 = vmatpush.msra.mxu0 %v588
    %1550 = vmatpush.msra.mxu0 %v584
    %1551 = vmatpush.msra.mxu0 %v580
    %1552 = vmatpush.msra.mxu0 %v576
    %1553 = vmatpush.msra.mxu0 %v572
    %1554 = vmatpush.msra.mxu0 %v568
    %1555 = vmatpush.msra.mxu0 %v564
    %1556 = vmatpush.msra.mxu0 %v560
    %1557 = vmatpush.msra.mxu0 %v556
    %1558 = vmatpush.msra.mxu0 %v552
    %1559 = vmatpush.msra.mxu0 %v548
    %1560 = vmatpush.msra.mxu0 %v544
    %1561 = vmatpush.msra.mxu0 %v540
    %1562 = vmatpush.msra.mxu0 %v536
    %1563 = vmatmul.f32.gmra.mxu0 %v1485
    %v1564 = vpop.f32.mrf.mxu0
    %v1565 = vadd.f32 0.0, %v1564
    %1566 = vdwg.mxu0
    %v1567 = vadd.f32 %v405, %v1505
    %v1568 = vadd.f32 %v446, %v1525
    %v1569 = vadd.f32 %v487, %v1545
    %v1570 = vadd.f32 %v528, %v1565
    %v1571 = vxor.u32 %v1567, 2147483648
    %v1572 = vxor.u32 %v1568, 2147483648
    %v1573 = vxor.u32 %v1569, 2147483648
    %v1574 = vmul.f32 %v1571, 1.442695
    %v1575 = vpow.pop %v1574
    %v1576 = vmul.f32 %v1572, 1.442695
    %v1577 = vpow.pop %v1576
    %v1578 = vmul.f32 %v1573, 1.442695
    %v1579 = vpow.pop %v1578
    %v1580 = vadd.f32 %v1575, 1.0
    %v1581 = vadd.f32 %v1577, 1.0
    %v1582 = vadd.f32 %v1579, 1.0
    %v1583 = vrcp.pop %v1580
    %v1584 = vmul.f32 %v1580, %v1583
    %v1585 = vsub.f32 1.0, %v1584
    %v1586 = vmul.f32 %v1583, %v1585
    %v1587 = vadd.f32 %v1583, %v1586
    %vm1588 = vweird.f32 %v1580
    %vm1589 = vweird.f32 %v1583
    %vm1590 = vmor %vm1588, %vm1589
    %v1591 = vsel %vm1590, %v1583, %v1587
    %v1592 = vand.u32 2147483647, %v1580
    %vm1593 = vcmp.eq.f32.partialorder %v1592, 8.507059e+37
    %v1594 = vand.u32 %v1580, 2147483648
    %v1595 = vor.u32 1.1754944e-38, %v1594
    %v1596 = vsel %vm1593, %v1595, %v1591
    %v1597 = vmul.f32 1.0, %v1596
    %v1598 = vrcp.pop %v1581
    %v1599 = vmul.f32 %v1581, %v1598
    %v1600 = vsub.f32 1.0, %v1599
    %v1601 = vmul.f32 %v1598, %v1600
    %v1602 = vadd.f32 %v1598, %v1601
    %vm1603 = vweird.f32 %v1581
    %vm1604 = vweird.f32 %v1598
    %vm1605 = vmor %vm1603, %vm1604
    %v1606 = vsel %vm1605, %v1598, %v1602
    %v1607 = vand.u32 2147483647, %v1581
    %vm1608 = vcmp.eq.f32.partialorder %v1607, 8.507059e+37
    %v1609 = vand.u32 %v1581, 2147483648
    %v1610 = vor.u32 1.1754944e-38, %v1609
    %v1611 = vsel %vm1608, %v1610, %v1606
    %v1612 = vmul.f32 1.0, %v1611
    %v1613 = vrcp.pop %v1582
    %v1614 = vmul.f32 %v1582, %v1613
    %v1615 = vsub.f32 1.0, %v1614
    %v1616 = vmul.f32 %v1613, %v1615
    %v1617 = vadd.f32 %v1613, %v1616
    %vm1618 = vweird.f32 %v1582
    %vm1619 = vweird.f32 %v1613
    %vm1620 = vmor %vm1618, %vm1619
    %v1621 = vsel %vm1620, %v1613, %v1617
    %v1622 = vand.u32 2147483647, %v1582
    %vm1623 = vcmp.eq.f32.partialorder %v1622, 8.507059e+37
    %v1624 = vand.u32 %v1582, 2147483648
    %v1625 = vor.u32 1.1754944e-38, %v1624
    %v1626 = vsel %vm1623, %v1625, %v1621
    %v1627 = vmul.f32 1.0, %v1626
    %v1628 = vtanh.pop %v1570
    %v1629 = vmul.f32 %v1612, %v1483
    %v1630 = vmul.f32 %v1597, %v1628
    %v1631 = vadd.f32 %v1629, %v1630
    %v1632 = vtanh.pop %v1631
    %v1633 = vmul.f32 %v1627, %v1632
    %1634 = vst [vmem:[#allocation2 + $0x30] sm:$0xff] %v1633
    %1635 = vmatpush.msra.mxu0 %v593
    %1636 = vmatpush.msra.mxu0 %v589
    %1637 = vmatpush.msra.mxu0 %v585
    %1638 = vmatpush.msra.mxu0 %v581
    %1639 = vmatpush.msra.mxu0 %v577
    %1640 = vmatpush.msra.mxu0 %v573
    %1641 = vmatpush.msra.mxu0 %v569
    %1642 = vmatpush.msra.mxu0 %v565
    %1643 = vmatpush.msra.mxu0 %v561
    %1644 = vmatpush.msra.mxu0 %v557
    %1645 = vmatpush.msra.mxu0 %v553
    %1646 = vmatpush.msra.mxu0 %v549
    %1647 = vmatpush.msra.mxu0 %v545
    %1648 = vmatpush.msra.mxu0 %v541
    %1649 = vmatpush.msra.mxu0 %v537
    %1650 = vmatpush.msra.mxu0 %v533
    %1651 = vmatmul.f32.gmra.mxu0 %v1633
    %v1652 = vpop.f32.mrf.mxu0
    %v1653 = vadd.f32 0.0, %v1652
    %1654 = vdwg.mxu0
    %1655 = vmatpush.msra.mxu0 %v594
    %1656 = vmatpush.msra.mxu0 %v590
    %1657 = vmatpush.msra.mxu0 %v586
    %1658 = vmatpush.msra.mxu0 %v582
    %1659 = vmatpush.msra.mxu0 %v578
    %1660 = vmatpush.msra.mxu0 %v574
    %1661 = vmatpush.msra.mxu0 %v570
    %1662 = vmatpush.msra.mxu0 %v566
    %1663 = vmatpush.msra.mxu0 %v562
    %1664 = vmatpush.msra.mxu0 %v558
    %1665 = vmatpush.msra.mxu0 %v554
    %1666 = vmatpush.msra.mxu0 %v550
    %1667 = vmatpush.msra.mxu0 %v546
    %1668 = vmatpush.msra.mxu0 %v542
    %1669 = vmatpush.msra.mxu0 %v538
    %1670 = vmatpush.msra.mxu0 %v534
    %1671 = vmatmul.f32.gmra.mxu0 %v1633
    %v1672 = vpop.f32.mrf.mxu0
    %v1673 = vadd.f32 0.0, %v1672
    %1674 = vdwg.mxu0
    %1675 = vmatpush.msra.mxu0 %v595
    %1676 = vmatpush.msra.mxu0 %v591
    %1677 = vmatpush.msra.mxu0 %v587
    %1678 = vmatpush.msra.mxu0 %v583
    %1679 = vmatpush.msra.mxu0 %v579
    %1680 = vmatpush.msra.mxu0 %v575
    %1681 = vmatpush.msra.mxu0 %v571
    %1682 = vmatpush.msra.mxu0 %v567
    %1683 = vmatpush.msra.mxu0 %v563
    %1684 = vmatpush.msra.mxu0 %v559
    %1685 = vmatpush.msra.mxu0 %v555
    %1686 = vmatpush.msra.mxu0 %v551
    %1687 = vmatpush.msra.mxu0 %v547
    %1688 = vmatpush.msra.mxu0 %v543
    %1689 = vmatpush.msra.mxu0 %v539
    %1690 = vmatpush.msra.mxu0 %v535
    %1691 = vmatmul.f32.gmra.mxu0 %v1633
    %v1692 = vpop.f32.mrf.mxu0
    %v1693 = vadd.f32 0.0, %v1692
    %1694 = vdwg.mxu0
    %1695 = vmatpush.msra.mxu0 %v596
    %1696 = vmatpush.msra.mxu0 %v592
    %1697 = vmatpush.msra.mxu0 %v588
    %1698 = vmatpush.msra.mxu0 %v584
    %1699 = vmatpush.msra.mxu0 %v580
    %1700 = vmatpush.msra.mxu0 %v576
    %1701 = vmatpush.msra.mxu0 %v572
    %1702 = vmatpush.msra.mxu0 %v568
    %1703 = vmatpush.msra.mxu0 %v564
    %1704 = vmatpush.msra.mxu0 %v560
    %1705 = vmatpush.msra.mxu0 %v556
    %1706 = vmatpush.msra.mxu0 %v552
    %1707 = vmatpush.msra.mxu0 %v548
    %1708 = vmatpush.msra.mxu0 %v544
    %1709 = vmatpush.msra.mxu0 %v540
    %1710 = vmatpush.msra.mxu0 %v536
    %1711 = vmatmul.f32.gmra.mxu0 %v1633
    %v1712 = vpop.f32.mrf.mxu0
    %v1713 = vadd.f32 0.0, %v1712
    %1714 = vdwg.mxu0
    %v1715 = vadd.f32 %v408, %v1653
    %v1716 = vadd.f32 %v449, %v1673
    %v1717 = vadd.f32 %v490, %v1693
    %v1718 = vadd.f32 %v531, %v1713
    %v1719 = vxor.u32 %v1715, 2147483648
    %v1720 = vxor.u32 %v1716, 2147483648
    %v1721 = vxor.u32 %v1717, 2147483648
    %v1722 = vmul.f32 %v1719, 1.442695
    %v1723 = vpow.pop %v1722
    %v1724 = vmul.f32 %v1720, 1.442695
    %v1725 = vpow.pop %v1724
    %v1726 = vmul.f32 %v1721, 1.442695
    %v1727 = vpow.pop %v1726
    %v1728 = vadd.f32 %v1723, 1.0
    %v1729 = vadd.f32 %v1725, 1.0
    %v1730 = vadd.f32 %v1727, 1.0
    %v1731 = vrcp.pop %v1728
    %v1732 = vmul.f32 %v1728, %v1731
    %v1733 = vsub.f32 1.0, %v1732
    %v1734 = vmul.f32 %v1731, %v1733
    %v1735 = vadd.f32 %v1731, %v1734
    %vm1736 = vweird.f32 %v1728
    %vm1737 = vweird.f32 %v1731
    %vm1738 = vmor %vm1736, %vm1737
    %v1739 = vsel %vm1738, %v1731, %v1735
    %v1740 = vand.u32 2147483647, %v1728
    %vm1741 = vcmp.eq.f32.partialorder %v1740, 8.507059e+37
    %v1742 = vand.u32 %v1728, 2147483648
    %v1743 = vor.u32 1.1754944e-38, %v1742
    %v1744 = vsel %vm1741, %v1743, %v1739
    %v1745 = vmul.f32 1.0, %v1744
    %v1746 = vrcp.pop %v1729
    %v1747 = vmul.f32 %v1729, %v1746
    %v1748 = vsub.f32 1.0, %v1747
    %v1749 = vmul.f32 %v1746, %v1748
    %v1750 = vadd.f32 %v1746, %v1749
    %vm1751 = vweird.f32 %v1729
    %vm1752 = vweird.f32 %v1746
    %vm1753 = vmor %vm1751, %vm1752
    %v1754 = vsel %vm1753, %v1746, %v1750
    %v1755 = vand.u32 2147483647, %v1729
    %vm1756 = vcmp.eq.f32.partialorder %v1755, 8.507059e+37
    %v1757 = vand.u32 %v1729, 2147483648
    %v1758 = vor.u32 1.1754944e-38, %v1757
    %v1759 = vsel %vm1756, %v1758, %v1754
    %v1760 = vmul.f32 1.0, %v1759
    %v1761 = vrcp.pop %v1730
    %v1762 = vmul.f32 %v1730, %v1761
    %v1763 = vsub.f32 1.0, %v1762
    %v1764 = vmul.f32 %v1761, %v1763
    %v1765 = vadd.f32 %v1761, %v1764
    %vm1766 = vweird.f32 %v1730
    %vm1767 = vweird.f32 %v1761
    %vm1768 = vmor %vm1766, %vm1767
    %v1769 = vsel %vm1768, %v1761, %v1765
    %v1770 = vand.u32 2147483647, %v1730
    %vm1771 = vcmp.eq.f32.partialorder %v1770, 8.507059e+37
    %v1772 = vand.u32 %v1730, 2147483648
    %v1773 = vor.u32 1.1754944e-38, %v1772
    %v1774 = vsel %vm1771, %v1773, %v1769
    %v1775 = vmul.f32 1.0, %v1774
    %v1776 = vtanh.pop %v1718
    %v1777 = vmul.f32 %v1760, %v1631
    %v1778 = vmul.f32 %v1745, %v1776
    %v1779 = vadd.f32 %v1777, %v1778
    %v1780 = vtanh.pop %v1779
    %v1781 = vmul.f32 %v1775, %v1780
    %1782 = vst [vmem:[#allocation2 + $0x38] sm:$0xff] %v1781
    %1783 = vst [vmem:[#allocation18] sm:$0xff] %v1781
    %1784 = vst [vmem:[#allocation20] sm:$0xff] %v1779
    %v1785 = vld [vmem:[#allocation2] sm:$0xff]
    %v1786 = vld [vmem:[#allocation2 + $0x8] sm:$0xff]
    %v1787 = vld [vmem:[#allocation2 + $0x10] sm:$0xff]
    %v1788 = vld [vmem:[#allocation2 + $0x18] sm:$0xff]
    %v1789 = vld [vmem:[#allocation2 + $0x20] sm:$0xff]
    %v1790 = vld [vmem:[#allocation2 + $0x28] sm:$0xff]
    %v1791 = vld [vmem:[#allocation2 + $0x30] sm:$0xff]
    %v1792 = vld [vmem:[#allocation2 + $0x38] sm:$0xff]
    %v1793 = vld [vmem:[#allocation9] sm:$0xff]
    %v1794 = vld [vmem:[#allocation9 + $0x8] sm:$0xff]
    %v1795 = vld [vmem:[#allocation9 + $0x10] sm:$0xff]
    %v1796 = vld [vmem:[#allocation9 + $0x18] sm:$0xff]
    %v1797 = vld [vmem:[#allocation9 + $0x20] sm:$0xff]
    %v1798 = vld [vmem:[#allocation9 + $0x28] sm:$0xff]
    %v1799 = vld [vmem:[#allocation9 + $0x30] sm:$0xff]
    %v1800 = vld [vmem:[#allocation9 + $0x38] sm:$0xff]
    %v1801 = vld [vmem:[#allocation9 + $0x40] sm:$0xff]
    %v1802 = vld [vmem:[#allocation9 + $0x48] sm:$0xff]
    %v1803 = vld [vmem:[#allocation9 + $0x50] sm:$0xff]
    %v1804 = vld [vmem:[#allocation9 + $0x58] sm:$0xff]
    %v1805 = vld [vmem:[#allocation9 + $0x60] sm:$0xff]
    %v1806 = vld [vmem:[#allocation9 + $0x68] sm:$0xff]
    %v1807 = vld [vmem:[#allocation9 + $0x70] sm:$0xff]
    %v1808 = vld [vmem:[#allocation9 + $0x78] sm:$0xff]
    %v1809 = vld [vmem:[#allocation9 + $0x80] sm:$0xff]
    %v1810 = vld [vmem:[#allocation9 + $0x88] sm:$0xff]
    %v1811 = vld [vmem:[#allocation9 + $0x90] sm:$0xff]
    %v1812 = vld [vmem:[#allocation9 + $0x98] sm:$0xff]
    %v1813 = vld [vmem:[#allocation9 + $0xa0] sm:$0xff]
    %v1814 = vld [vmem:[#allocation9 + $0xa8] sm:$0xff]
    %v1815 = vld [vmem:[#allocation9 + $0xb0] sm:$0xff]
    %v1816 = vld [vmem:[#allocation9 + $0xb8] sm:$0xff]
    %v1817 = vld [vmem:[#allocation9 + $0xc0] sm:$0xff]
    %v1818 = vld [vmem:[#allocation9 + $0xc8] sm:$0xff]
    %v1819 = vld [vmem:[#allocation9 + $0xd0] sm:$0xff]
    %v1820 = vld [vmem:[#allocation9 + $0xd8] sm:$0xff]
    %v1821 = vld [vmem:[#allocation9 + $0xe0] sm:$0xff]
    %v1822 = vld [vmem:[#allocation9 + $0xe8] sm:$0xff]
    %v1823 = vld [vmem:[#allocation9 + $0xf0] sm:$0xff]
    %v1824 = vld [vmem:[#allocation9 + $0xf8] sm:$0xff]
    %v1825 = vld [vmem:[#allocation9 + $0x100] sm:$0xff]
    %v1826 = vld [vmem:[#allocation9 + $0x108] sm:$0xff]
    %v1827 = vld [vmem:[#allocation9 + $0x110] sm:$0xff]
    %v1828 = vld [vmem:[#allocation9 + $0x118] sm:$0xff]
    %v1829 = vld [vmem:[#allocation9 + $0x120] sm:$0xff]
    %v1830 = vld [vmem:[#allocation9 + $0x128] sm:$0xff]
    %v1831 = vld [vmem:[#allocation9 + $0x130] sm:$0xff]
    %v1832 = vld [vmem:[#allocation9 + $0x138] sm:$0xff]
    %v1833 = vld [vmem:[#allocation9 + $0x140] sm:$0xff]
    %v1834 = vld [vmem:[#allocation9 + $0x148] sm:$0xff]
    %v1835 = vld [vmem:[#allocation9 + $0x150] sm:$0xff]
    %v1836 = vld [vmem:[#allocation9 + $0x158] sm:$0xff]
    %v1837 = vld [vmem:[#allocation9 + $0x160] sm:$0xff]
    %v1838 = vld [vmem:[#allocation9 + $0x168] sm:$0xff]
    %v1839 = vld [vmem:[#allocation9 + $0x170] sm:$0xff]
    %v1840 = vld [vmem:[#allocation9 + $0x178] sm:$0xff]
    %v1841 = vld [vmem:[#allocation9 + $0x180] sm:$0xff]
    %v1842 = vld [vmem:[#allocation9 + $0x188] sm:$0xff]
    %v1843 = vld [vmem:[#allocation9 + $0x190] sm:$0xff]
    %v1844 = vld [vmem:[#allocation9 + $0x198] sm:$0xff]
    %v1845 = vld [vmem:[#allocation9 + $0x1a0] sm:$0xff]
    %v1846 = vld [vmem:[#allocation9 + $0x1a8] sm:$0xff]
    %v1847 = vld [vmem:[#allocation9 + $0x1b0] sm:$0xff]
    %v1848 = vld [vmem:[#allocation9 + $0x1b8] sm:$0xff]
    %v1849 = vld [vmem:[#allocation9 + $0x1c0] sm:$0xff]
    %v1850 = vld [vmem:[#allocation9 + $0x1c8] sm:$0xff]
    %v1851 = vld [vmem:[#allocation9 + $0x1d0] sm:$0xff]
    %v1852 = vld [vmem:[#allocation9 + $0x1d8] sm:$0xff]
    %v1853 = vld [vmem:[#allocation9 + $0x1e0] sm:$0xff]
    %v1854 = vld [vmem:[#allocation9 + $0x1e8] sm:$0xff]
    %v1855 = vld [vmem:[#allocation9 + $0x1f0] sm:$0xff]
    %v1856 = vld [vmem:[#allocation9 + $0x1f8] sm:$0xff]
    %v1857 = vld [vmem:[%s7] sm:$0xf]
    %v1859 = vperm.slane %v1857, 0
    %v1860 = vperm.slane %v1857, 1
    %v1861 = vperm.slane %v1857, 2
    %v1862 = vperm.slane %v1857, 3
    %1867 = vmatpush.msra.mxu0 %v1853
    %1868 = vmatpush.msra.mxu0 %v1849
    %1869 = vmatpush.msra.mxu0 %v1845
    %1870 = vmatpush.msra.mxu0 %v1841
    %1871 = vmatpush.msra.mxu0 %v1837
    %1872 = vmatpush.msra.mxu0 %v1833
    %1873 = vmatpush.msra.mxu0 %v1829
    %1874 = vmatpush.msra.mxu0 %v1825
    %1875 = vmatpush.msra.mxu0 %v1821
    %1876 = vmatpush.msra.mxu0 %v1817
    %1877 = vmatpush.msra.mxu0 %v1813
    %1878 = vmatpush.msra.mxu0 %v1809
    %1879 = vmatpush.msra.mxu0 %v1805
    %1880 = vmatpush.msra.mxu0 %v1801
    %1881 = vmatpush.msra.mxu0 %v1797
    %1882 = vmatpush.msra.mxu0 %v1793
    %1883 = vmatmul.f32.gmra.mxu0 %v1785
    %v1884 = vpop.f32.mrf.mxu0
    %v1885 = vadd.f32 %v1859, %v1884
    %1886 = vmatmul.f32.gmra.mxu0 %v1786
    %v1887 = vpop.f32.mrf.mxu0
    %v1888 = vadd.f32 %v1859, %v1887
    %1889 = vmatmul.f32.gmra.mxu0 %v1787
    %v1890 = vpop.f32.mrf.mxu0
    %v1891 = vadd.f32 %v1859, %v1890
    %1892 = vmatmul.f32.gmra.mxu0 %v1788
    %v1893 = vpop.f32.mrf.mxu0
    %v1894 = vadd.f32 %v1859, %v1893
    %1895 = vmatmul.f32.gmra.mxu0 %v1789
    %v1896 = vpop.f32.mrf.mxu0
    %v1897 = vadd.f32 %v1859, %v1896
    %1898 = vmatmul.f32.gmra.mxu0 %v1790
    %v1899 = vpop.f32.mrf.mxu0
    %v1900 = vadd.f32 %v1859, %v1899
    %1901 = vmatmul.f32.gmra.mxu0 %v1791
    %v1902 = vpop.f32.mrf.mxu0
    %v1903 = vadd.f32 %v1859, %v1902
    %1904 = vmatmul.f32.gmra.mxu0 %v1792
    %v1905 = vpop.f32.mrf.mxu0
    %v1906 = vadd.f32 %v1859, %v1905
    %1907 = vdwg.mxu0
    %1908 = vmatpush.msra.mxu0 %v1854
    %1909 = vmatpush.msra.mxu0 %v1850
    %1910 = vmatpush.msra.mxu0 %v1846
    %1911 = vmatpush.msra.mxu0 %v1842
    %1912 = vmatpush.msra.mxu0 %v1838
    %1913 = vmatpush.msra.mxu0 %v1834
    %1914 = vmatpush.msra.mxu0 %v1830
    %1915 = vmatpush.msra.mxu0 %v1826
    %1916 = vmatpush.msra.mxu0 %v1822
    %1917 = vmatpush.msra.mxu0 %v1818
    %1918 = vmatpush.msra.mxu0 %v1814
    %1919 = vmatpush.msra.mxu0 %v1810
    %1920 = vmatpush.msra.mxu0 %v1806
    %1921 = vmatpush.msra.mxu0 %v1802
    %1922 = vmatpush.msra.mxu0 %v1798
    %1923 = vmatpush.msra.mxu0 %v1794
    %1924 = vmatmul.f32.gmra.mxu0 %v1785
    %v1925 = vpop.f32.mrf.mxu0
    %v1926 = vadd.f32 %v1860, %v1925
    %1927 = vmatmul.f32.gmra.mxu0 %v1786
    %v1928 = vpop.f32.mrf.mxu0
    %v1929 = vadd.f32 %v1860, %v1928
    %1930 = vmatmul.f32.gmra.mxu0 %v1787
    %v1931 = vpop.f32.mrf.mxu0
    %v1932 = vadd.f32 %v1860, %v1931
    %1933 = vmatmul.f32.gmra.mxu0 %v1788
    %v1934 = vpop.f32.mrf.mxu0
    %v1935 = vadd.f32 %v1860, %v1934
    %1936 = vmatmul.f32.gmra.mxu0 %v1789
    %v1937 = vpop.f32.mrf.mxu0
    %v1938 = vadd.f32 %v1860, %v1937
    %1939 = vmatmul.f32.gmra.mxu0 %v1790
    %v1940 = vpop.f32.mrf.mxu0
    %v1941 = vadd.f32 %v1860, %v1940
    %1942 = vmatmul.f32.gmra.mxu0 %v1791
    %v1943 = vpop.f32.mrf.mxu0
    %v1944 = vadd.f32 %v1860, %v1943
    %1945 = vmatmul.f32.gmra.mxu0 %v1792
    %v1946 = vpop.f32.mrf.mxu0
    %v1947 = vadd.f32 %v1860, %v1946
    %1948 = vdwg.mxu0
    %1949 = vmatpush.msra.mxu0 %v1855
    %1950 = vmatpush.msra.mxu0 %v1851
    %1951 = vmatpush.msra.mxu0 %v1847
    %1952 = vmatpush.msra.mxu0 %v1843
    %1953 = vmatpush.msra.mxu0 %v1839
    %1954 = vmatpush.msra.mxu0 %v1835
    %1955 = vmatpush.msra.mxu0 %v1831
    %1956 = vmatpush.msra.mxu0 %v1827
    %1957 = vmatpush.msra.mxu0 %v1823
    %1958 = vmatpush.msra.mxu0 %v1819
    %1959 = vmatpush.msra.mxu0 %v1815
    %1960 = vmatpush.msra.mxu0 %v1811
    %1961 = vmatpush.msra.mxu0 %v1807
    %1962 = vmatpush.msra.mxu0 %v1803
    %1963 = vmatpush.msra.mxu0 %v1799
    %1964 = vmatpush.msra.mxu0 %v1795
    %1965 = vmatmul.f32.gmra.mxu0 %v1785
    %v1966 = vpop.f32.mrf.mxu0
    %v1967 = vadd.f32 %v1861, %v1966
    %1968 = vmatmul.f32.gmra.mxu0 %v1786
    %v1969 = vpop.f32.mrf.mxu0
    %v1970 = vadd.f32 %v1861, %v1969
    %1971 = vmatmul.f32.gmra.mxu0 %v1787
    %v1972 = vpop.f32.mrf.mxu0
    %v1973 = vadd.f32 %v1861, %v1972
    %1974 = vmatmul.f32.gmra.mxu0 %v1788
    %v1975 = vpop.f32.mrf.mxu0
    %v1976 = vadd.f32 %v1861, %v1975
    %1977 = vmatmul.f32.gmra.mxu0 %v1789
    %v1978 = vpop.f32.mrf.mxu0
    %v1979 = vadd.f32 %v1861, %v1978
    %1980 = vmatmul.f32.gmra.mxu0 %v1790
    %v1981 = vpop.f32.mrf.mxu0
    %v1982 = vadd.f32 %v1861, %v1981
    %1983 = vmatmul.f32.gmra.mxu0 %v1791
    %v1984 = vpop.f32.mrf.mxu0
    %v1985 = vadd.f32 %v1861, %v1984
    %1986 = vmatmul.f32.gmra.mxu0 %v1792
    %v1987 = vpop.f32.mrf.mxu0
    %v1988 = vadd.f32 %v1861, %v1987
    %1989 = vdwg.mxu0
    %1990 = vmatpush.msra.mxu0 %v1856
    %1991 = vmatpush.msra.mxu0 %v1852
    %1992 = vmatpush.msra.mxu0 %v1848
    %1993 = vmatpush.msra.mxu0 %v1844
    %1994 = vmatpush.msra.mxu0 %v1840
    %1995 = vmatpush.msra.mxu0 %v1836
    %1996 = vmatpush.msra.mxu0 %v1832
    %1997 = vmatpush.msra.mxu0 %v1828
    %1998 = vmatpush.msra.mxu0 %v1824
    %1999 = vmatpush.msra.mxu0 %v1820
    %2000 = vmatpush.msra.mxu0 %v1816
    %2001 = vmatpush.msra.mxu0 %v1812
    %2002 = vmatpush.msra.mxu0 %v1808
    %2003 = vmatpush.msra.mxu0 %v1804
    %2004 = vmatpush.msra.mxu0 %v1800
    %2005 = vmatpush.msra.mxu0 %v1796
    %2006 = vmatmul.f32.gmra.mxu0 %v1785
    %v2007 = vpop.f32.mrf.mxu0
    %v2008 = vadd.f32 %v1862, %v2007
    %2009 = vmatmul.f32.gmra.mxu0 %v1786
    %v2010 = vpop.f32.mrf.mxu0
    %v2011 = vadd.f32 %v1862, %v2010
    %2012 = vmatmul.f32.gmra.mxu0 %v1787
    %v2013 = vpop.f32.mrf.mxu0
    %v2014 = vadd.f32 %v1862, %v2013
    %2015 = vmatmul.f32.gmra.mxu0 %v1788
    %v2016 = vpop.f32.mrf.mxu0
    %v2017 = vadd.f32 %v1862, %v2016
    %2018 = vmatmul.f32.gmra.mxu0 %v1789
    %v2019 = vpop.f32.mrf.mxu0
    %v2020 = vadd.f32 %v1862, %v2019
    %2021 = vmatmul.f32.gmra.mxu0 %v1790
    %v2022 = vpop.f32.mrf.mxu0
    %v2023 = vadd.f32 %v1862, %v2022
    %2024 = vmatmul.f32.gmra.mxu0 %v1791
    %v2025 = vpop.f32.mrf.mxu0
    %v2026 = vadd.f32 %v1862, %v2025
    %2027 = vmatmul.f32.gmra.mxu0 %v1792
    %v2028 = vpop.f32.mrf.mxu0
    %v2029 = vadd.f32 %v1862, %v2028
    %2030 = vdwg.mxu0
    %v2031 = vld [vmem:[#allocation11] sm:$0xff]
    %v2032 = vld [vmem:[#allocation11 + $0x8] sm:$0xff]
    %v2033 = vld [vmem:[#allocation11 + $0x10] sm:$0xff]
    %v2034 = vld [vmem:[#allocation11 + $0x18] sm:$0xff]
    %v2035 = vld [vmem:[#allocation11 + $0x20] sm:$0xff]
    %v2036 = vld [vmem:[#allocation11 + $0x28] sm:$0xff]
    %v2037 = vld [vmem:[#allocation11 + $0x30] sm:$0xff]
    %v2038 = vld [vmem:[#allocation11 + $0x38] sm:$0xff]
    %v2039 = vld [vmem:[#allocation11 + $0x40] sm:$0xff]
    %v2040 = vld [vmem:[#allocation11 + $0x48] sm:$0xff]
    %v2041 = vld [vmem:[#allocation11 + $0x50] sm:$0xff]
    %v2042 = vld [vmem:[#allocation11 + $0x58] sm:$0xff]
    %v2043 = vld [vmem:[#allocation11 + $0x60] sm:$0xff]
    %v2044 = vld [vmem:[#allocation11 + $0x68] sm:$0xff]
    %v2045 = vld [vmem:[#allocation11 + $0x70] sm:$0xff]
    %v2046 = vld [vmem:[#allocation11 + $0x78] sm:$0xff]
    %v2047 = vld [vmem:[#allocation11 + $0x80] sm:$0xff]
    %v2048 = vld [vmem:[#allocation11 + $0x88] sm:$0xff]
    %v2049 = vld [vmem:[#allocation11 + $0x90] sm:$0xff]
    %v2050 = vld [vmem:[#allocation11 + $0x98] sm:$0xff]
    %v2051 = vld [vmem:[#allocation11 + $0xa0] sm:$0xff]
    %v2052 = vld [vmem:[#allocation11 + $0xa8] sm:$0xff]
    %v2053 = vld [vmem:[#allocation11 + $0xb0] sm:$0xff]
    %v2054 = vld [vmem:[#allocation11 + $0xb8] sm:$0xff]
    %v2055 = vld [vmem:[#allocation11 + $0xc0] sm:$0xff]
    %v2056 = vld [vmem:[#allocation11 + $0xc8] sm:$0xff]
    %v2057 = vld [vmem:[#allocation11 + $0xd0] sm:$0xff]
    %v2058 = vld [vmem:[#allocation11 + $0xd8] sm:$0xff]
    %v2059 = vld [vmem:[#allocation11 + $0xe0] sm:$0xff]
    %v2060 = vld [vmem:[#allocation11 + $0xe8] sm:$0xff]
    %v2061 = vld [vmem:[#allocation11 + $0xf0] sm:$0xff]
    %v2062 = vld [vmem:[#allocation11 + $0xf8] sm:$0xff]
    %v2063 = vld [vmem:[#allocation11 + $0x100] sm:$0xff]
    %v2064 = vld [vmem:[#allocation11 + $0x108] sm:$0xff]
    %v2065 = vld [vmem:[#allocation11 + $0x110] sm:$0xff]
    %v2066 = vld [vmem:[#allocation11 + $0x118] sm:$0xff]
    %v2067 = vld [vmem:[#allocation11 + $0x120] sm:$0xff]
    %v2068 = vld [vmem:[#allocation11 + $0x128] sm:$0xff]
    %v2069 = vld [vmem:[#allocation11 + $0x130] sm:$0xff]
    %v2070 = vld [vmem:[#allocation11 + $0x138] sm:$0xff]
    %v2071 = vld [vmem:[#allocation11 + $0x140] sm:$0xff]
    %v2072 = vld [vmem:[#allocation11 + $0x148] sm:$0xff]
    %v2073 = vld [vmem:[#allocation11 + $0x150] sm:$0xff]
    %v2074 = vld [vmem:[#allocation11 + $0x158] sm:$0xff]
    %v2075 = vld [vmem:[#allocation11 + $0x160] sm:$0xff]
    %v2076 = vld [vmem:[#allocation11 + $0x168] sm:$0xff]
    %v2077 = vld [vmem:[#allocation11 + $0x170] sm:$0xff]
    %v2078 = vld [vmem:[#allocation11 + $0x178] sm:$0xff]
    %v2079 = vld [vmem:[#allocation11 + $0x180] sm:$0xff]
    %v2080 = vld [vmem:[#allocation11 + $0x188] sm:$0xff]
    %v2081 = vld [vmem:[#allocation11 + $0x190] sm:$0xff]
    %v2082 = vld [vmem:[#allocation11 + $0x198] sm:$0xff]
    %v2083 = vld [vmem:[#allocation11 + $0x1a0] sm:$0xff]
    %v2084 = vld [vmem:[#allocation11 + $0x1a8] sm:$0xff]
    %v2085 = vld [vmem:[#allocation11 + $0x1b0] sm:$0xff]
    %v2086 = vld [vmem:[#allocation11 + $0x1b8] sm:$0xff]
    %v2087 = vld [vmem:[#allocation11 + $0x1c0] sm:$0xff]
    %v2088 = vld [vmem:[#allocation11 + $0x1c8] sm:$0xff]
    %v2089 = vld [vmem:[#allocation11 + $0x1d0] sm:$0xff]
    %v2090 = vld [vmem:[#allocation11 + $0x1d8] sm:$0xff]
    %v2091 = vld [vmem:[#allocation11 + $0x1e0] sm:$0xff]
    %v2092 = vld [vmem:[#allocation11 + $0x1e8] sm:$0xff]
    %v2093 = vld [vmem:[#allocation11 + $0x1f0] sm:$0xff]
    %v2094 = vld [vmem:[#allocation11 + $0x1f8] sm:$0xff]
    %s2095 = scalar_lea.vmem %s13, 8
    %v2096 = vld [vmem:[%s2095] sm:$0xff]
    %s2097 = scalar_lea.vmem %s14, 8
    %v2098 = vld [vmem:[%s2097] sm:$0xff]
    %2099 = vmatpush.msra.mxu0 %v2091
    %2100 = vmatpush.msra.mxu0 %v2087
    %2101 = vmatpush.msra.mxu0 %v2083
    %2102 = vmatpush.msra.mxu0 %v2079
    %2103 = vmatpush.msra.mxu0 %v2075
    %2104 = vmatpush.msra.mxu0 %v2071
    %2105 = vmatpush.msra.mxu0 %v2067
    %2106 = vmatpush.msra.mxu0 %v2063
    %2107 = vmatpush.msra.mxu0 %v2059
    %2108 = vmatpush.msra.mxu0 %v2055
    %2109 = vmatpush.msra.mxu0 %v2051
    %2110 = vmatpush.msra.mxu0 %v2047
    %2111 = vmatpush.msra.mxu0 %v2043
    %2112 = vmatpush.msra.mxu0 %v2039
    %2113 = vmatpush.msra.mxu0 %v2035
    %2114 = vmatpush.msra.mxu0 %v2031
    %2115 = vmatmul.f32.gmra.mxu0 %v2096
    %v2116 = vpop.f32.mrf.mxu0
    %v2117 = vadd.f32 0.0, %v2116
    %2118 = vdwg.mxu0
    %2119 = vmatpush.msra.mxu0 %v2092
    %2120 = vmatpush.msra.mxu0 %v2088
    %2121 = vmatpush.msra.mxu0 %v2084
    %2122 = vmatpush.msra.mxu0 %v2080
    %2123 = vmatpush.msra.mxu0 %v2076
    %2124 = vmatpush.msra.mxu0 %v2072
    %2125 = vmatpush.msra.mxu0 %v2068
    %2126 = vmatpush.msra.mxu0 %v2064
    %2127 = vmatpush.msra.mxu0 %v2060
    %2128 = vmatpush.msra.mxu0 %v2056
    %2129 = vmatpush.msra.mxu0 %v2052
    %2130 = vmatpush.msra.mxu0 %v2048
    %2131 = vmatpush.msra.mxu0 %v2044
    %2132 = vmatpush.msra.mxu0 %v2040
    %2133 = vmatpush.msra.mxu0 %v2036
    %2134 = vmatpush.msra.mxu0 %v2032
    %2135 = vmatmul.f32.gmra.mxu0 %v2096
    %v2136 = vpop.f32.mrf.mxu0
    %v2137 = vadd.f32 0.0, %v2136
    %2138 = vdwg.mxu0
    %2139 = vmatpush.msra.mxu0 %v2093
    %2140 = vmatpush.msra.mxu0 %v2089
    %2141 = vmatpush.msra.mxu0 %v2085
    %2142 = vmatpush.msra.mxu0 %v2081
    %2143 = vmatpush.msra.mxu0 %v2077
    %2144 = vmatpush.msra.mxu0 %v2073
    %2145 = vmatpush.msra.mxu0 %v2069
    %2146 = vmatpush.msra.mxu0 %v2065
    %2147 = vmatpush.msra.mxu0 %v2061
    %2148 = vmatpush.msra.mxu0 %v2057
    %2149 = vmatpush.msra.mxu0 %v2053
    %2150 = vmatpush.msra.mxu0 %v2049
    %2151 = vmatpush.msra.mxu0 %v2045
    %2152 = vmatpush.msra.mxu0 %v2041
    %2153 = vmatpush.msra.mxu0 %v2037
    %2154 = vmatpush.msra.mxu0 %v2033
    %2155 = vmatmul.f32.gmra.mxu0 %v2096
    %v2156 = vpop.f32.mrf.mxu0
    %v2157 = vadd.f32 0.0, %v2156
    %2158 = vdwg.mxu0
    %2159 = vmatpush.msra.mxu0 %v2094
    %2160 = vmatpush.msra.mxu0 %v2090
    %2161 = vmatpush.msra.mxu0 %v2086
    %2162 = vmatpush.msra.mxu0 %v2082
    %2163 = vmatpush.msra.mxu0 %v2078
    %2164 = vmatpush.msra.mxu0 %v2074
    %2165 = vmatpush.msra.mxu0 %v2070
    %2166 = vmatpush.msra.mxu0 %v2066
    %2167 = vmatpush.msra.mxu0 %v2062
    %2168 = vmatpush.msra.mxu0 %v2058
    %2169 = vmatpush.msra.mxu0 %v2054
    %2170 = vmatpush.msra.mxu0 %v2050
    %2171 = vmatpush.msra.mxu0 %v2046
    %2172 = vmatpush.msra.mxu0 %v2042
    %2173 = vmatpush.msra.mxu0 %v2038
    %2174 = vmatpush.msra.mxu0 %v2034
    %2175 = vmatmul.f32.gmra.mxu0 %v2096
    %v2176 = vpop.f32.mrf.mxu0
    %v2177 = vadd.f32 0.0, %v2176
    %2178 = vdwg.mxu0
    %v2179 = vadd.f32 %v1885, %v2117
    %v2180 = vadd.f32 %v1926, %v2137
    %v2181 = vadd.f32 %v1967, %v2157
    %v2182 = vadd.f32 %v2008, %v2177
    %v2183 = vxor.u32 %v2179, 2147483648
    %v2184 = vxor.u32 %v2180, 2147483648
    %v2185 = vxor.u32 %v2181, 2147483648
    %v2186 = vmul.f32 %v2183, 1.442695
    %v2187 = vpow.pop %v2186
    %v2188 = vmul.f32 %v2184, 1.442695
    %v2189 = vpow.pop %v2188
    %v2190 = vmul.f32 %v2185, 1.442695
    %v2191 = vpow.pop %v2190
    %v2192 = vadd.f32 %v2187, 1.0
    %v2193 = vadd.f32 %v2189, 1.0
    %v2194 = vadd.f32 %v2191, 1.0
    %v2195 = vrcp.pop %v2192
    %v2196 = vmul.f32 %v2192, %v2195
    %v2197 = vsub.f32 1.0, %v2196
    %v2198 = vmul.f32 %v2195, %v2197
    %v2199 = vadd.f32 %v2195, %v2198
    %vm2200 = vweird.f32 %v2192
    %vm2201 = vweird.f32 %v2195
    %vm2202 = vmor %vm2200, %vm2201
    %v2203 = vsel %vm2202, %v2195, %v2199
    %v2204 = vand.u32 2147483647, %v2192
    %vm2205 = vcmp.eq.f32.partialorder %v2204, 8.507059e+37
    %v2206 = vand.u32 %v2192, 2147483648
    %v2207 = vor.u32 1.1754944e-38, %v2206
    %v2208 = vsel %vm2205, %v2207, %v2203
    %v2209 = vmul.f32 1.0, %v2208
    %v2210 = vrcp.pop %v2193
    %v2211 = vmul.f32 %v2193, %v2210
    %v2212 = vsub.f32 1.0, %v2211
    %v2213 = vmul.f32 %v2210, %v2212
    %v2214 = vadd.f32 %v2210, %v2213
    %vm2215 = vweird.f32 %v2193
    %vm2216 = vweird.f32 %v2210
    %vm2217 = vmor %vm2215, %vm2216
    %v2218 = vsel %vm2217, %v2210, %v2214
    %v2219 = vand.u32 2147483647, %v2193
    %vm2220 = vcmp.eq.f32.partialorder %v2219, 8.507059e+37
    %v2221 = vand.u32 %v2193, 2147483648
    %v2222 = vor.u32 1.1754944e-38, %v2221
    %v2223 = vsel %vm2220, %v2222, %v2218
    %v2224 = vmul.f32 1.0, %v2223
    %v2225 = vrcp.pop %v2194
    %v2226 = vmul.f32 %v2194, %v2225
    %v2227 = vsub.f32 1.0, %v2226
    %v2228 = vmul.f32 %v2225, %v2227
    %v2229 = vadd.f32 %v2225, %v2228
    %vm2230 = vweird.f32 %v2194
    %vm2231 = vweird.f32 %v2225
    %vm2232 = vmor %vm2230, %vm2231
    %v2233 = vsel %vm2232, %v2225, %v2229
    %v2234 = vand.u32 2147483647, %v2194
    %vm2235 = vcmp.eq.f32.partialorder %v2234, 8.507059e+37
    %v2236 = vand.u32 %v2194, 2147483648
    %v2237 = vor.u32 1.1754944e-38, %v2236
    %v2238 = vsel %vm2235, %v2237, %v2233
    %v2239 = vmul.f32 1.0, %v2238
    %v2240 = vtanh.pop %v2182
    %v2241 = vmul.f32 %v2224, %v2098
    %v2242 = vmul.f32 %v2209, %v2240
    %v2243 = vadd.f32 %v2241, %v2242
    %v2244 = vtanh.pop %v2243
    %v2245 = vmul.f32 %v2239, %v2244
    %2246 = vst [vmem:[#allocation2] sm:$0xff] %v2245
    %2247 = vmatpush.msra.mxu0 %v2091
    %2248 = vmatpush.msra.mxu0 %v2087
    %2249 = vmatpush.msra.mxu0 %v2083
    %2250 = vmatpush.msra.mxu0 %v2079
    %2251 = vmatpush.msra.mxu0 %v2075
    %2252 = vmatpush.msra.mxu0 %v2071
    %2253 = vmatpush.msra.mxu0 %v2067
    %2254 = vmatpush.msra.mxu0 %v2063
    %2255 = vmatpush.msra.mxu0 %v2059
    %2256 = vmatpush.msra.mxu0 %v2055
    %2257 = vmatpush.msra.mxu0 %v2051
    %2258 = vmatpush.msra.mxu0 %v2047
    %2259 = vmatpush.msra.mxu0 %v2043
    %2260 = vmatpush.msra.mxu0 %v2039
    %2261 = vmatpush.msra.mxu0 %v2035
    %2262 = vmatpush.msra.mxu0 %v2031
    %2263 = vmatmul.f32.gmra.mxu0 %v2245
    %v2264 = vpop.f32.mrf.mxu0
    %v2265 = vadd.f32 0.0, %v2264
    %2266 = vdwg.mxu0
    %2267 = vmatpush.msra.mxu0 %v2092
    %2268 = vmatpush.msra.mxu0 %v2088
    %2269 = vmatpush.msra.mxu0 %v2084
    %2270 = vmatpush.msra.mxu0 %v2080
    %2271 = vmatpush.msra.mxu0 %v2076
    %2272 = vmatpush.msra.mxu0 %v2072
    %2273 = vmatpush.msra.mxu0 %v2068
    %2274 = vmatpush.msra.mxu0 %v2064
    %2275 = vmatpush.msra.mxu0 %v2060
    %2276 = vmatpush.msra.mxu0 %v2056
    %2277 = vmatpush.msra.mxu0 %v2052
    %2278 = vmatpush.msra.mxu0 %v2048
    %2279 = vmatpush.msra.mxu0 %v2044
    %2280 = vmatpush.msra.mxu0 %v2040
    %2281 = vmatpush.msra.mxu0 %v2036
    %2282 = vmatpush.msra.mxu0 %v2032
    %2283 = vmatmul.f32.gmra.mxu0 %v2245
    %v2284 = vpop.f32.mrf.mxu0
    %v2285 = vadd.f32 0.0, %v2284
    %2286 = vdwg.mxu0
    %2287 = vmatpush.msra.mxu0 %v2093
    %2288 = vmatpush.msra.mxu0 %v2089
    %2289 = vmatpush.msra.mxu0 %v2085
    %2290 = vmatpush.msra.mxu0 %v2081
    %2291 = vmatpush.msra.mxu0 %v2077
    %2292 = vmatpush.msra.mxu0 %v2073
    %2293 = vmatpush.msra.mxu0 %v2069
    %2294 = vmatpush.msra.mxu0 %v2065
    %2295 = vmatpush.msra.mxu0 %v2061
    %2296 = vmatpush.msra.mxu0 %v2057
    %2297 = vmatpush.msra.mxu0 %v2053
    %2298 = vmatpush.msra.mxu0 %v2049
    %2299 = vmatpush.msra.mxu0 %v2045
    %2300 = vmatpush.msra.mxu0 %v2041
    %2301 = vmatpush.msra.mxu0 %v2037
    %2302 = vmatpush.msra.mxu0 %v2033
    %2303 = vmatmul.f32.gmra.mxu0 %v2245
    %v2304 = vpop.f32.mrf.mxu0
    %v2305 = vadd.f32 0.0, %v2304
    %2306 = vdwg.mxu0
    %2307 = vmatpush.msra.mxu0 %v2094
    %2308 = vmatpush.msra.mxu0 %v2090
    %2309 = vmatpush.msra.mxu0 %v2086
    %2310 = vmatpush.msra.mxu0 %v2082
    %2311 = vmatpush.msra.mxu0 %v2078
    %2312 = vmatpush.msra.mxu0 %v2074
    %2313 = vmatpush.msra.mxu0 %v2070
    %2314 = vmatpush.msra.mxu0 %v2066
    %2315 = vmatpush.msra.mxu0 %v2062
    %2316 = vmatpush.msra.mxu0 %v2058
    %2317 = vmatpush.msra.mxu0 %v2054
    %2318 = vmatpush.msra.mxu0 %v2050
    %2319 = vmatpush.msra.mxu0 %v2046
    %2320 = vmatpush.msra.mxu0 %v2042
    %2321 = vmatpush.msra.mxu0 %v2038
    %2322 = vmatpush.msra.mxu0 %v2034
    %2323 = vmatmul.f32.gmra.mxu0 %v2245
    %v2324 = vpop.f32.mrf.mxu0
    %v2325 = vadd.f32 0.0, %v2324
    %2326 = vdwg.mxu0
    %v2327 = vadd.f32 %v1888, %v2265
    %v2328 = vadd.f32 %v1929, %v2285
    %v2329 = vadd.f32 %v1970, %v2305
    %v2330 = vadd.f32 %v2011, %v2325
    %v2331 = vxor.u32 %v2327, 2147483648
    %v2332 = vxor.u32 %v2328, 2147483648
    %v2333 = vxor.u32 %v2329, 2147483648
    %v2334 = vmul.f32 %v2331, 1.442695
    %v2335 = vpow.pop %v2334
    %v2336 = vmul.f32 %v2332, 1.442695
    %v2337 = vpow.pop %v2336
    %v2338 = vmul.f32 %v2333, 1.442695
    %v2339 = vpow.pop %v2338
    %v2340 = vadd.f32 %v2335, 1.0
    %v2341 = vadd.f32 %v2337, 1.0
    %v2342 = vadd.f32 %v2339, 1.0
    %v2343 = vrcp.pop %v2340
    %v2344 = vmul.f32 %v2340, %v2343
    %v2345 = vsub.f32 1.0, %v2344
    %v2346 = vmul.f32 %v2343, %v2345
    %v2347 = vadd.f32 %v2343, %v2346
    %vm2348 = vweird.f32 %v2340
    %vm2349 = vweird.f32 %v2343
    %vm2350 = vmor %vm2348, %vm2349
    %v2351 = vsel %vm2350, %v2343, %v2347
    %v2352 = vand.u32 2147483647, %v2340
    %vm2353 = vcmp.eq.f32.partialorder %v2352, 8.507059e+37
    %v2354 = vand.u32 %v2340, 2147483648
    %v2355 = vor.u32 1.1754944e-38, %v2354
    %v2356 = vsel %vm2353, %v2355, %v2351
    %v2357 = vmul.f32 1.0, %v2356
    %v2358 = vrcp.pop %v2341
    %v2359 = vmul.f32 %v2341, %v2358
    %v2360 = vsub.f32 1.0, %v2359
    %v2361 = vmul.f32 %v2358, %v2360
    %v2362 = vadd.f32 %v2358, %v2361
    %vm2363 = vweird.f32 %v2341
    %vm2364 = vweird.f32 %v2358
    %vm2365 = vmor %vm2363, %vm2364
    %v2366 = vsel %vm2365, %v2358, %v2362
    %v2367 = vand.u32 2147483647, %v2341
    %vm2368 = vcmp.eq.f32.partialorder %v2367, 8.507059e+37
    %v2369 = vand.u32 %v2341, 2147483648
    %v2370 = vor.u32 1.1754944e-38, %v2369
    %v2371 = vsel %vm2368, %v2370, %v2366
    %v2372 = vmul.f32 1.0, %v2371
    %v2373 = vrcp.pop %v2342
    %v2374 = vmul.f32 %v2342, %v2373
    %v2375 = vsub.f32 1.0, %v2374
    %v2376 = vmul.f32 %v2373, %v2375
    %v2377 = vadd.f32 %v2373, %v2376
    %vm2378 = vweird.f32 %v2342
    %vm2379 = vweird.f32 %v2373
    %vm2380 = vmor %vm2378, %vm2379
    %v2381 = vsel %vm2380, %v2373, %v2377
    %v2382 = vand.u32 2147483647, %v2342
    %vm2383 = vcmp.eq.f32.partialorder %v2382, 8.507059e+37
    %v2384 = vand.u32 %v2342, 2147483648
    %v2385 = vor.u32 1.1754944e-38, %v2384
    %v2386 = vsel %vm2383, %v2385, %v2381
    %v2387 = vmul.f32 1.0, %v2386
    %v2388 = vtanh.pop %v2330
    %v2389 = vmul.f32 %v2372, %v2243
    %v2390 = vmul.f32 %v2357, %v2388
    %v2391 = vadd.f32 %v2389, %v2390
    %v2392 = vtanh.pop %v2391
    %v2393 = vmul.f32 %v2387, %v2392
    %2394 = vst [vmem:[#allocation2 + $0x8] sm:$0xff] %v2393
    %2395 = vmatpush.msra.mxu0 %v2091
    %2396 = vmatpush.msra.mxu0 %v2087
    %2397 = vmatpush.msra.mxu0 %v2083
    %2398 = vmatpush.msra.mxu0 %v2079
    %2399 = vmatpush.msra.mxu0 %v2075
    %2400 = vmatpush.msra.mxu0 %v2071
    %2401 = vmatpush.msra.mxu0 %v2067
    %2402 = vmatpush.msra.mxu0 %v2063
    %2403 = vmatpush.msra.mxu0 %v2059
    %2404 = vmatpush.msra.mxu0 %v2055
    %2405 = vmatpush.msra.mxu0 %v2051
    %2406 = vmatpush.msra.mxu0 %v2047
    %2407 = vmatpush.msra.mxu0 %v2043
    %2408 = vmatpush.msra.mxu0 %v2039
    %2409 = vmatpush.msra.mxu0 %v2035
    %2410 = vmatpush.msra.mxu0 %v2031
    %2411 = vmatmul.f32.gmra.mxu0 %v2393
    %v2412 = vpop.f32.mrf.mxu0
    %v2413 = vadd.f32 0.0, %v2412
    %2414 = vdwg.mxu0
    %2415 = vmatpush.msra.mxu0 %v2092
    %2416 = vmatpush.msra.mxu0 %v2088
    %2417 = vmatpush.msra.mxu0 %v2084
    %2418 = vmatpush.msra.mxu0 %v2080
    %2419 = vmatpush.msra.mxu0 %v2076
    %2420 = vmatpush.msra.mxu0 %v2072
    %2421 = vmatpush.msra.mxu0 %v2068
    %2422 = vmatpush.msra.mxu0 %v2064
    %2423 = vmatpush.msra.mxu0 %v2060
    %2424 = vmatpush.msra.mxu0 %v2056
    %2425 = vmatpush.msra.mxu0 %v2052
    %2426 = vmatpush.msra.mxu0 %v2048
    %2427 = vmatpush.msra.mxu0 %v2044
    %2428 = vmatpush.msra.mxu0 %v2040
    %2429 = vmatpush.msra.mxu0 %v2036
    %2430 = vmatpush.msra.mxu0 %v2032
    %2431 = vmatmul.f32.gmra.mxu0 %v2393
    %v2432 = vpop.f32.mrf.mxu0
    %v2433 = vadd.f32 0.0, %v2432
    %2434 = vdwg.mxu0
    %2435 = vmatpush.msra.mxu0 %v2093
    %2436 = vmatpush.msra.mxu0 %v2089
    %2437 = vmatpush.msra.mxu0 %v2085
    %2438 = vmatpush.msra.mxu0 %v2081
    %2439 = vmatpush.msra.mxu0 %v2077
    %2440 = vmatpush.msra.mxu0 %v2073
    %2441 = vmatpush.msra.mxu0 %v2069
    %2442 = vmatpush.msra.mxu0 %v2065
    %2443 = vmatpush.msra.mxu0 %v2061
    %2444 = vmatpush.msra.mxu0 %v2057
    %2445 = vmatpush.msra.mxu0 %v2053
    %2446 = vmatpush.msra.mxu0 %v2049
    %2447 = vmatpush.msra.mxu0 %v2045
    %2448 = vmatpush.msra.mxu0 %v2041
    %2449 = vmatpush.msra.mxu0 %v2037
    %2450 = vmatpush.msra.mxu0 %v2033
    %2451 = vmatmul.f32.gmra.mxu0 %v2393
    %v2452 = vpop.f32.mrf.mxu0
    %v2453 = vadd.f32 0.0, %v2452
    %2454 = vdwg.mxu0
    %2455 = vmatpush.msra.mxu0 %v2094
    %2456 = vmatpush.msra.mxu0 %v2090
    %2457 = vmatpush.msra.mxu0 %v2086
    %2458 = vmatpush.msra.mxu0 %v2082
    %2459 = vmatpush.msra.mxu0 %v2078
    %2460 = vmatpush.msra.mxu0 %v2074
    %2461 = vmatpush.msra.mxu0 %v2070
    %2462 = vmatpush.msra.mxu0 %v2066
    %2463 = vmatpush.msra.mxu0 %v2062
    %2464 = vmatpush.msra.mxu0 %v2058
    %2465 = vmatpush.msra.mxu0 %v2054
    %2466 = vmatpush.msra.mxu0 %v2050
    %2467 = vmatpush.msra.mxu0 %v2046
    %2468 = vmatpush.msra.mxu0 %v2042
    %2469 = vmatpush.msra.mxu0 %v2038
    %2470 = vmatpush.msra.mxu0 %v2034
    %2471 = vmatmul.f32.gmra.mxu0 %v2393
    %v2472 = vpop.f32.mrf.mxu0
    %v2473 = vadd.f32 0.0, %v2472
    %2474 = vdwg.mxu0
    %v2475 = vadd.f32 %v1891, %v2413
    %v2476 = vadd.f32 %v1932, %v2433
    %v2477 = vadd.f32 %v1973, %v2453
    %v2478 = vadd.f32 %v2014, %v2473
    %v2479 = vxor.u32 %v2475, 2147483648
    %v2480 = vxor.u32 %v2476, 2147483648
    %v2481 = vxor.u32 %v2477, 2147483648
    %v2482 = vmul.f32 %v2479, 1.442695
    %v2483 = vpow.pop %v2482
    %v2484 = vmul.f32 %v2480, 1.442695
    %v2485 = vpow.pop %v2484
    %v2486 = vmul.f32 %v2481, 1.442695
    %v2487 = vpow.pop %v2486
    %v2488 = vadd.f32 %v2483, 1.0
    %v2489 = vadd.f32 %v2485, 1.0
    %v2490 = vadd.f32 %v2487, 1.0
    %v2491 = vrcp.pop %v2488
    %v2492 = vmul.f32 %v2488, %v2491
    %v2493 = vsub.f32 1.0, %v2492
    %v2494 = vmul.f32 %v2491, %v2493
    %v2495 = vadd.f32 %v2491, %v2494
    %vm2496 = vweird.f32 %v2488
    %vm2497 = vweird.f32 %v2491
    %vm2498 = vmor %vm2496, %vm2497
    %v2499 = vsel %vm2498, %v2491, %v2495
    %v2500 = vand.u32 2147483647, %v2488
    %vm2501 = vcmp.eq.f32.partialorder %v2500, 8.507059e+37
    %v2502 = vand.u32 %v2488, 2147483648
    %v2503 = vor.u32 1.1754944e-38, %v2502
    %v2504 = vsel %vm2501, %v2503, %v2499
    %v2505 = vmul.f32 1.0, %v2504
    %v2506 = vrcp.pop %v2489
    %v2507 = vmul.f32 %v2489, %v2506
    %v2508 = vsub.f32 1.0, %v2507
    %v2509 = vmul.f32 %v2506, %v2508
    %v2510 = vadd.f32 %v2506, %v2509
    %vm2511 = vweird.f32 %v2489
    %vm2512 = vweird.f32 %v2506
    %vm2513 = vmor %vm2511, %vm2512
    %v2514 = vsel %vm2513, %v2506, %v2510
    %v2515 = vand.u32 2147483647, %v2489
    %vm2516 = vcmp.eq.f32.partialorder %v2515, 8.507059e+37
    %v2517 = vand.u32 %v2489, 2147483648
    %v2518 = vor.u32 1.1754944e-38, %v2517
    %v2519 = vsel %vm2516, %v2518, %v2514
    %v2520 = vmul.f32 1.0, %v2519
    %v2521 = vrcp.pop %v2490
    %v2522 = vmul.f32 %v2490, %v2521
    %v2523 = vsub.f32 1.0, %v2522
    %v2524 = vmul.f32 %v2521, %v2523
    %v2525 = vadd.f32 %v2521, %v2524
    %vm2526 = vweird.f32 %v2490
    %vm2527 = vweird.f32 %v2521
    %vm2528 = vmor %vm2526, %vm2527
    %v2529 = vsel %vm2528, %v2521, %v2525
    %v2530 = vand.u32 2147483647, %v2490
    %vm2531 = vcmp.eq.f32.partialorder %v2530, 8.507059e+37
    %v2532 = vand.u32 %v2490, 2147483648
    %v2533 = vor.u32 1.1754944e-38, %v2532
    %v2534 = vsel %vm2531, %v2533, %v2529
    %v2535 = vmul.f32 1.0, %v2534
    %v2536 = vtanh.pop %v2478
    %v2537 = vmul.f32 %v2520, %v2391
    %v2538 = vmul.f32 %v2505, %v2536
    %v2539 = vadd.f32 %v2537, %v2538
    %v2540 = vtanh.pop %v2539
    %v2541 = vmul.f32 %v2535, %v2540
    %2542 = vst [vmem:[#allocation2 + $0x10] sm:$0xff] %v2541
    %2543 = vmatpush.msra.mxu0 %v2091
    %2544 = vmatpush.msra.mxu0 %v2087
    %2545 = vmatpush.msra.mxu0 %v2083
    %2546 = vmatpush.msra.mxu0 %v2079
    %2547 = vmatpush.msra.mxu0 %v2075
    %2548 = vmatpush.msra.mxu0 %v2071
    %2549 = vmatpush.msra.mxu0 %v2067
    %2550 = vmatpush.msra.mxu0 %v2063
    %2551 = vmatpush.msra.mxu0 %v2059
    %2552 = vmatpush.msra.mxu0 %v2055
    %2553 = vmatpush.msra.mxu0 %v2051
    %2554 = vmatpush.msra.mxu0 %v2047
    %2555 = vmatpush.msra.mxu0 %v2043
    %2556 = vmatpush.msra.mxu0 %v2039
    %2557 = vmatpush.msra.mxu0 %v2035
    %2558 = vmatpush.msra.mxu0 %v2031
    %2559 = vmatmul.f32.gmra.mxu0 %v2541
    %v2560 = vpop.f32.mrf.mxu0
    %v2561 = vadd.f32 0.0, %v2560
    %2562 = vdwg.mxu0
    %2563 = vmatpush.msra.mxu0 %v2092
    %2564 = vmatpush.msra.mxu0 %v2088
    %2565 = vmatpush.msra.mxu0 %v2084
    %2566 = vmatpush.msra.mxu0 %v2080
    %2567 = vmatpush.msra.mxu0 %v2076
    %2568 = vmatpush.msra.mxu0 %v2072
    %2569 = vmatpush.msra.mxu0 %v2068
    %2570 = vmatpush.msra.mxu0 %v2064
    %2571 = vmatpush.msra.mxu0 %v2060
    %2572 = vmatpush.msra.mxu0 %v2056
    %2573 = vmatpush.msra.mxu0 %v2052
    %2574 = vmatpush.msra.mxu0 %v2048
    %2575 = vmatpush.msra.mxu0 %v2044
    %2576 = vmatpush.msra.mxu0 %v2040
    %2577 = vmatpush.msra.mxu0 %v2036
    %2578 = vmatpush.msra.mxu0 %v2032
    %2579 = vmatmul.f32.gmra.mxu0 %v2541
    %v2580 = vpop.f32.mrf.mxu0
    %v2581 = vadd.f32 0.0, %v2580
    %2582 = vdwg.mxu0
    %2583 = vmatpush.msra.mxu0 %v2093
    %2584 = vmatpush.msra.mxu0 %v2089
    %2585 = vmatpush.msra.mxu0 %v2085
    %2586 = vmatpush.msra.mxu0 %v2081
    %2587 = vmatpush.msra.mxu0 %v2077
    %2588 = vmatpush.msra.mxu0 %v2073
    %2589 = vmatpush.msra.mxu0 %v2069
    %2590 = vmatpush.msra.mxu0 %v2065
    %2591 = vmatpush.msra.mxu0 %v2061
    %2592 = vmatpush.msra.mxu0 %v2057
    %2593 = vmatpush.msra.mxu0 %v2053
    %2594 = vmatpush.msra.mxu0 %v2049
    %2595 = vmatpush.msra.mxu0 %v2045
    %2596 = vmatpush.msra.mxu0 %v2041
    %2597 = vmatpush.msra.mxu0 %v2037
    %2598 = vmatpush.msra.mxu0 %v2033
    %2599 = vmatmul.f32.gmra.mxu0 %v2541
    %v2600 = vpop.f32.mrf.mxu0
    %v2601 = vadd.f32 0.0, %v2600
    %2602 = vdwg.mxu0
    %2603 = vmatpush.msra.mxu0 %v2094
    %2604 = vmatpush.msra.mxu0 %v2090
    %2605 = vmatpush.msra.mxu0 %v2086
    %2606 = vmatpush.msra.mxu0 %v2082
    %2607 = vmatpush.msra.mxu0 %v2078
    %2608 = vmatpush.msra.mxu0 %v2074
    %2609 = vmatpush.msra.mxu0 %v2070
    %2610 = vmatpush.msra.mxu0 %v2066
    %2611 = vmatpush.msra.mxu0 %v2062
    %2612 = vmatpush.msra.mxu0 %v2058
    %2613 = vmatpush.msra.mxu0 %v2054
    %2614 = vmatpush.msra.mxu0 %v2050
    %2615 = vmatpush.msra.mxu0 %v2046
    %2616 = vmatpush.msra.mxu0 %v2042
    %2617 = vmatpush.msra.mxu0 %v2038
    %2618 = vmatpush.msra.mxu0 %v2034
    %2619 = vmatmul.f32.gmra.mxu0 %v2541
    %v2620 = vpop.f32.mrf.mxu0
    %v2621 = vadd.f32 0.0, %v2620
    %2622 = vdwg.mxu0
    %v2623 = vadd.f32 %v1894, %v2561
    %v2624 = vadd.f32 %v1935, %v2581
    %v2625 = vadd.f32 %v1976, %v2601
    %v2626 = vadd.f32 %v2017, %v2621
    %v2627 = vxor.u32 %v2623, 2147483648
    %v2628 = vxor.u32 %v2624, 2147483648
    %v2629 = vxor.u32 %v2625, 2147483648
    %v2630 = vmul.f32 %v2627, 1.442695
    %v2631 = vpow.pop %v2630
    %v2632 = vmul.f32 %v2628, 1.442695
    %v2633 = vpow.pop %v2632
    %v2634 = vmul.f32 %v2629, 1.442695
    %v2635 = vpow.pop %v2634
    %v2636 = vadd.f32 %v2631, 1.0
    %v2637 = vadd.f32 %v2633, 1.0
    %v2638 = vadd.f32 %v2635, 1.0
    %v2639 = vrcp.pop %v2636
    %v2640 = vmul.f32 %v2636, %v2639
    %v2641 = vsub.f32 1.0, %v2640
    %v2642 = vmul.f32 %v2639, %v2641
    %v2643 = vadd.f32 %v2639, %v2642
    %vm2644 = vweird.f32 %v2636
    %vm2645 = vweird.f32 %v2639
    %vm2646 = vmor %vm2644, %vm2645
    %v2647 = vsel %vm2646, %v2639, %v2643
    %v2648 = vand.u32 2147483647, %v2636
    %vm2649 = vcmp.eq.f32.partialorder %v2648, 8.507059e+37
    %v2650 = vand.u32 %v2636, 2147483648
    %v2651 = vor.u32 1.1754944e-38, %v2650
    %v2652 = vsel %vm2649, %v2651, %v2647
    %v2653 = vmul.f32 1.0, %v2652
    %v2654 = vrcp.pop %v2637
    %v2655 = vmul.f32 %v2637, %v2654
    %v2656 = vsub.f32 1.0, %v2655
    %v2657 = vmul.f32 %v2654, %v2656
    %v2658 = vadd.f32 %v2654, %v2657
    %vm2659 = vweird.f32 %v2637
    %vm2660 = vweird.f32 %v2654
    %vm2661 = vmor %vm2659, %vm2660
    %v2662 = vsel %vm2661, %v2654, %v2658
    %v2663 = vand.u32 2147483647, %v2637
    %vm2664 = vcmp.eq.f32.partialorder %v2663, 8.507059e+37
    %v2665 = vand.u32 %v2637, 2147483648
    %v2666 = vor.u32 1.1754944e-38, %v2665
    %v2667 = vsel %vm2664, %v2666, %v2662
    %v2668 = vmul.f32 1.0, %v2667
    %v2669 = vrcp.pop %v2638
    %v2670 = vmul.f32 %v2638, %v2669
    %v2671 = vsub.f32 1.0, %v2670
    %v2672 = vmul.f32 %v2669, %v2671
    %v2673 = vadd.f32 %v2669, %v2672
    %vm2674 = vweird.f32 %v2638
    %vm2675 = vweird.f32 %v2669
    %vm2676 = vmor %vm2674, %vm2675
    %v2677 = vsel %vm2676, %v2669, %v2673
    %v2678 = vand.u32 2147483647, %v2638
    %vm2679 = vcmp.eq.f32.partialorder %v2678, 8.507059e+37
    %v2680 = vand.u32 %v2638, 2147483648
    %v2681 = vor.u32 1.1754944e-38, %v2680
    %v2682 = vsel %vm2679, %v2681, %v2677
    %v2683 = vmul.f32 1.0, %v2682
    %v2684 = vtanh.pop %v2626
    %v2685 = vmul.f32 %v2668, %v2539
    %v2686 = vmul.f32 %v2653, %v2684
    %v2687 = vadd.f32 %v2685, %v2686
    %v2688 = vtanh.pop %v2687
    %v2689 = vmul.f32 %v2683, %v2688
    %2690 = vst [vmem:[#allocation2 + $0x18] sm:$0xff] %v2689
    %2691 = vmatpush.msra.mxu0 %v2091
    %2692 = vmatpush.msra.mxu0 %v2087
    %2693 = vmatpush.msra.mxu0 %v2083
    %2694 = vmatpush.msra.mxu0 %v2079
    %2695 = vmatpush.msra.mxu0 %v2075
    %2696 = vmatpush.msra.mxu0 %v2071
    %2697 = vmatpush.msra.mxu0 %v2067
    %2698 = vmatpush.msra.mxu0 %v2063
    %2699 = vmatpush.msra.mxu0 %v2059
    %2700 = vmatpush.msra.mxu0 %v2055
    %2701 = vmatpush.msra.mxu0 %v2051
    %2702 = vmatpush.msra.mxu0 %v2047
    %2703 = vmatpush.msra.mxu0 %v2043
    %2704 = vmatpush.msra.mxu0 %v2039
    %2705 = vmatpush.msra.mxu0 %v2035
    %2706 = vmatpush.msra.mxu0 %v2031
    %2707 = vmatmul.f32.gmra.mxu0 %v2689
    %v2708 = vpop.f32.mrf.mxu0
    %v2709 = vadd.f32 0.0, %v2708
    %2710 = vdwg.mxu0
    %2711 = vmatpush.msra.mxu0 %v2092
    %2712 = vmatpush.msra.mxu0 %v2088
    %2713 = vmatpush.msra.mxu0 %v2084
    %2714 = vmatpush.msra.mxu0 %v2080
    %2715 = vmatpush.msra.mxu0 %v2076
    %2716 = vmatpush.msra.mxu0 %v2072
    %2717 = vmatpush.msra.mxu0 %v2068
    %2718 = vmatpush.msra.mxu0 %v2064
    %2719 = vmatpush.msra.mxu0 %v2060
    %2720 = vmatpush.msra.mxu0 %v2056
    %2721 = vmatpush.msra.mxu0 %v2052
    %2722 = vmatpush.msra.mxu0 %v2048
    %2723 = vmatpush.msra.mxu0 %v2044
    %2724 = vmatpush.msra.mxu0 %v2040
    %2725 = vmatpush.msra.mxu0 %v2036
    %2726 = vmatpush.msra.mxu0 %v2032
    %2727 = vmatmul.f32.gmra.mxu0 %v2689
    %v2728 = vpop.f32.mrf.mxu0
    %v2729 = vadd.f32 0.0, %v2728
    %2730 = vdwg.mxu0
    %2731 = vmatpush.msra.mxu0 %v2093
    %2732 = vmatpush.msra.mxu0 %v2089
    %2733 = vmatpush.msra.mxu0 %v2085
    %2734 = vmatpush.msra.mxu0 %v2081
    %2735 = vmatpush.msra.mxu0 %v2077
    %2736 = vmatpush.msra.mxu0 %v2073
    %2737 = vmatpush.msra.mxu0 %v2069
    %2738 = vmatpush.msra.mxu0 %v2065
    %2739 = vmatpush.msra.mxu0 %v2061
    %2740 = vmatpush.msra.mxu0 %v2057
    %2741 = vmatpush.msra.mxu0 %v2053
    %2742 = vmatpush.msra.mxu0 %v2049
    %2743 = vmatpush.msra.mxu0 %v2045
    %2744 = vmatpush.msra.mxu0 %v2041
    %2745 = vmatpush.msra.mxu0 %v2037
    %2746 = vmatpush.msra.mxu0 %v2033
    %2747 = vmatmul.f32.gmra.mxu0 %v2689
    %v2748 = vpop.f32.mrf.mxu0
    %v2749 = vadd.f32 0.0, %v2748
    %2750 = vdwg.mxu0
    %2751 = vmatpush.msra.mxu0 %v2094
    %2752 = vmatpush.msra.mxu0 %v2090
    %2753 = vmatpush.msra.mxu0 %v2086
    %2754 = vmatpush.msra.mxu0 %v2082
    %2755 = vmatpush.msra.mxu0 %v2078
    %2756 = vmatpush.msra.mxu0 %v2074
    %2757 = vmatpush.msra.mxu0 %v2070
    %2758 = vmatpush.msra.mxu0 %v2066
    %2759 = vmatpush.msra.mxu0 %v2062
    %2760 = vmatpush.msra.mxu0 %v2058
    %2761 = vmatpush.msra.mxu0 %v2054
    %2762 = vmatpush.msra.mxu0 %v2050
    %2763 = vmatpush.msra.mxu0 %v2046
    %2764 = vmatpush.msra.mxu0 %v2042
    %2765 = vmatpush.msra.mxu0 %v2038
    %2766 = vmatpush.msra.mxu0 %v2034
    %2767 = vmatmul.f32.gmra.mxu0 %v2689
    %v2768 = vpop.f32.mrf.mxu0
    %v2769 = vadd.f32 0.0, %v2768
    %2770 = vdwg.mxu0
    %v2771 = vadd.f32 %v1897, %v2709
    %v2772 = vadd.f32 %v1938, %v2729
    %v2773 = vadd.f32 %v1979, %v2749
    %v2774 = vadd.f32 %v2020, %v2769
    %v2775 = vxor.u32 %v2771, 2147483648
    %v2776 = vxor.u32 %v2772, 2147483648
    %v2777 = vxor.u32 %v2773, 2147483648
    %v2778 = vmul.f32 %v2775, 1.442695
    %v2779 = vpow.pop %v2778
    %v2780 = vmul.f32 %v2776, 1.442695
    %v2781 = vpow.pop %v2780
    %v2782 = vmul.f32 %v2777, 1.442695
    %v2783 = vpow.pop %v2782
    %v2784 = vadd.f32 %v2779, 1.0
    %v2785 = vadd.f32 %v2781, 1.0
    %v2786 = vadd.f32 %v2783, 1.0
    %v2787 = vrcp.pop %v2784
    %v2788 = vmul.f32 %v2784, %v2787
    %v2789 = vsub.f32 1.0, %v2788
    %v2790 = vmul.f32 %v2787, %v2789
    %v2791 = vadd.f32 %v2787, %v2790
    %vm2792 = vweird.f32 %v2784
    %vm2793 = vweird.f32 %v2787
    %vm2794 = vmor %vm2792, %vm2793
    %v2795 = vsel %vm2794, %v2787, %v2791
    %v2796 = vand.u32 2147483647, %v2784
    %vm2797 = vcmp.eq.f32.partialorder %v2796, 8.507059e+37
    %v2798 = vand.u32 %v2784, 2147483648
    %v2799 = vor.u32 1.1754944e-38, %v2798
    %v2800 = vsel %vm2797, %v2799, %v2795
    %v2801 = vmul.f32 1.0, %v2800
    %v2802 = vrcp.pop %v2785
    %v2803 = vmul.f32 %v2785, %v2802
    %v2804 = vsub.f32 1.0, %v2803
    %v2805 = vmul.f32 %v2802, %v2804
    %v2806 = vadd.f32 %v2802, %v2805
    %vm2807 = vweird.f32 %v2785
    %vm2808 = vweird.f32 %v2802
    %vm2809 = vmor %vm2807, %vm2808
    %v2810 = vsel %vm2809, %v2802, %v2806
    %v2811 = vand.u32 2147483647, %v2785
    %vm2812 = vcmp.eq.f32.partialorder %v2811, 8.507059e+37
    %v2813 = vand.u32 %v2785, 2147483648
    %v2814 = vor.u32 1.1754944e-38, %v2813
    %v2815 = vsel %vm2812, %v2814, %v2810
    %v2816 = vmul.f32 1.0, %v2815
    %v2817 = vrcp.pop %v2786
    %v2818 = vmul.f32 %v2786, %v2817
    %v2819 = vsub.f32 1.0, %v2818
    %v2820 = vmul.f32 %v2817, %v2819
    %v2821 = vadd.f32 %v2817, %v2820
    %vm2822 = vweird.f32 %v2786
    %vm2823 = vweird.f32 %v2817
    %vm2824 = vmor %vm2822, %vm2823
    %v2825 = vsel %vm2824, %v2817, %v2821
    %v2826 = vand.u32 2147483647, %v2786
    %vm2827 = vcmp.eq.f32.partialorder %v2826, 8.507059e+37
    %v2828 = vand.u32 %v2786, 2147483648
    %v2829 = vor.u32 1.1754944e-38, %v2828
    %v2830 = vsel %vm2827, %v2829, %v2825
    %v2831 = vmul.f32 1.0, %v2830
    %v2832 = vtanh.pop %v2774
    %v2833 = vmul.f32 %v2816, %v2687
    %v2834 = vmul.f32 %v2801, %v2832
    %v2835 = vadd.f32 %v2833, %v2834
    %v2836 = vtanh.pop %v2835
    %v2837 = vmul.f32 %v2831, %v2836
    %2838 = vst [vmem:[#allocation2 + $0x20] sm:$0xff] %v2837
    %2839 = vmatpush.msra.mxu0 %v2091
    %2840 = vmatpush.msra.mxu0 %v2087
    %2841 = vmatpush.msra.mxu0 %v2083
    %2842 = vmatpush.msra.mxu0 %v2079
    %2843 = vmatpush.msra.mxu0 %v2075
    %2844 = vmatpush.msra.mxu0 %v2071
    %2845 = vmatpush.msra.mxu0 %v2067
    %2846 = vmatpush.msra.mxu0 %v2063
    %2847 = vmatpush.msra.mxu0 %v2059
    %2848 = vmatpush.msra.mxu0 %v2055
    %2849 = vmatpush.msra.mxu0 %v2051
    %2850 = vmatpush.msra.mxu0 %v2047
    %2851 = vmatpush.msra.mxu0 %v2043
    %2852 = vmatpush.msra.mxu0 %v2039
    %2853 = vmatpush.msra.mxu0 %v2035
    %2854 = vmatpush.msra.mxu0 %v2031
    %2855 = vmatmul.f32.gmra.mxu0 %v2837
    %v2856 = vpop.f32.mrf.mxu0
    %v2857 = vadd.f32 0.0, %v2856
    %2858 = vdwg.mxu0
    %2859 = vmatpush.msra.mxu0 %v2092
    %2860 = vmatpush.msra.mxu0 %v2088
    %2861 = vmatpush.msra.mxu0 %v2084
    %2862 = vmatpush.msra.mxu0 %v2080
    %2863 = vmatpush.msra.mxu0 %v2076
    %2864 = vmatpush.msra.mxu0 %v2072
    %2865 = vmatpush.msra.mxu0 %v2068
    %2866 = vmatpush.msra.mxu0 %v2064
    %2867 = vmatpush.msra.mxu0 %v2060
    %2868 = vmatpush.msra.mxu0 %v2056
    %2869 = vmatpush.msra.mxu0 %v2052
    %2870 = vmatpush.msra.mxu0 %v2048
    %2871 = vmatpush.msra.mxu0 %v2044
    %2872 = vmatpush.msra.mxu0 %v2040
    %2873 = vmatpush.msra.mxu0 %v2036
    %2874 = vmatpush.msra.mxu0 %v2032
    %2875 = vmatmul.f32.gmra.mxu0 %v2837
    %v2876 = vpop.f32.mrf.mxu0
    %v2877 = vadd.f32 0.0, %v2876
    %2878 = vdwg.mxu0
    %2879 = vmatpush.msra.mxu0 %v2093
    %2880 = vmatpush.msra.mxu0 %v2089
    %2881 = vmatpush.msra.mxu0 %v2085
    %2882 = vmatpush.msra.mxu0 %v2081
    %2883 = vmatpush.msra.mxu0 %v2077
    %2884 = vmatpush.msra.mxu0 %v2073
    %2885 = vmatpush.msra.mxu0 %v2069
    %2886 = vmatpush.msra.mxu0 %v2065
    %2887 = vmatpush.msra.mxu0 %v2061
    %2888 = vmatpush.msra.mxu0 %v2057
    %2889 = vmatpush.msra.mxu0 %v2053
    %2890 = vmatpush.msra.mxu0 %v2049
    %2891 = vmatpush.msra.mxu0 %v2045
    %2892 = vmatpush.msra.mxu0 %v2041
    %2893 = vmatpush.msra.mxu0 %v2037
    %2894 = vmatpush.msra.mxu0 %v2033
    %2895 = vmatmul.f32.gmra.mxu0 %v2837
    %v2896 = vpop.f32.mrf.mxu0
    %v2897 = vadd.f32 0.0, %v2896
    %2898 = vdwg.mxu0
    %2899 = vmatpush.msra.mxu0 %v2094
    %2900 = vmatpush.msra.mxu0 %v2090
    %2901 = vmatpush.msra.mxu0 %v2086
    %2902 = vmatpush.msra.mxu0 %v2082
    %2903 = vmatpush.msra.mxu0 %v2078
    %2904 = vmatpush.msra.mxu0 %v2074
    %2905 = vmatpush.msra.mxu0 %v2070
    %2906 = vmatpush.msra.mxu0 %v2066
    %2907 = vmatpush.msra.mxu0 %v2062
    %2908 = vmatpush.msra.mxu0 %v2058
    %2909 = vmatpush.msra.mxu0 %v2054
    %2910 = vmatpush.msra.mxu0 %v2050
    %2911 = vmatpush.msra.mxu0 %v2046
    %2912 = vmatpush.msra.mxu0 %v2042
    %2913 = vmatpush.msra.mxu0 %v2038
    %2914 = vmatpush.msra.mxu0 %v2034
    %2915 = vmatmul.f32.gmra.mxu0 %v2837
    %v2916 = vpop.f32.mrf.mxu0
    %v2917 = vadd.f32 0.0, %v2916
    %2918 = vdwg.mxu0
    %v2919 = vadd.f32 %v1900, %v2857
    %v2920 = vadd.f32 %v1941, %v2877
    %v2921 = vadd.f32 %v1982, %v2897
    %v2922 = vadd.f32 %v2023, %v2917
    %v2923 = vxor.u32 %v2919, 2147483648
    %v2924 = vxor.u32 %v2920, 2147483648
    %v2925 = vxor.u32 %v2921, 2147483648
    %v2926 = vmul.f32 %v2923, 1.442695
    %v2927 = vpow.pop %v2926
    %v2928 = vmul.f32 %v2924, 1.442695
    %v2929 = vpow.pop %v2928
    %v2930 = vmul.f32 %v2925, 1.442695
    %v2931 = vpow.pop %v2930
    %v2932 = vadd.f32 %v2927, 1.0
    %v2933 = vadd.f32 %v2929, 1.0
    %v2934 = vadd.f32 %v2931, 1.0
    %v2935 = vrcp.pop %v2932
    %v2936 = vmul.f32 %v2932, %v2935
    %v2937 = vsub.f32 1.0, %v2936
    %v2938 = vmul.f32 %v2935, %v2937
    %v2939 = vadd.f32 %v2935, %v2938
    %vm2940 = vweird.f32 %v2932
    %vm2941 = vweird.f32 %v2935
    %vm2942 = vmor %vm2940, %vm2941
    %v2943 = vsel %vm2942, %v2935, %v2939
    %v2944 = vand.u32 2147483647, %v2932
    %vm2945 = vcmp.eq.f32.partialorder %v2944, 8.507059e+37
    %v2946 = vand.u32 %v2932, 2147483648
    %v2947 = vor.u32 1.1754944e-38, %v2946
    %v2948 = vsel %vm2945, %v2947, %v2943
    %v2949 = vmul.f32 1.0, %v2948
    %v2950 = vrcp.pop %v2933
    %v2951 = vmul.f32 %v2933, %v2950
    %v2952 = vsub.f32 1.0, %v2951
    %v2953 = vmul.f32 %v2950, %v2952
    %v2954 = vadd.f32 %v2950, %v2953
    %vm2955 = vweird.f32 %v2933
    %vm2956 = vweird.f32 %v2950
    %vm2957 = vmor %vm2955, %vm2956
    %v2958 = vsel %vm2957, %v2950, %v2954
    %v2959 = vand.u32 2147483647, %v2933
    %vm2960 = vcmp.eq.f32.partialorder %v2959, 8.507059e+37
    %v2961 = vand.u32 %v2933, 2147483648
    %v2962 = vor.u32 1.1754944e-38, %v2961
    %v2963 = vsel %vm2960, %v2962, %v2958
    %v2964 = vmul.f32 1.0, %v2963
    %v2965 = vrcp.pop %v2934
    %v2966 = vmul.f32 %v2934, %v2965
    %v2967 = vsub.f32 1.0, %v2966
    %v2968 = vmul.f32 %v2965, %v2967
    %v2969 = vadd.f32 %v2965, %v2968
    %vm2970 = vweird.f32 %v2934
    %vm2971 = vweird.f32 %v2965
    %vm2972 = vmor %vm2970, %vm2971
    %v2973 = vsel %vm2972, %v2965, %v2969
    %v2974 = vand.u32 2147483647, %v2934
    %vm2975 = vcmp.eq.f32.partialorder %v2974, 8.507059e+37
    %v2976 = vand.u32 %v2934, 2147483648
    %v2977 = vor.u32 1.1754944e-38, %v2976
    %v2978 = vsel %vm2975, %v2977, %v2973
    %v2979 = vmul.f32 1.0, %v2978
    %v2980 = vtanh.pop %v2922
    %v2981 = vmul.f32 %v2964, %v2835
    %v2982 = vmul.f32 %v2949, %v2980
    %v2983 = vadd.f32 %v2981, %v2982
    %v2984 = vtanh.pop %v2983
    %v2985 = vmul.f32 %v2979, %v2984
    %2986 = vst [vmem:[#allocation2 + $0x28] sm:$0xff] %v2985
    %2987 = vmatpush.msra.mxu0 %v2091
    %2988 = vmatpush.msra.mxu0 %v2087
    %2989 = vmatpush.msra.mxu0 %v2083
    %2990 = vmatpush.msra.mxu0 %v2079
    %2991 = vmatpush.msra.mxu0 %v2075
    %2992 = vmatpush.msra.mxu0 %v2071
    %2993 = vmatpush.msra.mxu0 %v2067
    %2994 = vmatpush.msra.mxu0 %v2063
    %2995 = vmatpush.msra.mxu0 %v2059
    %2996 = vmatpush.msra.mxu0 %v2055
    %2997 = vmatpush.msra.mxu0 %v2051
    %2998 = vmatpush.msra.mxu0 %v2047
    %2999 = vmatpush.msra.mxu0 %v2043
    %3000 = vmatpush.msra.mxu0 %v2039
    %3001 = vmatpush.msra.mxu0 %v2035
    %3002 = vmatpush.msra.mxu0 %v2031
    %3003 = vmatmul.f32.gmra.mxu0 %v2985
    %v3004 = vpop.f32.mrf.mxu0
    %v3005 = vadd.f32 0.0, %v3004
    %3006 = vdwg.mxu0
    %3007 = vmatpush.msra.mxu0 %v2092
    %3008 = vmatpush.msra.mxu0 %v2088
    %3009 = vmatpush.msra.mxu0 %v2084
    %3010 = vmatpush.msra.mxu0 %v2080
    %3011 = vmatpush.msra.mxu0 %v2076
    %3012 = vmatpush.msra.mxu0 %v2072
    %3013 = vmatpush.msra.mxu0 %v2068
    %3014 = vmatpush.msra.mxu0 %v2064
    %3015 = vmatpush.msra.mxu0 %v2060
    %3016 = vmatpush.msra.mxu0 %v2056
    %3017 = vmatpush.msra.mxu0 %v2052
    %3018 = vmatpush.msra.mxu0 %v2048
    %3019 = vmatpush.msra.mxu0 %v2044
    %3020 = vmatpush.msra.mxu0 %v2040
    %3021 = vmatpush.msra.mxu0 %v2036
    %3022 = vmatpush.msra.mxu0 %v2032
    %3023 = vmatmul.f32.gmra.mxu0 %v2985
    %v3024 = vpop.f32.mrf.mxu0
    %v3025 = vadd.f32 0.0, %v3024
    %3026 = vdwg.mxu0
    %3027 = vmatpush.msra.mxu0 %v2093
    %3028 = vmatpush.msra.mxu0 %v2089
    %3029 = vmatpush.msra.mxu0 %v2085
    %3030 = vmatpush.msra.mxu0 %v2081
    %3031 = vmatpush.msra.mxu0 %v2077
    %3032 = vmatpush.msra.mxu0 %v2073
    %3033 = vmatpush.msra.mxu0 %v2069
    %3034 = vmatpush.msra.mxu0 %v2065
    %3035 = vmatpush.msra.mxu0 %v2061
    %3036 = vmatpush.msra.mxu0 %v2057
    %3037 = vmatpush.msra.mxu0 %v2053
    %3038 = vmatpush.msra.mxu0 %v2049
    %3039 = vmatpush.msra.mxu0 %v2045
    %3040 = vmatpush.msra.mxu0 %v2041
    %3041 = vmatpush.msra.mxu0 %v2037
    %3042 = vmatpush.msra.mxu0 %v2033
    %3043 = vmatmul.f32.gmra.mxu0 %v2985
    %v3044 = vpop.f32.mrf.mxu0
    %v3045 = vadd.f32 0.0, %v3044
    %3046 = vdwg.mxu0
    %3047 = vmatpush.msra.mxu0 %v2094
    %3048 = vmatpush.msra.mxu0 %v2090
    %3049 = vmatpush.msra.mxu0 %v2086
    %3050 = vmatpush.msra.mxu0 %v2082
    %3051 = vmatpush.msra.mxu0 %v2078
    %3052 = vmatpush.msra.mxu0 %v2074
    %3053 = vmatpush.msra.mxu0 %v2070
    %3054 = vmatpush.msra.mxu0 %v2066
    %3055 = vmatpush.msra.mxu0 %v2062
    %3056 = vmatpush.msra.mxu0 %v2058
    %3057 = vmatpush.msra.mxu0 %v2054
    %3058 = vmatpush.msra.mxu0 %v2050
    %3059 = vmatpush.msra.mxu0 %v2046
    %3060 = vmatpush.msra.mxu0 %v2042
    %3061 = vmatpush.msra.mxu0 %v2038
    %3062 = vmatpush.msra.mxu0 %v2034
    %3063 = vmatmul.f32.gmra.mxu0 %v2985
    %v3064 = vpop.f32.mrf.mxu0
    %v3065 = vadd.f32 0.0, %v3064
    %3066 = vdwg.mxu0
    %v3067 = vadd.f32 %v1903, %v3005
    %v3068 = vadd.f32 %v1944, %v3025
    %v3069 = vadd.f32 %v1985, %v3045
    %v3070 = vadd.f32 %v2026, %v3065
    %v3071 = vxor.u32 %v3067, 2147483648
    %v3072 = vxor.u32 %v3068, 2147483648
    %v3073 = vxor.u32 %v3069, 2147483648
    %v3074 = vmul.f32 %v3071, 1.442695
    %v3075 = vpow.pop %v3074
    %v3076 = vmul.f32 %v3072, 1.442695
    %v3077 = vpow.pop %v3076
    %v3078 = vmul.f32 %v3073, 1.442695
    %v3079 = vpow.pop %v3078
    %v3080 = vadd.f32 %v3075, 1.0
    %v3081 = vadd.f32 %v3077, 1.0
    %v3082 = vadd.f32 %v3079, 1.0
    %v3083 = vrcp.pop %v3080
    %v3084 = vmul.f32 %v3080, %v3083
    %v3085 = vsub.f32 1.0, %v3084
    %v3086 = vmul.f32 %v3083, %v3085
    %v3087 = vadd.f32 %v3083, %v3086
    %vm3088 = vweird.f32 %v3080
    %vm3089 = vweird.f32 %v3083
    %vm3090 = vmor %vm3088, %vm3089
    %v3091 = vsel %vm3090, %v3083, %v3087
    %v3092 = vand.u32 2147483647, %v3080
    %vm3093 = vcmp.eq.f32.partialorder %v3092, 8.507059e+37
    %v3094 = vand.u32 %v3080, 2147483648
    %v3095 = vor.u32 1.1754944e-38, %v3094
    %v3096 = vsel %vm3093, %v3095, %v3091
    %v3097 = vmul.f32 1.0, %v3096
    %v3098 = vrcp.pop %v3081
    %v3099 = vmul.f32 %v3081, %v3098
    %v3100 = vsub.f32 1.0, %v3099
    %v3101 = vmul.f32 %v3098, %v3100
    %v3102 = vadd.f32 %v3098, %v3101
    %vm3103 = vweird.f32 %v3081
    %vm3104 = vweird.f32 %v3098
    %vm3105 = vmor %vm3103, %vm3104
    %v3106 = vsel %vm3105, %v3098, %v3102
    %v3107 = vand.u32 2147483647, %v3081
    %vm3108 = vcmp.eq.f32.partialorder %v3107, 8.507059e+37
    %v3109 = vand.u32 %v3081, 2147483648
    %v3110 = vor.u32 1.1754944e-38, %v3109
    %v3111 = vsel %vm3108, %v3110, %v3106
    %v3112 = vmul.f32 1.0, %v3111
    %v3113 = vrcp.pop %v3082
    %v3114 = vmul.f32 %v3082, %v3113
    %v3115 = vsub.f32 1.0, %v3114
    %v3116 = vmul.f32 %v3113, %v3115
    %v3117 = vadd.f32 %v3113, %v3116
    %vm3118 = vweird.f32 %v3082
    %vm3119 = vweird.f32 %v3113
    %vm3120 = vmor %vm3118, %vm3119
    %v3121 = vsel %vm3120, %v3113, %v3117
    %v3122 = vand.u32 2147483647, %v3082
    %vm3123 = vcmp.eq.f32.partialorder %v3122, 8.507059e+37
    %v3124 = vand.u32 %v3082, 2147483648
    %v3125 = vor.u32 1.1754944e-38, %v3124
    %v3126 = vsel %vm3123, %v3125, %v3121
    %v3127 = vmul.f32 1.0, %v3126
    %v3128 = vtanh.pop %v3070
    %v3129 = vmul.f32 %v3112, %v2983
    %v3130 = vmul.f32 %v3097, %v3128
    %v3131 = vadd.f32 %v3129, %v3130
    %v3132 = vtanh.pop %v3131
    %v3133 = vmul.f32 %v3127, %v3132
    %3134 = vst [vmem:[#allocation2 + $0x30] sm:$0xff] %v3133
    %3135 = vmatpush.msra.mxu0 %v2091
    %3136 = vmatpush.msra.mxu0 %v2087
    %3137 = vmatpush.msra.mxu0 %v2083
    %3138 = vmatpush.msra.mxu0 %v2079
    %3139 = vmatpush.msra.mxu0 %v2075
    %3140 = vmatpush.msra.mxu0 %v2071
    %3141 = vmatpush.msra.mxu0 %v2067
    %3142 = vmatpush.msra.mxu0 %v2063
    %3143 = vmatpush.msra.mxu0 %v2059
    %3144 = vmatpush.msra.mxu0 %v2055
    %3145 = vmatpush.msra.mxu0 %v2051
    %3146 = vmatpush.msra.mxu0 %v2047
    %3147 = vmatpush.msra.mxu0 %v2043
    %3148 = vmatpush.msra.mxu0 %v2039
    %3149 = vmatpush.msra.mxu0 %v2035
    %3150 = vmatpush.msra.mxu0 %v2031
    %3151 = vmatmul.f32.gmra.mxu0 %v3133
    %v3152 = vpop.f32.mrf.mxu0
    %v3153 = vadd.f32 0.0, %v3152
    %3154 = vdwg.mxu0
    %3155 = vmatpush.msra.mxu0 %v2092
    %3156 = vmatpush.msra.mxu0 %v2088
    %3157 = vmatpush.msra.mxu0 %v2084
    %3158 = vmatpush.msra.mxu0 %v2080
    %3159 = vmatpush.msra.mxu0 %v2076
    %3160 = vmatpush.msra.mxu0 %v2072
    %3161 = vmatpush.msra.mxu0 %v2068
    %3162 = vmatpush.msra.mxu0 %v2064
    %3163 = vmatpush.msra.mxu0 %v2060
    %3164 = vmatpush.msra.mxu0 %v2056
    %3165 = vmatpush.msra.mxu0 %v2052
    %3166 = vmatpush.msra.mxu0 %v2048
    %3167 = vmatpush.msra.mxu0 %v2044
    %3168 = vmatpush.msra.mxu0 %v2040
    %3169 = vmatpush.msra.mxu0 %v2036
    %3170 = vmatpush.msra.mxu0 %v2032
    %3171 = vmatmul.f32.gmra.mxu0 %v3133
    %v3172 = vpop.f32.mrf.mxu0
    %v3173 = vadd.f32 0.0, %v3172
    %3174 = vdwg.mxu0
    %3175 = vmatpush.msra.mxu0 %v2093
    %3176 = vmatpush.msra.mxu0 %v2089
    %3177 = vmatpush.msra.mxu0 %v2085
    %3178 = vmatpush.msra.mxu0 %v2081
    %3179 = vmatpush.msra.mxu0 %v2077
    %3180 = vmatpush.msra.mxu0 %v2073
    %3181 = vmatpush.msra.mxu0 %v2069
    %3182 = vmatpush.msra.mxu0 %v2065
    %3183 = vmatpush.msra.mxu0 %v2061
    %3184 = vmatpush.msra.mxu0 %v2057
    %3185 = vmatpush.msra.mxu0 %v2053
    %3186 = vmatpush.msra.mxu0 %v2049
    %3187 = vmatpush.msra.mxu0 %v2045
    %3188 = vmatpush.msra.mxu0 %v2041
    %3189 = vmatpush.msra.mxu0 %v2037
    %3190 = vmatpush.msra.mxu0 %v2033
    %3191 = vmatmul.f32.gmra.mxu0 %v3133
    %v3192 = vpop.f32.mrf.mxu0
    %v3193 = vadd.f32 0.0, %v3192
    %3194 = vdwg.mxu0
    %3195 = vmatpush.msra.mxu0 %v2094
    %3196 = vmatpush.msra.mxu0 %v2090
    %3197 = vmatpush.msra.mxu0 %v2086
    %3198 = vmatpush.msra.mxu0 %v2082
    %3199 = vmatpush.msra.mxu0 %v2078
    %3200 = vmatpush.msra.mxu0 %v2074
    %3201 = vmatpush.msra.mxu0 %v2070
    %3202 = vmatpush.msra.mxu0 %v2066
    %3203 = vmatpush.msra.mxu0 %v2062
    %3204 = vmatpush.msra.mxu0 %v2058
    %3205 = vmatpush.msra.mxu0 %v2054
    %3206 = vmatpush.msra.mxu0 %v2050
    %3207 = vmatpush.msra.mxu0 %v2046
    %3208 = vmatpush.msra.mxu0 %v2042
    %3209 = vmatpush.msra.mxu0 %v2038
    %3210 = vmatpush.msra.mxu0 %v2034
    %3211 = vmatmul.f32.gmra.mxu0 %v3133
    %v3212 = vpop.f32.mrf.mxu0
    %v3213 = vadd.f32 0.0, %v3212
    %3214 = vdwg.mxu0
    %v3215 = vadd.f32 %v1906, %v3153
    %v3216 = vadd.f32 %v1947, %v3173
    %v3217 = vadd.f32 %v1988, %v3193
    %v3218 = vadd.f32 %v2029, %v3213
    %v3219 = vxor.u32 %v3215, 2147483648
    %v3220 = vxor.u32 %v3216, 2147483648
    %v3221 = vxor.u32 %v3217, 2147483648
    %v3222 = vmul.f32 %v3219, 1.442695
    %v3223 = vpow.pop %v3222
    %v3224 = vmul.f32 %v3220, 1.442695
    %v3225 = vpow.pop %v3224
    %v3226 = vmul.f32 %v3221, 1.442695
    %v3227 = vpow.pop %v3226
    %v3228 = vadd.f32 %v3223, 1.0
    %v3229 = vadd.f32 %v3225, 1.0
    %v3230 = vadd.f32 %v3227, 1.0
    %v3231 = vrcp.pop %v3228
    %v3232 = vmul.f32 %v3228, %v3231
    %v3233 = vsub.f32 1.0, %v3232
    %v3234 = vmul.f32 %v3231, %v3233
    %v3235 = vadd.f32 %v3231, %v3234
    %vm3236 = vweird.f32 %v3228
    %vm3237 = vweird.f32 %v3231
    %vm3238 = vmor %vm3236, %vm3237
    %v3239 = vsel %vm3238, %v3231, %v3235
    %v3240 = vand.u32 2147483647, %v3228
    %vm3241 = vcmp.eq.f32.partialorder %v3240, 8.507059e+37
    %v3242 = vand.u32 %v3228, 2147483648
    %v3243 = vor.u32 1.1754944e-38, %v3242
    %v3244 = vsel %vm3241, %v3243, %v3239
    %v3245 = vmul.f32 1.0, %v3244
    %v3246 = vrcp.pop %v3229
    %v3247 = vmul.f32 %v3229, %v3246
    %v3248 = vsub.f32 1.0, %v3247
    %v3249 = vmul.f32 %v3246, %v3248
    %v3250 = vadd.f32 %v3246, %v3249
    %vm3251 = vweird.f32 %v3229
    %vm3252 = vweird.f32 %v3246
    %vm3253 = vmor %vm3251, %vm3252
    %v3254 = vsel %vm3253, %v3246, %v3250
    %v3255 = vand.u32 2147483647, %v3229
    %vm3256 = vcmp.eq.f32.partialorder %v3255, 8.507059e+37
    %v3257 = vand.u32 %v3229, 2147483648
    %v3258 = vor.u32 1.1754944e-38, %v3257
    %v3259 = vsel %vm3256, %v3258, %v3254
    %v3260 = vmul.f32 1.0, %v3259
    %v3261 = vrcp.pop %v3230
    %v3262 = vmul.f32 %v3230, %v3261
    %v3263 = vsub.f32 1.0, %v3262
    %v3264 = vmul.f32 %v3261, %v3263
    %v3265 = vadd.f32 %v3261, %v3264
    %vm3266 = vweird.f32 %v3230
    %vm3267 = vweird.f32 %v3261
    %vm3268 = vmor %vm3266, %vm3267
    %v3269 = vsel %vm3268, %v3261, %v3265
    %v3270 = vand.u32 2147483647, %v3230
    %vm3271 = vcmp.eq.f32.partialorder %v3270, 8.507059e+37
    %v3272 = vand.u32 %v3230, 2147483648
    %v3273 = vor.u32 1.1754944e-38, %v3272
    %v3274 = vsel %vm3271, %v3273, %v3269
    %v3275 = vmul.f32 1.0, %v3274
    %v3276 = vtanh.pop %v3218
    %v3277 = vmul.f32 %v3260, %v3131
    %v3278 = vmul.f32 %v3245, %v3276
    %v3279 = vadd.f32 %v3277, %v3278
    %v3280 = vtanh.pop %v3279
    %v3281 = vmul.f32 %v3275, %v3280
    %3282 = vst [vmem:[#allocation2 + $0x38] sm:$0xff] %v3281
    %s3283 = scalar_lea.vmem [#allocation18], 8
    %3284 = vst [vmem:[%s3283] sm:$0xff] %v3281
    %s3285 = scalar_lea.vmem [#allocation20], 8
    %3286 = vst [vmem:[%s3285] sm:$0xff] %v3279
    %v3287 = vld [vmem:[#allocation2] sm:$0xff]
    %v3288 = vld [vmem:[#allocation2 + $0x8] sm:$0xff]
    %v3289 = vld [vmem:[#allocation2 + $0x10] sm:$0xff]
    %v3290 = vld [vmem:[#allocation2 + $0x18] sm:$0xff]
    %v3291 = vld [vmem:[#allocation2 + $0x20] sm:$0xff]
    %v3292 = vld [vmem:[#allocation2 + $0x28] sm:$0xff]
    %v3293 = vld [vmem:[#allocation2 + $0x30] sm:$0xff]
    %v3294 = vld [vmem:[#allocation2 + $0x38] sm:$0xff]
    %v3295 = vld [vmem:[#allocation12] sm:$0xff]
    %v3296 = vld [vmem:[#allocation12 + $0x8] sm:$0xff]
    %v3297 = vld [vmem:[#allocation12 + $0x10] sm:$0xff]
    %v3298 = vld [vmem:[#allocation12 + $0x18] sm:$0xff]
    %v3299 = vld [vmem:[#allocation12 + $0x20] sm:$0xff]
    %v3300 = vld [vmem:[#allocation12 + $0x28] sm:$0xff]
    %v3301 = vld [vmem:[#allocation12 + $0x30] sm:$0xff]
    %v3302 = vld [vmem:[#allocation12 + $0x38] sm:$0xff]
    %v3303 = vld [vmem:[#allocation12 + $0x40] sm:$0xff]
    %v3304 = vld [vmem:[#allocation12 + $0x48] sm:$0xff]
    %v3305 = vld [vmem:[#allocation12 + $0x50] sm:$0xff]
    %v3306 = vld [vmem:[#allocation12 + $0x58] sm:$0xff]
    %v3307 = vld [vmem:[#allocation12 + $0x60] sm:$0xff]
    %v3308 = vld [vmem:[#allocation12 + $0x68] sm:$0xff]
    %v3309 = vld [vmem:[#allocation12 + $0x70] sm:$0xff]
    %v3310 = vld [vmem:[#allocation12 + $0x78] sm:$0xff]
    %v3311 = vld [vmem:[#allocation12 + $0x80] sm:$0xff]
    %v3312 = vld [vmem:[#allocation12 + $0x88] sm:$0xff]
    %v3313 = vld [vmem:[#allocation12 + $0x90] sm:$0xff]
    %v3314 = vld [vmem:[#allocation12 + $0x98] sm:$0xff]
    %v3315 = vld [vmem:[#allocation12 + $0xa0] sm:$0xff]
    %v3316 = vld [vmem:[#allocation12 + $0xa8] sm:$0xff]
    %v3317 = vld [vmem:[#allocation12 + $0xb0] sm:$0xff]
    %v3318 = vld [vmem:[#allocation12 + $0xb8] sm:$0xff]
    %v3319 = vld [vmem:[#allocation12 + $0xc0] sm:$0xff]
    %v3320 = vld [vmem:[#allocation12 + $0xc8] sm:$0xff]
    %v3321 = vld [vmem:[#allocation12 + $0xd0] sm:$0xff]
    %v3322 = vld [vmem:[#allocation12 + $0xd8] sm:$0xff]
    %v3323 = vld [vmem:[#allocation12 + $0xe0] sm:$0xff]
    %v3324 = vld [vmem:[#allocation12 + $0xe8] sm:$0xff]
    %v3325 = vld [vmem:[#allocation12 + $0xf0] sm:$0xff]
    %v3326 = vld [vmem:[#allocation12 + $0xf8] sm:$0xff]
    %v3327 = vld [vmem:[#allocation12 + $0x100] sm:$0xff]
    %v3328 = vld [vmem:[#allocation12 + $0x108] sm:$0xff]
    %v3329 = vld [vmem:[#allocation12 + $0x110] sm:$0xff]
    %v3330 = vld [vmem:[#allocation12 + $0x118] sm:$0xff]
    %v3331 = vld [vmem:[#allocation12 + $0x120] sm:$0xff]
    %v3332 = vld [vmem:[#allocation12 + $0x128] sm:$0xff]
    %v3333 = vld [vmem:[#allocation12 + $0x130] sm:$0xff]
    %v3334 = vld [vmem:[#allocation12 + $0x138] sm:$0xff]
    %v3335 = vld [vmem:[#allocation12 + $0x140] sm:$0xff]
    %v3336 = vld [vmem:[#allocation12 + $0x148] sm:$0xff]
    %v3337 = vld [vmem:[#allocation12 + $0x150] sm:$0xff]
    %v3338 = vld [vmem:[#allocation12 + $0x158] sm:$0xff]
    %v3339 = vld [vmem:[#allocation12 + $0x160] sm:$0xff]
    %v3340 = vld [vmem:[#allocation12 + $0x168] sm:$0xff]
    %v3341 = vld [vmem:[#allocation12 + $0x170] sm:$0xff]
    %v3342 = vld [vmem:[#allocation12 + $0x178] sm:$0xff]
    %v3343 = vld [vmem:[#allocation12 + $0x180] sm:$0xff]
    %v3344 = vld [vmem:[#allocation12 + $0x188] sm:$0xff]
    %v3345 = vld [vmem:[#allocation12 + $0x190] sm:$0xff]
    %v3346 = vld [vmem:[#allocation12 + $0x198] sm:$0xff]
    %v3347 = vld [vmem:[#allocation12 + $0x1a0] sm:$0xff]
    %v3348 = vld [vmem:[#allocation12 + $0x1a8] sm:$0xff]
    %v3349 = vld [vmem:[#allocation12 + $0x1b0] sm:$0xff]
    %v3350 = vld [vmem:[#allocation12 + $0x1b8] sm:$0xff]
    %v3351 = vld [vmem:[#allocation12 + $0x1c0] sm:$0xff]
    %v3352 = vld [vmem:[#allocation12 + $0x1c8] sm:$0xff]
    %v3353 = vld [vmem:[#allocation12 + $0x1d0] sm:$0xff]
    %v3354 = vld [vmem:[#allocation12 + $0x1d8] sm:$0xff]
    %v3355 = vld [vmem:[#allocation12 + $0x1e0] sm:$0xff]
    %v3356 = vld [vmem:[#allocation12 + $0x1e8] sm:$0xff]
    %v3357 = vld [vmem:[#allocation12 + $0x1f0] sm:$0xff]
    %v3358 = vld [vmem:[#allocation12 + $0x1f8] sm:$0xff]
    %v3359 = vld [vmem:[%s10] sm:$0xf]
    %v3361 = vperm.slane %v3359, 0
    %v3362 = vperm.slane %v3359, 1
    %v3363 = vperm.slane %v3359, 2
    %v3364 = vperm.slane %v3359, 3
    %3369 = vmatpush.msra.mxu0 %v3355
    %3370 = vmatpush.msra.mxu0 %v3351
    %3371 = vmatpush.msra.mxu0 %v3347
    %3372 = vmatpush.msra.mxu0 %v3343
    %3373 = vmatpush.msra.mxu0 %v3339
    %3374 = vmatpush.msra.mxu0 %v3335
    %3375 = vmatpush.msra.mxu0 %v3331
    %3376 = vmatpush.msra.mxu0 %v3327
    %3377 = vmatpush.msra.mxu0 %v3323
    %3378 = vmatpush.msra.mxu0 %v3319
    %3379 = vmatpush.msra.mxu0 %v3315
    %3380 = vmatpush.msra.mxu0 %v3311
    %3381 = vmatpush.msra.mxu0 %v3307
    %3382 = vmatpush.msra.mxu0 %v3303
    %3383 = vmatpush.msra.mxu0 %v3299
    %3384 = vmatpush.msra.mxu0 %v3295
    %3385 = vmatmul.f32.gmra.mxu0 %v3287
    %v3386 = vpop.f32.mrf.mxu0
    %v3387 = vadd.f32 %v3361, %v3386
    %3388 = vmatmul.f32.gmra.mxu0 %v3288
    %v3389 = vpop.f32.mrf.mxu0
    %v3390 = vadd.f32 %v3361, %v3389
    %3391 = vmatmul.f32.gmra.mxu0 %v3289
    %v3392 = vpop.f32.mrf.mxu0
    %v3393 = vadd.f32 %v3361, %v3392
    %3394 = vmatmul.f32.gmra.mxu0 %v3290
    %v3395 = vpop.f32.mrf.mxu0
    %v3396 = vadd.f32 %v3361, %v3395
    %3397 = vmatmul.f32.gmra.mxu0 %v3291
    %v3398 = vpop.f32.mrf.mxu0
    %v3399 = vadd.f32 %v3361, %v3398
    %3400 = vmatmul.f32.gmra.mxu0 %v3292
    %v3401 = vpop.f32.mrf.mxu0
    %v3402 = vadd.f32 %v3361, %v3401
    %3403 = vmatmul.f32.gmra.mxu0 %v3293
    %v3404 = vpop.f32.mrf.mxu0
    %v3405 = vadd.f32 %v3361, %v3404
    %3406 = vmatmul.f32.gmra.mxu0 %v3294
    %v3407 = vpop.f32.mrf.mxu0
    %v3408 = vadd.f32 %v3361, %v3407
    %3409 = vdwg.mxu0
    %3410 = vmatpush.msra.mxu0 %v3356
    %3411 = vmatpush.msra.mxu0 %v3352
    %3412 = vmatpush.msra.mxu0 %v3348
    %3413 = vmatpush.msra.mxu0 %v3344
    %3414 = vmatpush.msra.mxu0 %v3340
    %3415 = vmatpush.msra.mxu0 %v3336
    %3416 = vmatpush.msra.mxu0 %v3332
    %3417 = vmatpush.msra.mxu0 %v3328
    %3418 = vmatpush.msra.mxu0 %v3324
    %3419 = vmatpush.msra.mxu0 %v3320
    %3420 = vmatpush.msra.mxu0 %v3316
    %3421 = vmatpush.msra.mxu0 %v3312
    %3422 = vmatpush.msra.mxu0 %v3308
    %3423 = vmatpush.msra.mxu0 %v3304
    %3424 = vmatpush.msra.mxu0 %v3300
    %3425 = vmatpush.msra.mxu0 %v3296
    %3426 = vmatmul.f32.gmra.mxu0 %v3287
    %v3427 = vpop.f32.mrf.mxu0
    %v3428 = vadd.f32 %v3362, %v3427
    %3429 = vmatmul.f32.gmra.mxu0 %v3288
    %v3430 = vpop.f32.mrf.mxu0
    %v3431 = vadd.f32 %v3362, %v3430
    %3432 = vmatmul.f32.gmra.mxu0 %v3289
    %v3433 = vpop.f32.mrf.mxu0
    %v3434 = vadd.f32 %v3362, %v3433
    %3435 = vmatmul.f32.gmra.mxu0 %v3290
    %v3436 = vpop.f32.mrf.mxu0
    %v3437 = vadd.f32 %v3362, %v3436
    %3438 = vmatmul.f32.gmra.mxu0 %v3291
    %v3439 = vpop.f32.mrf.mxu0
    %v3440 = vadd.f32 %v3362, %v3439
    %3441 = vmatmul.f32.gmra.mxu0 %v3292
    %v3442 = vpop.f32.mrf.mxu0
    %v3443 = vadd.f32 %v3362, %v3442
    %3444 = vmatmul.f32.gmra.mxu0 %v3293
    %v3445 = vpop.f32.mrf.mxu0
    %v3446 = vadd.f32 %v3362, %v3445
    %3447 = vmatmul.f32.gmra.mxu0 %v3294
    %v3448 = vpop.f32.mrf.mxu0
    %v3449 = vadd.f32 %v3362, %v3448
    %3450 = vdwg.mxu0
    %3451 = vmatpush.msra.mxu0 %v3357
    %3452 = vmatpush.msra.mxu0 %v3353
    %3453 = vmatpush.msra.mxu0 %v3349
    %3454 = vmatpush.msra.mxu0 %v3345
    %3455 = vmatpush.msra.mxu0 %v3341
    %3456 = vmatpush.msra.mxu0 %v3337
    %3457 = vmatpush.msra.mxu0 %v3333
    %3458 = vmatpush.msra.mxu0 %v3329
    %3459 = vmatpush.msra.mxu0 %v3325
    %3460 = vmatpush.msra.mxu0 %v3321
    %3461 = vmatpush.msra.mxu0 %v3317
    %3462 = vmatpush.msra.mxu0 %v3313
    %3463 = vmatpush.msra.mxu0 %v3309
    %3464 = vmatpush.msra.mxu0 %v3305
    %3465 = vmatpush.msra.mxu0 %v3301
    %3466 = vmatpush.msra.mxu0 %v3297
    %3467 = vmatmul.f32.gmra.mxu0 %v3287
    %v3468 = vpop.f32.mrf.mxu0
    %v3469 = vadd.f32 %v3363, %v3468
    %3470 = vmatmul.f32.gmra.mxu0 %v3288
    %v3471 = vpop.f32.mrf.mxu0
    %v3472 = vadd.f32 %v3363, %v3471
    %3473 = vmatmul.f32.gmra.mxu0 %v3289
    %v3474 = vpop.f32.mrf.mxu0
    %v3475 = vadd.f32 %v3363, %v3474
    %3476 = vmatmul.f32.gmra.mxu0 %v3290
    %v3477 = vpop.f32.mrf.mxu0
    %v3478 = vadd.f32 %v3363, %v3477
    %3479 = vmatmul.f32.gmra.mxu0 %v3291
    %v3480 = vpop.f32.mrf.mxu0
    %v3481 = vadd.f32 %v3363, %v3480
    %3482 = vmatmul.f32.gmra.mxu0 %v3292
    %v3483 = vpop.f32.mrf.mxu0
    %v3484 = vadd.f32 %v3363, %v3483
    %3485 = vmatmul.f32.gmra.mxu0 %v3293
    %v3486 = vpop.f32.mrf.mxu0
    %v3487 = vadd.f32 %v3363, %v3486
    %3488 = vmatmul.f32.gmra.mxu0 %v3294
    %v3489 = vpop.f32.mrf.mxu0
    %v3490 = vadd.f32 %v3363, %v3489
    %3491 = vdwg.mxu0
    %3492 = vmatpush.msra.mxu0 %v3358
    %3493 = vmatpush.msra.mxu0 %v3354
    %3494 = vmatpush.msra.mxu0 %v3350
    %3495 = vmatpush.msra.mxu0 %v3346
    %3496 = vmatpush.msra.mxu0 %v3342
    %3497 = vmatpush.msra.mxu0 %v3338
    %3498 = vmatpush.msra.mxu0 %v3334
    %3499 = vmatpush.msra.mxu0 %v3330
    %3500 = vmatpush.msra.mxu0 %v3326
    %3501 = vmatpush.msra.mxu0 %v3322
    %3502 = vmatpush.msra.mxu0 %v3318
    %3503 = vmatpush.msra.mxu0 %v3314
    %3504 = vmatpush.msra.mxu0 %v3310
    %3505 = vmatpush.msra.mxu0 %v3306
    %3506 = vmatpush.msra.mxu0 %v3302
    %3507 = vmatpush.msra.mxu0 %v3298
    %3508 = vmatmul.f32.gmra.mxu0 %v3287
    %v3509 = vpop.f32.mrf.mxu0
    %v3510 = vadd.f32 %v3364, %v3509
    %3511 = vmatmul.f32.gmra.mxu0 %v3288
    %v3512 = vpop.f32.mrf.mxu0
    %v3513 = vadd.f32 %v3364, %v3512
    %3514 = vmatmul.f32.gmra.mxu0 %v3289
    %v3515 = vpop.f32.mrf.mxu0
    %v3516 = vadd.f32 %v3364, %v3515
    %3517 = vmatmul.f32.gmra.mxu0 %v3290
    %v3518 = vpop.f32.mrf.mxu0
    %v3519 = vadd.f32 %v3364, %v3518
    %3520 = vmatmul.f32.gmra.mxu0 %v3291
    %v3521 = vpop.f32.mrf.mxu0
    %v3522 = vadd.f32 %v3364, %v3521
    %3523 = vmatmul.f32.gmra.mxu0 %v3292
    %v3524 = vpop.f32.mrf.mxu0
    %v3525 = vadd.f32 %v3364, %v3524
    %3526 = vmatmul.f32.gmra.mxu0 %v3293
    %v3527 = vpop.f32.mrf.mxu0
    %v3528 = vadd.f32 %v3364, %v3527
    %3529 = vmatmul.f32.gmra.mxu0 %v3294
    %v3530 = vpop.f32.mrf.mxu0
    %v3531 = vadd.f32 %v3364, %v3530
    %3532 = vdwg.mxu0
    %v3533 = vld [vmem:[#allocation14] sm:$0xff]
    %v3534 = vld [vmem:[#allocation14 + $0x8] sm:$0xff]
    %v3535 = vld [vmem:[#allocation14 + $0x10] sm:$0xff]
    %v3536 = vld [vmem:[#allocation14 + $0x18] sm:$0xff]
    %v3537 = vld [vmem:[#allocation14 + $0x20] sm:$0xff]
    %v3538 = vld [vmem:[#allocation14 + $0x28] sm:$0xff]
    %v3539 = vld [vmem:[#allocation14 + $0x30] sm:$0xff]
    %v3540 = vld [vmem:[#allocation14 + $0x38] sm:$0xff]
    %v3541 = vld [vmem:[#allocation14 + $0x40] sm:$0xff]
    %v3542 = vld [vmem:[#allocation14 + $0x48] sm:$0xff]
    %v3543 = vld [vmem:[#allocation14 + $0x50] sm:$0xff]
    %v3544 = vld [vmem:[#allocation14 + $0x58] sm:$0xff]
    %v3545 = vld [vmem:[#allocation14 + $0x60] sm:$0xff]
    %v3546 = vld [vmem:[#allocation14 + $0x68] sm:$0xff]
    %v3547 = vld [vmem:[#allocation14 + $0x70] sm:$0xff]
    %v3548 = vld [vmem:[#allocation14 + $0x78] sm:$0xff]
    %v3549 = vld [vmem:[#allocation14 + $0x80] sm:$0xff]
    %v3550 = vld [vmem:[#allocation14 + $0x88] sm:$0xff]
    %v3551 = vld [vmem:[#allocation14 + $0x90] sm:$0xff]
    %v3552 = vld [vmem:[#allocation14 + $0x98] sm:$0xff]
    %v3553 = vld [vmem:[#allocation14 + $0xa0] sm:$0xff]
    %v3554 = vld [vmem:[#allocation14 + $0xa8] sm:$0xff]
    %v3555 = vld [vmem:[#allocation14 + $0xb0] sm:$0xff]
    %v3556 = vld [vmem:[#allocation14 + $0xb8] sm:$0xff]
    %v3557 = vld [vmem:[#allocation14 + $0xc0] sm:$0xff]
    %v3558 = vld [vmem:[#allocation14 + $0xc8] sm:$0xff]
    %v3559 = vld [vmem:[#allocation14 + $0xd0] sm:$0xff]
    %v3560 = vld [vmem:[#allocation14 + $0xd8] sm:$0xff]
    %v3561 = vld [vmem:[#allocation14 + $0xe0] sm:$0xff]
    %v3562 = vld [vmem:[#allocation14 + $0xe8] sm:$0xff]
    %v3563 = vld [vmem:[#allocation14 + $0xf0] sm:$0xff]
    %v3564 = vld [vmem:[#allocation14 + $0xf8] sm:$0xff]
    %v3565 = vld [vmem:[#allocation14 + $0x100] sm:$0xff]
    %v3566 = vld [vmem:[#allocation14 + $0x108] sm:$0xff]
    %v3567 = vld [vmem:[#allocation14 + $0x110] sm:$0xff]
    %v3568 = vld [vmem:[#allocation14 + $0x118] sm:$0xff]
    %v3569 = vld [vmem:[#allocation14 + $0x120] sm:$0xff]
    %v3570 = vld [vmem:[#allocation14 + $0x128] sm:$0xff]
    %v3571 = vld [vmem:[#allocation14 + $0x130] sm:$0xff]
    %v3572 = vld [vmem:[#allocation14 + $0x138] sm:$0xff]
    %v3573 = vld [vmem:[#allocation14 + $0x140] sm:$0xff]
    %v3574 = vld [vmem:[#allocation14 + $0x148] sm:$0xff]
    %v3575 = vld [vmem:[#allocation14 + $0x150] sm:$0xff]
    %v3576 = vld [vmem:[#allocation14 + $0x158] sm:$0xff]
    %v3577 = vld [vmem:[#allocation14 + $0x160] sm:$0xff]
    %v3578 = vld [vmem:[#allocation14 + $0x168] sm:$0xff]
    %v3579 = vld [vmem:[#allocation14 + $0x170] sm:$0xff]
    %v3580 = vld [vmem:[#allocation14 + $0x178] sm:$0xff]
    %v3581 = vld [vmem:[#allocation14 + $0x180] sm:$0xff]
    %v3582 = vld [vmem:[#allocation14 + $0x188] sm:$0xff]
    %v3583 = vld [vmem:[#allocation14 + $0x190] sm:$0xff]
    %v3584 = vld [vmem:[#allocation14 + $0x198] sm:$0xff]
    %v3585 = vld [vmem:[#allocation14 + $0x1a0] sm:$0xff]
    %v3586 = vld [vmem:[#allocation14 + $0x1a8] sm:$0xff]
    %v3587 = vld [vmem:[#allocation14 + $0x1b0] sm:$0xff]
    %v3588 = vld [vmem:[#allocation14 + $0x1b8] sm:$0xff]
    %v3589 = vld [vmem:[#allocation14 + $0x1c0] sm:$0xff]
    %v3590 = vld [vmem:[#allocation14 + $0x1c8] sm:$0xff]
    %v3591 = vld [vmem:[#allocation14 + $0x1d0] sm:$0xff]
    %v3592 = vld [vmem:[#allocation14 + $0x1d8] sm:$0xff]
    %v3593 = vld [vmem:[#allocation14 + $0x1e0] sm:$0xff]
    %v3594 = vld [vmem:[#allocation14 + $0x1e8] sm:$0xff]
    %v3595 = vld [vmem:[#allocation14 + $0x1f0] sm:$0xff]
    %v3596 = vld [vmem:[#allocation14 + $0x1f8] sm:$0xff]
    %s3597 = scalar_lea.vmem %s13, 16
    %v3598 = vld [vmem:[%s3597] sm:$0xff]
    %s3599 = scalar_lea.vmem %s14, 16
    %v3600 = vld [vmem:[%s3599] sm:$0xff]
    %3601 = vmatpush.msra.mxu0 %v3593
    %3602 = vmatpush.msra.mxu0 %v3589
    %3603 = vmatpush.msra.mxu0 %v3585
    %3604 = vmatpush.msra.mxu0 %v3581
    %3605 = vmatpush.msra.mxu0 %v3577
    %3606 = vmatpush.msra.mxu0 %v3573
    %3607 = vmatpush.msra.mxu0 %v3569
    %3608 = vmatpush.msra.mxu0 %v3565
    %3609 = vmatpush.msra.mxu0 %v3561
    %3610 = vmatpush.msra.mxu0 %v3557
    %3611 = vmatpush.msra.mxu0 %v3553
    %3612 = vmatpush.msra.mxu0 %v3549
    %3613 = vmatpush.msra.mxu0 %v3545
    %3614 = vmatpush.msra.mxu0 %v3541
    %3615 = vmatpush.msra.mxu0 %v3537
    %3616 = vmatpush.msra.mxu0 %v3533
    %3617 = vmatmul.f32.gmra.mxu0 %v3598
    %v3618 = vpop.f32.mrf.mxu0
    %v3619 = vadd.f32 0.0, %v3618
    %3620 = vdwg.mxu0
    %3621 = vmatpush.msra.mxu0 %v3594
    %3622 = vmatpush.msra.mxu0 %v3590
    %3623 = vmatpush.msra.mxu0 %v3586
    %3624 = vmatpush.msra.mxu0 %v3582
    %3625 = vmatpush.msra.mxu0 %v3578
    %3626 = vmatpush.msra.mxu0 %v3574
    %3627 = vmatpush.msra.mxu0 %v3570
    %3628 = vmatpush.msra.mxu0 %v3566
    %3629 = vmatpush.msra.mxu0 %v3562
    %3630 = vmatpush.msra.mxu0 %v3558
    %3631 = vmatpush.msra.mxu0 %v3554
    %3632 = vmatpush.msra.mxu0 %v3550
    %3633 = vmatpush.msra.mxu0 %v3546
    %3634 = vmatpush.msra.mxu0 %v3542
    %3635 = vmatpush.msra.mxu0 %v3538
    %3636 = vmatpush.msra.mxu0 %v3534
    %3637 = vmatmul.f32.gmra.mxu0 %v3598
    %v3638 = vpop.f32.mrf.mxu0
    %v3639 = vadd.f32 0.0, %v3638
    %3640 = vdwg.mxu0
    %3641 = vmatpush.msra.mxu0 %v3595
    %3642 = vmatpush.msra.mxu0 %v3591
    %3643 = vmatpush.msra.mxu0 %v3587
    %3644 = vmatpush.msra.mxu0 %v3583
    %3645 = vmatpush.msra.mxu0 %v3579
    %3646 = vmatpush.msra.mxu0 %v3575
    %3647 = vmatpush.msra.mxu0 %v3571
    %3648 = vmatpush.msra.mxu0 %v3567
    %3649 = vmatpush.msra.mxu0 %v3563
    %3650 = vmatpush.msra.mxu0 %v3559
    %3651 = vmatpush.msra.mxu0 %v3555
    %3652 = vmatpush.msra.mxu0 %v3551
    %3653 = vmatpush.msra.mxu0 %v3547
    %3654 = vmatpush.msra.mxu0 %v3543
    %3655 = vmatpush.msra.mxu0 %v3539
    %3656 = vmatpush.msra.mxu0 %v3535
    %3657 = vmatmul.f32.gmra.mxu0 %v3598
    %v3658 = vpop.f32.mrf.mxu0
    %v3659 = vadd.f32 0.0, %v3658
    %3660 = vdwg.mxu0
    %3661 = vmatpush.msra.mxu0 %v3596
    %3662 = vmatpush.msra.mxu0 %v3592
    %3663 = vmatpush.msra.mxu0 %v3588
    %3664 = vmatpush.msra.mxu0 %v3584
    %3665 = vmatpush.msra.mxu0 %v3580
    %3666 = vmatpush.msra.mxu0 %v3576
    %3667 = vmatpush.msra.mxu0 %v3572
    %3668 = vmatpush.msra.mxu0 %v3568
    %3669 = vmatpush.msra.mxu0 %v3564
    %3670 = vmatpush.msra.mxu0 %v3560
    %3671 = vmatpush.msra.mxu0 %v3556
    %3672 = vmatpush.msra.mxu0 %v3552
    %3673 = vmatpush.msra.mxu0 %v3548
    %3674 = vmatpush.msra.mxu0 %v3544
    %3675 = vmatpush.msra.mxu0 %v3540
    %3676 = vmatpush.msra.mxu0 %v3536
    %3677 = vmatmul.f32.gmra.mxu0 %v3598
    %v3678 = vpop.f32.mrf.mxu0
    %v3679 = vadd.f32 0.0, %v3678
    %3680 = vdwg.mxu0
    %v3681 = vadd.f32 %v3387, %v3619
    %v3682 = vadd.f32 %v3428, %v3639
    %v3683 = vadd.f32 %v3469, %v3659
    %v3684 = vadd.f32 %v3510, %v3679
    %v3685 = vxor.u32 %v3681, 2147483648
    %v3686 = vxor.u32 %v3682, 2147483648
    %v3687 = vxor.u32 %v3683, 2147483648
    %v3688 = vmul.f32 %v3685, 1.442695
    %v3689 = vpow.pop %v3688
    %v3690 = vmul.f32 %v3686, 1.442695
    %v3691 = vpow.pop %v3690
    %v3692 = vmul.f32 %v3687, 1.442695
    %v3693 = vpow.pop %v3692
    %v3694 = vadd.f32 %v3689, 1.0
    %v3695 = vadd.f32 %v3691, 1.0
    %v3696 = vadd.f32 %v3693, 1.0
    %v3697 = vrcp.pop %v3694
    %v3698 = vmul.f32 %v3694, %v3697
    %v3699 = vsub.f32 1.0, %v3698
    %v3700 = vmul.f32 %v3697, %v3699
    %v3701 = vadd.f32 %v3697, %v3700
    %vm3702 = vweird.f32 %v3694
    %vm3703 = vweird.f32 %v3697
    %vm3704 = vmor %vm3702, %vm3703
    %v3705 = vsel %vm3704, %v3697, %v3701
    %v3706 = vand.u32 2147483647, %v3694
    %vm3707 = vcmp.eq.f32.partialorder %v3706, 8.507059e+37
    %v3708 = vand.u32 %v3694, 2147483648
    %v3709 = vor.u32 1.1754944e-38, %v3708
    %v3710 = vsel %vm3707, %v3709, %v3705
    %v3711 = vmul.f32 1.0, %v3710
    %v3712 = vrcp.pop %v3695
    %v3713 = vmul.f32 %v3695, %v3712
    %v3714 = vsub.f32 1.0, %v3713
    %v3715 = vmul.f32 %v3712, %v3714
    %v3716 = vadd.f32 %v3712, %v3715
    %vm3717 = vweird.f32 %v3695
    %vm3718 = vweird.f32 %v3712
    %vm3719 = vmor %vm3717, %vm3718
    %v3720 = vsel %vm3719, %v3712, %v3716
    %v3721 = vand.u32 2147483647, %v3695
    %vm3722 = vcmp.eq.f32.partialorder %v3721, 8.507059e+37
    %v3723 = vand.u32 %v3695, 2147483648
    %v3724 = vor.u32 1.1754944e-38, %v3723
    %v3725 = vsel %vm3722, %v3724, %v3720
    %v3726 = vmul.f32 1.0, %v3725
    %v3727 = vrcp.pop %v3696
    %v3728 = vmul.f32 %v3696, %v3727
    %v3729 = vsub.f32 1.0, %v3728
    %v3730 = vmul.f32 %v3727, %v3729
    %v3731 = vadd.f32 %v3727, %v3730
    %vm3732 = vweird.f32 %v3696
    %vm3733 = vweird.f32 %v3727
    %vm3734 = vmor %vm3732, %vm3733
    %v3735 = vsel %vm3734, %v3727, %v3731
    %v3736 = vand.u32 2147483647, %v3696
    %vm3737 = vcmp.eq.f32.partialorder %v3736, 8.507059e+37
    %v3738 = vand.u32 %v3696, 2147483648
    %v3739 = vor.u32 1.1754944e-38, %v3738
    %v3740 = vsel %vm3737, %v3739, %v3735
    %v3741 = vmul.f32 1.0, %v3740
    %v3742 = vtanh.pop %v3684
    %v3743 = vmul.f32 %v3726, %v3600
    %v3744 = vmul.f32 %v3711, %v3742
    %v3745 = vadd.f32 %v3743, %v3744
    %v3746 = vtanh.pop %v3745
    %v3747 = vmul.f32 %v3741, %v3746
    %3748 = vst [vmem:[#allocation2] sm:$0xff] %v3747
    %3749 = vmatpush.msra.mxu0 %v3593
    %3750 = vmatpush.msra.mxu0 %v3589
    %3751 = vmatpush.msra.mxu0 %v3585
    %3752 = vmatpush.msra.mxu0 %v3581
    %3753 = vmatpush.msra.mxu0 %v3577
    %3754 = vmatpush.msra.mxu0 %v3573
    %3755 = vmatpush.msra.mxu0 %v3569
    %3756 = vmatpush.msra.mxu0 %v3565
    %3757 = vmatpush.msra.mxu0 %v3561
    %3758 = vmatpush.msra.mxu0 %v3557
    %3759 = vmatpush.msra.mxu0 %v3553
    %3760 = vmatpush.msra.mxu0 %v3549
    %3761 = vmatpush.msra.mxu0 %v3545
    %3762 = vmatpush.msra.mxu0 %v3541
    %3763 = vmatpush.msra.mxu0 %v3537
    %3764 = vmatpush.msra.mxu0 %v3533
    %3765 = vmatmul.f32.gmra.mxu0 %v3747
    %v3766 = vpop.f32.mrf.mxu0
    %v3767 = vadd.f32 0.0, %v3766
    %3768 = vdwg.mxu0
    %3769 = vmatpush.msra.mxu0 %v3594
    %3770 = vmatpush.msra.mxu0 %v3590
    %3771 = vmatpush.msra.mxu0 %v3586
    %3772 = vmatpush.msra.mxu0 %v3582
    %3773 = vmatpush.msra.mxu0 %v3578
    %3774 = vmatpush.msra.mxu0 %v3574
    %3775 = vmatpush.msra.mxu0 %v3570
    %3776 = vmatpush.msra.mxu0 %v3566
    %3777 = vmatpush.msra.mxu0 %v3562
    %3778 = vmatpush.msra.mxu0 %v3558
    %3779 = vmatpush.msra.mxu0 %v3554
    %3780 = vmatpush.msra.mxu0 %v3550
    %3781 = vmatpush.msra.mxu0 %v3546
    %3782 = vmatpush.msra.mxu0 %v3542
    %3783 = vmatpush.msra.mxu0 %v3538
    %3784 = vmatpush.msra.mxu0 %v3534
    %3785 = vmatmul.f32.gmra.mxu0 %v3747
    %v3786 = vpop.f32.mrf.mxu0
    %v3787 = vadd.f32 0.0, %v3786
    %3788 = vdwg.mxu0
    %3789 = vmatpush.msra.mxu0 %v3595
    %3790 = vmatpush.msra.mxu0 %v3591
    %3791 = vmatpush.msra.mxu0 %v3587
    %3792 = vmatpush.msra.mxu0 %v3583
    %3793 = vmatpush.msra.mxu0 %v3579
    %3794 = vmatpush.msra.mxu0 %v3575
    %3795 = vmatpush.msra.mxu0 %v3571
    %3796 = vmatpush.msra.mxu0 %v3567
    %3797 = vmatpush.msra.mxu0 %v3563
    %3798 = vmatpush.msra.mxu0 %v3559
    %3799 = vmatpush.msra.mxu0 %v3555
    %3800 = vmatpush.msra.mxu0 %v3551
    %3801 = vmatpush.msra.mxu0 %v3547
    %3802 = vmatpush.msra.mxu0 %v3543
    %3803 = vmatpush.msra.mxu0 %v3539
    %3804 = vmatpush.msra.mxu0 %v3535
    %3805 = vmatmul.f32.gmra.mxu0 %v3747
    %v3806 = vpop.f32.mrf.mxu0
    %v3807 = vadd.f32 0.0, %v3806
    %3808 = vdwg.mxu0
    %3809 = vmatpush.msra.mxu0 %v3596
    %3810 = vmatpush.msra.mxu0 %v3592
    %3811 = vmatpush.msra.mxu0 %v3588
    %3812 = vmatpush.msra.mxu0 %v3584
    %3813 = vmatpush.msra.mxu0 %v3580
    %3814 = vmatpush.msra.mxu0 %v3576
    %3815 = vmatpush.msra.mxu0 %v3572
    %3816 = vmatpush.msra.mxu0 %v3568
    %3817 = vmatpush.msra.mxu0 %v3564
    %3818 = vmatpush.msra.mxu0 %v3560
    %3819 = vmatpush.msra.mxu0 %v3556
    %3820 = vmatpush.msra.mxu0 %v3552
    %3821 = vmatpush.msra.mxu0 %v3548
    %3822 = vmatpush.msra.mxu0 %v3544
    %3823 = vmatpush.msra.mxu0 %v3540
    %3824 = vmatpush.msra.mxu0 %v3536
    %3825 = vmatmul.f32.gmra.mxu0 %v3747
    %v3826 = vpop.f32.mrf.mxu0
    %v3827 = vadd.f32 0.0, %v3826
    %3828 = vdwg.mxu0
    %v3829 = vadd.f32 %v3390, %v3767
    %v3830 = vadd.f32 %v3431, %v3787
    %v3831 = vadd.f32 %v3472, %v3807
    %v3832 = vadd.f32 %v3513, %v3827
    %v3833 = vxor.u32 %v3829, 2147483648
    %v3834 = vxor.u32 %v3830, 2147483648
    %v3835 = vxor.u32 %v3831, 2147483648
    %v3836 = vmul.f32 %v3833, 1.442695
    %v3837 = vpow.pop %v3836
    %v3838 = vmul.f32 %v3834, 1.442695
    %v3839 = vpow.pop %v3838
    %v3840 = vmul.f32 %v3835, 1.442695
    %v3841 = vpow.pop %v3840
    %v3842 = vadd.f32 %v3837, 1.0
    %v3843 = vadd.f32 %v3839, 1.0
    %v3844 = vadd.f32 %v3841, 1.0
    %v3845 = vrcp.pop %v3842
    %v3846 = vmul.f32 %v3842, %v3845
    %v3847 = vsub.f32 1.0, %v3846
    %v3848 = vmul.f32 %v3845, %v3847
    %v3849 = vadd.f32 %v3845, %v3848
    %vm3850 = vweird.f32 %v3842
    %vm3851 = vweird.f32 %v3845
    %vm3852 = vmor %vm3850, %vm3851
    %v3853 = vsel %vm3852, %v3845, %v3849
    %v3854 = vand.u32 2147483647, %v3842
    %vm3855 = vcmp.eq.f32.partialorder %v3854, 8.507059e+37
    %v3856 = vand.u32 %v3842, 2147483648
    %v3857 = vor.u32 1.1754944e-38, %v3856
    %v3858 = vsel %vm3855, %v3857, %v3853
    %v3859 = vmul.f32 1.0, %v3858
    %v3860 = vrcp.pop %v3843
    %v3861 = vmul.f32 %v3843, %v3860
    %v3862 = vsub.f32 1.0, %v3861
    %v3863 = vmul.f32 %v3860, %v3862
    %v3864 = vadd.f32 %v3860, %v3863
    %vm3865 = vweird.f32 %v3843
    %vm3866 = vweird.f32 %v3860
    %vm3867 = vmor %vm3865, %vm3866
    %v3868 = vsel %vm3867, %v3860, %v3864
    %v3869 = vand.u32 2147483647, %v3843
    %vm3870 = vcmp.eq.f32.partialorder %v3869, 8.507059e+37
    %v3871 = vand.u32 %v3843, 2147483648
    %v3872 = vor.u32 1.1754944e-38, %v3871
    %v3873 = vsel %vm3870, %v3872, %v3868
    %v3874 = vmul.f32 1.0, %v3873
    %v3875 = vrcp.pop %v3844
    %v3876 = vmul.f32 %v3844, %v3875
    %v3877 = vsub.f32 1.0, %v3876
    %v3878 = vmul.f32 %v3875, %v3877
    %v3879 = vadd.f32 %v3875, %v3878
    %vm3880 = vweird.f32 %v3844
    %vm3881 = vweird.f32 %v3875
    %vm3882 = vmor %vm3880, %vm3881
    %v3883 = vsel %vm3882, %v3875, %v3879
    %v3884 = vand.u32 2147483647, %v3844
    %vm3885 = vcmp.eq.f32.partialorder %v3884, 8.507059e+37
    %v3886 = vand.u32 %v3844, 2147483648
    %v3887 = vor.u32 1.1754944e-38, %v3886
    %v3888 = vsel %vm3885, %v3887, %v3883
    %v3889 = vmul.f32 1.0, %v3888
    %v3890 = vtanh.pop %v3832
    %v3891 = vmul.f32 %v3874, %v3745
    %v3892 = vmul.f32 %v3859, %v3890
    %v3893 = vadd.f32 %v3891, %v3892
    %v3894 = vtanh.pop %v3893
    %v3895 = vmul.f32 %v3889, %v3894
    %3896 = vst [vmem:[#allocation2 + $0x8] sm:$0xff] %v3895
    %3897 = vmatpush.msra.mxu0 %v3593
    %3898 = vmatpush.msra.mxu0 %v3589
    %3899 = vmatpush.msra.mxu0 %v3585
    %3900 = vmatpush.msra.mxu0 %v3581
    %3901 = vmatpush.msra.mxu0 %v3577
    %3902 = vmatpush.msra.mxu0 %v3573
    %3903 = vmatpush.msra.mxu0 %v3569
    %3904 = vmatpush.msra.mxu0 %v3565
    %3905 = vmatpush.msra.mxu0 %v3561
    %3906 = vmatpush.msra.mxu0 %v3557
    %3907 = vmatpush.msra.mxu0 %v3553
    %3908 = vmatpush.msra.mxu0 %v3549
    %3909 = vmatpush.msra.mxu0 %v3545
    %3910 = vmatpush.msra.mxu0 %v3541
    %3911 = vmatpush.msra.mxu0 %v3537
    %3912 = vmatpush.msra.mxu0 %v3533
    %3913 = vmatmul.f32.gmra.mxu0 %v3895
    %v3914 = vpop.f32.mrf.mxu0
    %v3915 = vadd.f32 0.0, %v3914
    %3916 = vdwg.mxu0
    %3917 = vmatpush.msra.mxu0 %v3594
    %3918 = vmatpush.msra.mxu0 %v3590
    %3919 = vmatpush.msra.mxu0 %v3586
    %3920 = vmatpush.msra.mxu0 %v3582
    %3921 = vmatpush.msra.mxu0 %v3578
    %3922 = vmatpush.msra.mxu0 %v3574
    %3923 = vmatpush.msra.mxu0 %v3570
    %3924 = vmatpush.msra.mxu0 %v3566
    %3925 = vmatpush.msra.mxu0 %v3562
    %3926 = vmatpush.msra.mxu0 %v3558
    %3927 = vmatpush.msra.mxu0 %v3554
    %3928 = vmatpush.msra.mxu0 %v3550
    %3929 = vmatpush.msra.mxu0 %v3546
    %3930 = vmatpush.msra.mxu0 %v3542
    %3931 = vmatpush.msra.mxu0 %v3538
    %3932 = vmatpush.msra.mxu0 %v3534
    %3933 = vmatmul.f32.gmra.mxu0 %v3895
    %v3934 = vpop.f32.mrf.mxu0
    %v3935 = vadd.f32 0.0, %v3934
    %3936 = vdwg.mxu0
    %3937 = vmatpush.msra.mxu0 %v3595
    %3938 = vmatpush.msra.mxu0 %v3591
    %3939 = vmatpush.msra.mxu0 %v3587
    %3940 = vmatpush.msra.mxu0 %v3583
    %3941 = vmatpush.msra.mxu0 %v3579
    %3942 = vmatpush.msra.mxu0 %v3575
    %3943 = vmatpush.msra.mxu0 %v3571
    %3944 = vmatpush.msra.mxu0 %v3567
    %3945 = vmatpush.msra.mxu0 %v3563
    %3946 = vmatpush.msra.mxu0 %v3559
    %3947 = vmatpush.msra.mxu0 %v3555
    %3948 = vmatpush.msra.mxu0 %v3551
    %3949 = vmatpush.msra.mxu0 %v3547
    %3950 = vmatpush.msra.mxu0 %v3543
    %3951 = vmatpush.msra.mxu0 %v3539
    %3952 = vmatpush.msra.mxu0 %v3535
    %3953 = vmatmul.f32.gmra.mxu0 %v3895
    %v3954 = vpop.f32.mrf.mxu0
    %v3955 = vadd.f32 0.0, %v3954
    %3956 = vdwg.mxu0
    %3957 = vmatpush.msra.mxu0 %v3596
    %3958 = vmatpush.msra.mxu0 %v3592
    %3959 = vmatpush.msra.mxu0 %v3588
    %3960 = vmatpush.msra.mxu0 %v3584
    %3961 = vmatpush.msra.mxu0 %v3580
    %3962 = vmatpush.msra.mxu0 %v3576
    %3963 = vmatpush.msra.mxu0 %v3572
    %3964 = vmatpush.msra.mxu0 %v3568
    %3965 = vmatpush.msra.mxu0 %v3564
    %3966 = vmatpush.msra.mxu0 %v3560
    %3967 = vmatpush.msra.mxu0 %v3556
    %3968 = vmatpush.msra.mxu0 %v3552
    %3969 = vmatpush.msra.mxu0 %v3548
    %3970 = vmatpush.msra.mxu0 %v3544
    %3971 = vmatpush.msra.mxu0 %v3540
    %3972 = vmatpush.msra.mxu0 %v3536
    %3973 = vmatmul.f32.gmra.mxu0 %v3895
    %v3974 = vpop.f32.mrf.mxu0
    %v3975 = vadd.f32 0.0, %v3974
    %3976 = vdwg.mxu0
    %v3977 = vadd.f32 %v3393, %v3915
    %v3978 = vadd.f32 %v3434, %v3935
    %v3979 = vadd.f32 %v3475, %v3955
    %v3980 = vadd.f32 %v3516, %v3975
    %v3981 = vxor.u32 %v3977, 2147483648
    %v3982 = vxor.u32 %v3978, 2147483648
    %v3983 = vxor.u32 %v3979, 2147483648
    %v3984 = vmul.f32 %v3981, 1.442695
    %v3985 = vpow.pop %v3984
    %v3986 = vmul.f32 %v3982, 1.442695
    %v3987 = vpow.pop %v3986
    %v3988 = vmul.f32 %v3983, 1.442695
    %v3989 = vpow.pop %v3988
    %v3990 = vadd.f32 %v3985, 1.0
    %v3991 = vadd.f32 %v3987, 1.0
    %v3992 = vadd.f32 %v3989, 1.0
    %v3993 = vrcp.pop %v3990
    %v3994 = vmul.f32 %v3990, %v3993
    %v3995 = vsub.f32 1.0, %v3994
    %v3996 = vmul.f32 %v3993, %v3995
    %v3997 = vadd.f32 %v3993, %v3996
    %vm3998 = vweird.f32 %v3990
    %vm3999 = vweird.f32 %v3993
    %vm4000 = vmor %vm3998, %vm3999
    %v4001 = vsel %vm4000, %v3993, %v3997
    %v4002 = vand.u32 2147483647, %v3990
    %vm4003 = vcmp.eq.f32.partialorder %v4002, 8.507059e+37
    %v4004 = vand.u32 %v3990, 2147483648
    %v4005 = vor.u32 1.1754944e-38, %v4004
    %v4006 = vsel %vm4003, %v4005, %v4001
    %v4007 = vmul.f32 1.0, %v4006
    %v4008 = vrcp.pop %v3991
    %v4009 = vmul.f32 %v3991, %v4008
    %v4010 = vsub.f32 1.0, %v4009
    %v4011 = vmul.f32 %v4008, %v4010
    %v4012 = vadd.f32 %v4008, %v4011
    %vm4013 = vweird.f32 %v3991
    %vm4014 = vweird.f32 %v4008
    %vm4015 = vmor %vm4013, %vm4014
    %v4016 = vsel %vm4015, %v4008, %v4012
    %v4017 = vand.u32 2147483647, %v3991
    %vm4018 = vcmp.eq.f32.partialorder %v4017, 8.507059e+37
    %v4019 = vand.u32 %v3991, 2147483648
    %v4020 = vor.u32 1.1754944e-38, %v4019
    %v4021 = vsel %vm4018, %v4020, %v4016
    %v4022 = vmul.f32 1.0, %v4021
    %v4023 = vrcp.pop %v3992
    %v4024 = vmul.f32 %v3992, %v4023
    %v4025 = vsub.f32 1.0, %v4024
    %v4026 = vmul.f32 %v4023, %v4025
    %v4027 = vadd.f32 %v4023, %v4026
    %vm4028 = vweird.f32 %v3992
    %vm4029 = vweird.f32 %v4023
    %vm4030 = vmor %vm4028, %vm4029
    %v4031 = vsel %vm4030, %v4023, %v4027
    %v4032 = vand.u32 2147483647, %v3992
    %vm4033 = vcmp.eq.f32.partialorder %v4032, 8.507059e+37
    %v4034 = vand.u32 %v3992, 2147483648
    %v4035 = vor.u32 1.1754944e-38, %v4034
    %v4036 = vsel %vm4033, %v4035, %v4031
    %v4037 = vmul.f32 1.0, %v4036
    %v4038 = vtanh.pop %v3980
    %v4039 = vmul.f32 %v4022, %v3893
    %v4040 = vmul.f32 %v4007, %v4038
    %v4041 = vadd.f32 %v4039, %v4040
    %v4042 = vtanh.pop %v4041
    %v4043 = vmul.f32 %v4037, %v4042
    %4044 = vst [vmem:[#allocation2 + $0x10] sm:$0xff] %v4043
    %4045 = vmatpush.msra.mxu0 %v3593
    %4046 = vmatpush.msra.mxu0 %v3589
    %4047 = vmatpush.msra.mxu0 %v3585
    %4048 = vmatpush.msra.mxu0 %v3581
    %4049 = vmatpush.msra.mxu0 %v3577
    %4050 = vmatpush.msra.mxu0 %v3573
    %4051 = vmatpush.msra.mxu0 %v3569
    %4052 = vmatpush.msra.mxu0 %v3565
    %4053 = vmatpush.msra.mxu0 %v3561
    %4054 = vmatpush.msra.mxu0 %v3557
    %4055 = vmatpush.msra.mxu0 %v3553
    %4056 = vmatpush.msra.mxu0 %v3549
    %4057 = vmatpush.msra.mxu0 %v3545
    %4058 = vmatpush.msra.mxu0 %v3541
    %4059 = vmatpush.msra.mxu0 %v3537
    %4060 = vmatpush.msra.mxu0 %v3533
    %4061 = vmatmul.f32.gmra.mxu0 %v4043
    %v4062 = vpop.f32.mrf.mxu0
    %v4063 = vadd.f32 0.0, %v4062
    %4064 = vdwg.mxu0
    %4065 = vmatpush.msra.mxu0 %v3594
    %4066 = vmatpush.msra.mxu0 %v3590
    %4067 = vmatpush.msra.mxu0 %v3586
    %4068 = vmatpush.msra.mxu0 %v3582
    %4069 = vmatpush.msra.mxu0 %v3578
    %4070 = vmatpush.msra.mxu0 %v3574
    %4071 = vmatpush.msra.mxu0 %v3570
    %4072 = vmatpush.msra.mxu0 %v3566
    %4073 = vmatpush.msra.mxu0 %v3562
    %4074 = vmatpush.msra.mxu0 %v3558
    %4075 = vmatpush.msra.mxu0 %v3554
    %4076 = vmatpush.msra.mxu0 %v3550
    %4077 = vmatpush.msra.mxu0 %v3546
    %4078 = vmatpush.msra.mxu0 %v3542
    %4079 = vmatpush.msra.mxu0 %v3538
    %4080 = vmatpush.msra.mxu0 %v3534
    %4081 = vmatmul.f32.gmra.mxu0 %v4043
    %v4082 = vpop.f32.mrf.mxu0
    %v4083 = vadd.f32 0.0, %v4082
    %4084 = vdwg.mxu0
    %4085 = vmatpush.msra.mxu0 %v3595
    %4086 = vmatpush.msra.mxu0 %v3591
    %4087 = vmatpush.msra.mxu0 %v3587
    %4088 = vmatpush.msra.mxu0 %v3583
    %4089 = vmatpush.msra.mxu0 %v3579
    %4090 = vmatpush.msra.mxu0 %v3575
    %4091 = vmatpush.msra.mxu0 %v3571
    %4092 = vmatpush.msra.mxu0 %v3567
    %4093 = vmatpush.msra.mxu0 %v3563
    %4094 = vmatpush.msra.mxu0 %v3559
    %4095 = vmatpush.msra.mxu0 %v3555
    %4096 = vmatpush.msra.mxu0 %v3551
    %4097 = vmatpush.msra.mxu0 %v3547
    %4098 = vmatpush.msra.mxu0 %v3543
    %4099 = vmatpush.msra.mxu0 %v3539
    %4100 = vmatpush.msra.mxu0 %v3535
    %4101 = vmatmul.f32.gmra.mxu0 %v4043
    %v4102 = vpop.f32.mrf.mxu0
    %v4103 = vadd.f32 0.0, %v4102
    %4104 = vdwg.mxu0
    %4105 = vmatpush.msra.mxu0 %v3596
    %4106 = vmatpush.msra.mxu0 %v3592
    %4107 = vmatpush.msra.mxu0 %v3588
    %4108 = vmatpush.msra.mxu0 %v3584
    %4109 = vmatpush.msra.mxu0 %v3580
    %4110 = vmatpush.msra.mxu0 %v3576
    %4111 = vmatpush.msra.mxu0 %v3572
    %4112 = vmatpush.msra.mxu0 %v3568
    %4113 = vmatpush.msra.mxu0 %v3564
    %4114 = vmatpush.msra.mxu0 %v3560
    %4115 = vmatpush.msra.mxu0 %v3556
    %4116 = vmatpush.msra.mxu0 %v3552
    %4117 = vmatpush.msra.mxu0 %v3548
    %4118 = vmatpush.msra.mxu0 %v3544
    %4119 = vmatpush.msra.mxu0 %v3540
    %4120 = vmatpush.msra.mxu0 %v3536
    %4121 = vmatmul.f32.gmra.mxu0 %v4043
    %v4122 = vpop.f32.mrf.mxu0
    %v4123 = vadd.f32 0.0, %v4122
    %4124 = vdwg.mxu0
    %v4125 = vadd.f32 %v3396, %v4063
    %v4126 = vadd.f32 %v3437, %v4083
    %v4127 = vadd.f32 %v3478, %v4103
    %v4128 = vadd.f32 %v3519, %v4123
    %v4129 = vxor.u32 %v4125, 2147483648
    %v4130 = vxor.u32 %v4126, 2147483648
    %v4131 = vxor.u32 %v4127, 2147483648
    %v4132 = vmul.f32 %v4129, 1.442695
    %v4133 = vpow.pop %v4132
    %v4134 = vmul.f32 %v4130, 1.442695
    %v4135 = vpow.pop %v4134
    %v4136 = vmul.f32 %v4131, 1.442695
    %v4137 = vpow.pop %v4136
    %v4138 = vadd.f32 %v4133, 1.0
    %v4139 = vadd.f32 %v4135, 1.0
    %v4140 = vadd.f32 %v4137, 1.0
    %v4141 = vrcp.pop %v4138
    %v4142 = vmul.f32 %v4138, %v4141
    %v4143 = vsub.f32 1.0, %v4142
    %v4144 = vmul.f32 %v4141, %v4143
    %v4145 = vadd.f32 %v4141, %v4144
    %vm4146 = vweird.f32 %v4138
    %vm4147 = vweird.f32 %v4141
    %vm4148 = vmor %vm4146, %vm4147
    %v4149 = vsel %vm4148, %v4141, %v4145
    %v4150 = vand.u32 2147483647, %v4138
    %vm4151 = vcmp.eq.f32.partialorder %v4150, 8.507059e+37
    %v4152 = vand.u32 %v4138, 2147483648
    %v4153 = vor.u32 1.1754944e-38, %v4152
    %v4154 = vsel %vm4151, %v4153, %v4149
    %v4155 = vmul.f32 1.0, %v4154
    %v4156 = vrcp.pop %v4139
    %v4157 = vmul.f32 %v4139, %v4156
    %v4158 = vsub.f32 1.0, %v4157
    %v4159 = vmul.f32 %v4156, %v4158
    %v4160 = vadd.f32 %v4156, %v4159
    %vm4161 = vweird.f32 %v4139
    %vm4162 = vweird.f32 %v4156
    %vm4163 = vmor %vm4161, %vm4162
    %v4164 = vsel %vm4163, %v4156, %v4160
    %v4165 = vand.u32 2147483647, %v4139
    %vm4166 = vcmp.eq.f32.partialorder %v4165, 8.507059e+37
    %v4167 = vand.u32 %v4139, 2147483648
    %v4168 = vor.u32 1.1754944e-38, %v4167
    %v4169 = vsel %vm4166, %v4168, %v4164
    %v4170 = vmul.f32 1.0, %v4169
    %v4171 = vrcp.pop %v4140
    %v4172 = vmul.f32 %v4140, %v4171
    %v4173 = vsub.f32 1.0, %v4172
    %v4174 = vmul.f32 %v4171, %v4173
    %v4175 = vadd.f32 %v4171, %v4174
    %vm4176 = vweird.f32 %v4140
    %vm4177 = vweird.f32 %v4171
    %vm4178 = vmor %vm4176, %vm4177
    %v4179 = vsel %vm4178, %v4171, %v4175
    %v4180 = vand.u32 2147483647, %v4140
    %vm4181 = vcmp.eq.f32.partialorder %v4180, 8.507059e+37
    %v4182 = vand.u32 %v4140, 2147483648
    %v4183 = vor.u32 1.1754944e-38, %v4182
    %v4184 = vsel %vm4181, %v4183, %v4179
    %v4185 = vmul.f32 1.0, %v4184
    %v4186 = vtanh.pop %v4128
    %v4187 = vmul.f32 %v4170, %v4041
    %v4188 = vmul.f32 %v4155, %v4186
    %v4189 = vadd.f32 %v4187, %v4188
    %v4190 = vtanh.pop %v4189
    %v4191 = vmul.f32 %v4185, %v4190
    %4192 = vst [vmem:[#allocation2 + $0x18] sm:$0xff] %v4191
    %4193 = vmatpush.msra.mxu0 %v3593
    %4194 = vmatpush.msra.mxu0 %v3589
    %4195 = vmatpush.msra.mxu0 %v3585
    %4196 = vmatpush.msra.mxu0 %v3581
    %4197 = vmatpush.msra.mxu0 %v3577
    %4198 = vmatpush.msra.mxu0 %v3573
    %4199 = vmatpush.msra.mxu0 %v3569
    %4200 = vmatpush.msra.mxu0 %v3565
    %4201 = vmatpush.msra.mxu0 %v3561
    %4202 = vmatpush.msra.mxu0 %v3557
    %4203 = vmatpush.msra.mxu0 %v3553
    %4204 = vmatpush.msra.mxu0 %v3549
    %4205 = vmatpush.msra.mxu0 %v3545
    %4206 = vmatpush.msra.mxu0 %v3541
    %4207 = vmatpush.msra.mxu0 %v3537
    %4208 = vmatpush.msra.mxu0 %v3533
    %4209 = vmatmul.f32.gmra.mxu0 %v4191
    %v4210 = vpop.f32.mrf.mxu0
    %v4211 = vadd.f32 0.0, %v4210
    %4212 = vdwg.mxu0
    %4213 = vmatpush.msra.mxu0 %v3594
    %4214 = vmatpush.msra.mxu0 %v3590
    %4215 = vmatpush.msra.mxu0 %v3586
    %4216 = vmatpush.msra.mxu0 %v3582
    %4217 = vmatpush.msra.mxu0 %v3578
    %4218 = vmatpush.msra.mxu0 %v3574
    %4219 = vmatpush.msra.mxu0 %v3570
    %4220 = vmatpush.msra.mxu0 %v3566
    %4221 = vmatpush.msra.mxu0 %v3562
    %4222 = vmatpush.msra.mxu0 %v3558
    %4223 = vmatpush.msra.mxu0 %v3554
    %4224 = vmatpush.msra.mxu0 %v3550
    %4225 = vmatpush.msra.mxu0 %v3546
    %4226 = vmatpush.msra.mxu0 %v3542
    %4227 = vmatpush.msra.mxu0 %v3538
    %4228 = vmatpush.msra.mxu0 %v3534
    %4229 = vmatmul.f32.gmra.mxu0 %v4191
    %v4230 = vpop.f32.mrf.mxu0
    %v4231 = vadd.f32 0.0, %v4230
    %4232 = vdwg.mxu0
    %4233 = vmatpush.msra.mxu0 %v3595
    %4234 = vmatpush.msra.mxu0 %v3591
    %4235 = vmatpush.msra.mxu0 %v3587
    %4236 = vmatpush.msra.mxu0 %v3583
    %4237 = vmatpush.msra.mxu0 %v3579
    %4238 = vmatpush.msra.mxu0 %v3575
    %4239 = vmatpush.msra.mxu0 %v3571
    %4240 = vmatpush.msra.mxu0 %v3567
    %4241 = vmatpush.msra.mxu0 %v3563
    %4242 = vmatpush.msra.mxu0 %v3559
    %4243 = vmatpush.msra.mxu0 %v3555
    %4244 = vmatpush.msra.mxu0 %v3551
    %4245 = vmatpush.msra.mxu0 %v3547
    %4246 = vmatpush.msra.mxu0 %v3543
    %4247 = vmatpush.msra.mxu0 %v3539
    %4248 = vmatpush.msra.mxu0 %v3535
    %4249 = vmatmul.f32.gmra.mxu0 %v4191
    %v4250 = vpop.f32.mrf.mxu0
    %v4251 = vadd.f32 0.0, %v4250
    %4252 = vdwg.mxu0
    %4253 = vmatpush.msra.mxu0 %v3596
    %4254 = vmatpush.msra.mxu0 %v3592
    %4255 = vmatpush.msra.mxu0 %v3588
    %4256 = vmatpush.msra.mxu0 %v3584
    %4257 = vmatpush.msra.mxu0 %v3580
    %4258 = vmatpush.msra.mxu0 %v3576
    %4259 = vmatpush.msra.mxu0 %v3572
    %4260 = vmatpush.msra.mxu0 %v3568
    %4261 = vmatpush.msra.mxu0 %v3564
    %4262 = vmatpush.msra.mxu0 %v3560
    %4263 = vmatpush.msra.mxu0 %v3556
    %4264 = vmatpush.msra.mxu0 %v3552
    %4265 = vmatpush.msra.mxu0 %v3548
    %4266 = vmatpush.msra.mxu0 %v3544
    %4267 = vmatpush.msra.mxu0 %v3540
    %4268 = vmatpush.msra.mxu0 %v3536
    %4269 = vmatmul.f32.gmra.mxu0 %v4191
    %v4270 = vpop.f32.mrf.mxu0
    %v4271 = vadd.f32 0.0, %v4270
    %4272 = vdwg.mxu0
    %v4273 = vadd.f32 %v3399, %v4211
    %v4274 = vadd.f32 %v3440, %v4231
    %v4275 = vadd.f32 %v3481, %v4251
    %v4276 = vadd.f32 %v3522, %v4271
    %v4277 = vxor.u32 %v4273, 2147483648
    %v4278 = vxor.u32 %v4274, 2147483648
    %v4279 = vxor.u32 %v4275, 2147483648
    %v4280 = vmul.f32 %v4277, 1.442695
    %v4281 = vpow.pop %v4280
    %v4282 = vmul.f32 %v4278, 1.442695
    %v4283 = vpow.pop %v4282
    %v4284 = vmul.f32 %v4279, 1.442695
    %v4285 = vpow.pop %v4284
    %v4286 = vadd.f32 %v4281, 1.0
    %v4287 = vadd.f32 %v4283, 1.0
    %v4288 = vadd.f32 %v4285, 1.0
    %v4289 = vrcp.pop %v4286
    %v4290 = vmul.f32 %v4286, %v4289
    %v4291 = vsub.f32 1.0, %v4290
    %v4292 = vmul.f32 %v4289, %v4291
    %v4293 = vadd.f32 %v4289, %v4292
    %vm4294 = vweird.f32 %v4286
    %vm4295 = vweird.f32 %v4289
    %vm4296 = vmor %vm4294, %vm4295
    %v4297 = vsel %vm4296, %v4289, %v4293
    %v4298 = vand.u32 2147483647, %v4286
    %vm4299 = vcmp.eq.f32.partialorder %v4298, 8.507059e+37
    %v4300 = vand.u32 %v4286, 2147483648
    %v4301 = vor.u32 1.1754944e-38, %v4300
    %v4302 = vsel %vm4299, %v4301, %v4297
    %v4303 = vmul.f32 1.0, %v4302
    %v4304 = vrcp.pop %v4287
    %v4305 = vmul.f32 %v4287, %v4304
    %v4306 = vsub.f32 1.0, %v4305
    %v4307 = vmul.f32 %v4304, %v4306
    %v4308 = vadd.f32 %v4304, %v4307
    %vm4309 = vweird.f32 %v4287
    %vm4310 = vweird.f32 %v4304
    %vm4311 = vmor %vm4309, %vm4310
    %v4312 = vsel %vm4311, %v4304, %v4308
    %v4313 = vand.u32 2147483647, %v4287
    %vm4314 = vcmp.eq.f32.partialorder %v4313, 8.507059e+37
    %v4315 = vand.u32 %v4287, 2147483648
    %v4316 = vor.u32 1.1754944e-38, %v4315
    %v4317 = vsel %vm4314, %v4316, %v4312
    %v4318 = vmul.f32 1.0, %v4317
    %v4319 = vrcp.pop %v4288
    %v4320 = vmul.f32 %v4288, %v4319
    %v4321 = vsub.f32 1.0, %v4320
    %v4322 = vmul.f32 %v4319, %v4321
    %v4323 = vadd.f32 %v4319, %v4322
    %vm4324 = vweird.f32 %v4288
    %vm4325 = vweird.f32 %v4319
    %vm4326 = vmor %vm4324, %vm4325
    %v4327 = vsel %vm4326, %v4319, %v4323
    %v4328 = vand.u32 2147483647, %v4288
    %vm4329 = vcmp.eq.f32.partialorder %v4328, 8.507059e+37
    %v4330 = vand.u32 %v4288, 2147483648
    %v4331 = vor.u32 1.1754944e-38, %v4330
    %v4332 = vsel %vm4329, %v4331, %v4327
    %v4333 = vmul.f32 1.0, %v4332
    %v4334 = vtanh.pop %v4276
    %v4335 = vmul.f32 %v4318, %v4189
    %v4336 = vmul.f32 %v4303, %v4334
    %v4337 = vadd.f32 %v4335, %v4336
    %v4338 = vtanh.pop %v4337
    %v4339 = vmul.f32 %v4333, %v4338
    %4340 = vst [vmem:[#allocation2 + $0x20] sm:$0xff] %v4339
    %4341 = vmatpush.msra.mxu0 %v3593
    %4342 = vmatpush.msra.mxu0 %v3589
    %4343 = vmatpush.msra.mxu0 %v3585
    %4344 = vmatpush.msra.mxu0 %v3581
    %4345 = vmatpush.msra.mxu0 %v3577
    %4346 = vmatpush.msra.mxu0 %v3573
    %4347 = vmatpush.msra.mxu0 %v3569
    %4348 = vmatpush.msra.mxu0 %v3565
    %4349 = vmatpush.msra.mxu0 %v3561
    %4350 = vmatpush.msra.mxu0 %v3557
    %4351 = vmatpush.msra.mxu0 %v3553
    %4352 = vmatpush.msra.mxu0 %v3549
    %4353 = vmatpush.msra.mxu0 %v3545
    %4354 = vmatpush.msra.mxu0 %v3541
    %4355 = vmatpush.msra.mxu0 %v3537
    %4356 = vmatpush.msra.mxu0 %v3533
    %4357 = vmatmul.f32.gmra.mxu0 %v4339
    %v4358 = vpop.f32.mrf.mxu0
    %v4359 = vadd.f32 0.0, %v4358
    %4360 = vdwg.mxu0
    %4361 = vmatpush.msra.mxu0 %v3594
    %4362 = vmatpush.msra.mxu0 %v3590
    %4363 = vmatpush.msra.mxu0 %v3586
    %4364 = vmatpush.msra.mxu0 %v3582
    %4365 = vmatpush.msra.mxu0 %v3578
    %4366 = vmatpush.msra.mxu0 %v3574
    %4367 = vmatpush.msra.mxu0 %v3570
    %4368 = vmatpush.msra.mxu0 %v3566
    %4369 = vmatpush.msra.mxu0 %v3562
    %4370 = vmatpush.msra.mxu0 %v3558
    %4371 = vmatpush.msra.mxu0 %v3554
    %4372 = vmatpush.msra.mxu0 %v3550
    %4373 = vmatpush.msra.mxu0 %v3546
    %4374 = vmatpush.msra.mxu0 %v3542
    %4375 = vmatpush.msra.mxu0 %v3538
    %4376 = vmatpush.msra.mxu0 %v3534
    %4377 = vmatmul.f32.gmra.mxu0 %v4339
    %v4378 = vpop.f32.mrf.mxu0
    %v4379 = vadd.f32 0.0, %v4378
    %4380 = vdwg.mxu0
    %4381 = vmatpush.msra.mxu0 %v3595
    %4382 = vmatpush.msra.mxu0 %v3591
    %4383 = vmatpush.msra.mxu0 %v3587
    %4384 = vmatpush.msra.mxu0 %v3583
    %4385 = vmatpush.msra.mxu0 %v3579
    %4386 = vmatpush.msra.mxu0 %v3575
    %4387 = vmatpush.msra.mxu0 %v3571
    %4388 = vmatpush.msra.mxu0 %v3567
    %4389 = vmatpush.msra.mxu0 %v3563
    %4390 = vmatpush.msra.mxu0 %v3559
    %4391 = vmatpush.msra.mxu0 %v3555
    %4392 = vmatpush.msra.mxu0 %v3551
    %4393 = vmatpush.msra.mxu0 %v3547
    %4394 = vmatpush.msra.mxu0 %v3543
    %4395 = vmatpush.msra.mxu0 %v3539
    %4396 = vmatpush.msra.mxu0 %v3535
    %4397 = vmatmul.f32.gmra.mxu0 %v4339
    %v4398 = vpop.f32.mrf.mxu0
    %v4399 = vadd.f32 0.0, %v4398
    %4400 = vdwg.mxu0
    %4401 = vmatpush.msra.mxu0 %v3596
    %4402 = vmatpush.msra.mxu0 %v3592
    %4403 = vmatpush.msra.mxu0 %v3588
    %4404 = vmatpush.msra.mxu0 %v3584
    %4405 = vmatpush.msra.mxu0 %v3580
    %4406 = vmatpush.msra.mxu0 %v3576
    %4407 = vmatpush.msra.mxu0 %v3572
    %4408 = vmatpush.msra.mxu0 %v3568
    %4409 = vmatpush.msra.mxu0 %v3564
    %4410 = vmatpush.msra.mxu0 %v3560
    %4411 = vmatpush.msra.mxu0 %v3556
    %4412 = vmatpush.msra.mxu0 %v3552
    %4413 = vmatpush.msra.mxu0 %v3548
    %4414 = vmatpush.msra.mxu0 %v3544
    %4415 = vmatpush.msra.mxu0 %v3540
    %4416 = vmatpush.msra.mxu0 %v3536
    %4417 = vmatmul.f32.gmra.mxu0 %v4339
    %v4418 = vpop.f32.mrf.mxu0
    %v4419 = vadd.f32 0.0, %v4418
    %4420 = vdwg.mxu0
    %v4421 = vadd.f32 %v3402, %v4359
    %v4422 = vadd.f32 %v3443, %v4379
    %v4423 = vadd.f32 %v3484, %v4399
    %v4424 = vadd.f32 %v3525, %v4419
    %v4425 = vxor.u32 %v4421, 2147483648
    %v4426 = vxor.u32 %v4422, 2147483648
    %v4427 = vxor.u32 %v4423, 2147483648
    %v4428 = vmul.f32 %v4425, 1.442695
    %v4429 = vpow.pop %v4428
    %v4430 = vmul.f32 %v4426, 1.442695
    %v4431 = vpow.pop %v4430
    %v4432 = vmul.f32 %v4427, 1.442695
    %v4433 = vpow.pop %v4432
    %v4434 = vadd.f32 %v4429, 1.0
    %v4435 = vadd.f32 %v4431, 1.0
    %v4436 = vadd.f32 %v4433, 1.0
    %v4437 = vrcp.pop %v4434
    %v4438 = vmul.f32 %v4434, %v4437
    %v4439 = vsub.f32 1.0, %v4438
    %v4440 = vmul.f32 %v4437, %v4439
    %v4441 = vadd.f32 %v4437, %v4440
    %vm4442 = vweird.f32 %v4434
    %vm4443 = vweird.f32 %v4437
    %vm4444 = vmor %vm4442, %vm4443
    %v4445 = vsel %vm4444, %v4437, %v4441
    %v4446 = vand.u32 2147483647, %v4434
    %vm4447 = vcmp.eq.f32.partialorder %v4446, 8.507059e+37
    %v4448 = vand.u32 %v4434, 2147483648
    %v4449 = vor.u32 1.1754944e-38, %v4448
    %v4450 = vsel %vm4447, %v4449, %v4445
    %v4451 = vmul.f32 1.0, %v4450
    %v4452 = vrcp.pop %v4435
    %v4453 = vmul.f32 %v4435, %v4452
    %v4454 = vsub.f32 1.0, %v4453
    %v4455 = vmul.f32 %v4452, %v4454
    %v4456 = vadd.f32 %v4452, %v4455
    %vm4457 = vweird.f32 %v4435
    %vm4458 = vweird.f32 %v4452
    %vm4459 = vmor %vm4457, %vm4458
    %v4460 = vsel %vm4459, %v4452, %v4456
    %v4461 = vand.u32 2147483647, %v4435
    %vm4462 = vcmp.eq.f32.partialorder %v4461, 8.507059e+37
    %v4463 = vand.u32 %v4435, 2147483648
    %v4464 = vor.u32 1.1754944e-38, %v4463
    %v4465 = vsel %vm4462, %v4464, %v4460
    %v4466 = vmul.f32 1.0, %v4465
    %v4467 = vrcp.pop %v4436
    %v4468 = vmul.f32 %v4436, %v4467
    %v4469 = vsub.f32 1.0, %v4468
    %v4470 = vmul.f32 %v4467, %v4469
    %v4471 = vadd.f32 %v4467, %v4470
    %vm4472 = vweird.f32 %v4436
    %vm4473 = vweird.f32 %v4467
    %vm4474 = vmor %vm4472, %vm4473
    %v4475 = vsel %vm4474, %v4467, %v4471
    %v4476 = vand.u32 2147483647, %v4436
    %vm4477 = vcmp.eq.f32.partialorder %v4476, 8.507059e+37
    %v4478 = vand.u32 %v4436, 2147483648
    %v4479 = vor.u32 1.1754944e-38, %v4478
    %v4480 = vsel %vm4477, %v4479, %v4475
    %v4481 = vmul.f32 1.0, %v4480
    %v4482 = vtanh.pop %v4424
    %v4483 = vmul.f32 %v4466, %v4337
    %v4484 = vmul.f32 %v4451, %v4482
    %v4485 = vadd.f32 %v4483, %v4484
    %v4486 = vtanh.pop %v4485
    %v4487 = vmul.f32 %v4481, %v4486
    %4488 = vst [vmem:[#allocation2 + $0x28] sm:$0xff] %v4487
    %4489 = vmatpush.msra.mxu0 %v3593
    %4490 = vmatpush.msra.mxu0 %v3589
    %4491 = vmatpush.msra.mxu0 %v3585
    %4492 = vmatpush.msra.mxu0 %v3581
    %4493 = vmatpush.msra.mxu0 %v3577
    %4494 = vmatpush.msra.mxu0 %v3573
    %4495 = vmatpush.msra.mxu0 %v3569
    %4496 = vmatpush.msra.mxu0 %v3565
    %4497 = vmatpush.msra.mxu0 %v3561
    %4498 = vmatpush.msra.mxu0 %v3557
    %4499 = vmatpush.msra.mxu0 %v3553
    %4500 = vmatpush.msra.mxu0 %v3549
    %4501 = vmatpush.msra.mxu0 %v3545
    %4502 = vmatpush.msra.mxu0 %v3541
    %4503 = vmatpush.msra.mxu0 %v3537
    %4504 = vmatpush.msra.mxu0 %v3533
    %4505 = vmatmul.f32.gmra.mxu0 %v4487
    %v4506 = vpop.f32.mrf.mxu0
    %v4507 = vadd.f32 0.0, %v4506
    %4508 = vdwg.mxu0
    %4509 = vmatpush.msra.mxu0 %v3594
    %4510 = vmatpush.msra.mxu0 %v3590
    %4511 = vmatpush.msra.mxu0 %v3586
    %4512 = vmatpush.msra.mxu0 %v3582
    %4513 = vmatpush.msra.mxu0 %v3578
    %4514 = vmatpush.msra.mxu0 %v3574
    %4515 = vmatpush.msra.mxu0 %v3570
    %4516 = vmatpush.msra.mxu0 %v3566
    %4517 = vmatpush.msra.mxu0 %v3562
    %4518 = vmatpush.msra.mxu0 %v3558
    %4519 = vmatpush.msra.mxu0 %v3554
    %4520 = vmatpush.msra.mxu0 %v3550
    %4521 = vmatpush.msra.mxu0 %v3546
    %4522 = vmatpush.msra.mxu0 %v3542
    %4523 = vmatpush.msra.mxu0 %v3538
    %4524 = vmatpush.msra.mxu0 %v3534
    %4525 = vmatmul.f32.gmra.mxu0 %v4487
    %v4526 = vpop.f32.mrf.mxu0
    %v4527 = vadd.f32 0.0, %v4526
    %4528 = vdwg.mxu0
    %4529 = vmatpush.msra.mxu0 %v3595
    %4530 = vmatpush.msra.mxu0 %v3591
    %4531 = vmatpush.msra.mxu0 %v3587
    %4532 = vmatpush.msra.mxu0 %v3583
    %4533 = vmatpush.msra.mxu0 %v3579
    %4534 = vmatpush.msra.mxu0 %v3575
    %4535 = vmatpush.msra.mxu0 %v3571
    %4536 = vmatpush.msra.mxu0 %v3567
    %4537 = vmatpush.msra.mxu0 %v3563
    %4538 = vmatpush.msra.mxu0 %v3559
    %4539 = vmatpush.msra.mxu0 %v3555
    %4540 = vmatpush.msra.mxu0 %v3551
    %4541 = vmatpush.msra.mxu0 %v3547
    %4542 = vmatpush.msra.mxu0 %v3543
    %4543 = vmatpush.msra.mxu0 %v3539
    %4544 = vmatpush.msra.mxu0 %v3535
    %4545 = vmatmul.f32.gmra.mxu0 %v4487
    %v4546 = vpop.f32.mrf.mxu0
    %v4547 = vadd.f32 0.0, %v4546
    %4548 = vdwg.mxu0
    %4549 = vmatpush.msra.mxu0 %v3596
    %4550 = vmatpush.msra.mxu0 %v3592
    %4551 = vmatpush.msra.mxu0 %v3588
    %4552 = vmatpush.msra.mxu0 %v3584
    %4553 = vmatpush.msra.mxu0 %v3580
    %4554 = vmatpush.msra.mxu0 %v3576
    %4555 = vmatpush.msra.mxu0 %v3572
    %4556 = vmatpush.msra.mxu0 %v3568
    %4557 = vmatpush.msra.mxu0 %v3564
    %4558 = vmatpush.msra.mxu0 %v3560
    %4559 = vmatpush.msra.mxu0 %v3556
    %4560 = vmatpush.msra.mxu0 %v3552
    %4561 = vmatpush.msra.mxu0 %v3548
    %4562 = vmatpush.msra.mxu0 %v3544
    %4563 = vmatpush.msra.mxu0 %v3540
    %4564 = vmatpush.msra.mxu0 %v3536
    %4565 = vmatmul.f32.gmra.mxu0 %v4487
    %v4566 = vpop.f32.mrf.mxu0
    %v4567 = vadd.f32 0.0, %v4566
    %4568 = vdwg.mxu0
    %v4569 = vadd.f32 %v3405, %v4507
    %v4570 = vadd.f32 %v3446, %v4527
    %v4571 = vadd.f32 %v3487, %v4547
    %v4572 = vadd.f32 %v3528, %v4567
    %v4573 = vxor.u32 %v4569, 2147483648
    %v4574 = vxor.u32 %v4570, 2147483648
    %v4575 = vxor.u32 %v4571, 2147483648
    %v4576 = vmul.f32 %v4573, 1.442695
    %v4577 = vpow.pop %v4576
    %v4578 = vmul.f32 %v4574, 1.442695
    %v4579 = vpow.pop %v4578
    %v4580 = vmul.f32 %v4575, 1.442695
    %v4581 = vpow.pop %v4580
    %v4582 = vadd.f32 %v4577, 1.0
    %v4583 = vadd.f32 %v4579, 1.0
    %v4584 = vadd.f32 %v4581, 1.0
    %v4585 = vrcp.pop %v4582
    %v4586 = vmul.f32 %v4582, %v4585
    %v4587 = vsub.f32 1.0, %v4586
    %v4588 = vmul.f32 %v4585, %v4587
    %v4589 = vadd.f32 %v4585, %v4588
    %vm4590 = vweird.f32 %v4582
    %vm4591 = vweird.f32 %v4585
    %vm4592 = vmor %vm4590, %vm4591
    %v4593 = vsel %vm4592, %v4585, %v4589
    %v4594 = vand.u32 2147483647, %v4582
    %vm4595 = vcmp.eq.f32.partialorder %v4594, 8.507059e+37
    %v4596 = vand.u32 %v4582, 2147483648
    %v4597 = vor.u32 1.1754944e-38, %v4596
    %v4598 = vsel %vm4595, %v4597, %v4593
    %v4599 = vmul.f32 1.0, %v4598
    %v4600 = vrcp.pop %v4583
    %v4601 = vmul.f32 %v4583, %v4600
    %v4602 = vsub.f32 1.0, %v4601
    %v4603 = vmul.f32 %v4600, %v4602
    %v4604 = vadd.f32 %v4600, %v4603
    %vm4605 = vweird.f32 %v4583
    %vm4606 = vweird.f32 %v4600
    %vm4607 = vmor %vm4605, %vm4606
    %v4608 = vsel %vm4607, %v4600, %v4604
    %v4609 = vand.u32 2147483647, %v4583
    %vm4610 = vcmp.eq.f32.partialorder %v4609, 8.507059e+37
    %v4611 = vand.u32 %v4583, 2147483648
    %v4612 = vor.u32 1.1754944e-38, %v4611
    %v4613 = vsel %vm4610, %v4612, %v4608
    %v4614 = vmul.f32 1.0, %v4613
    %v4615 = vrcp.pop %v4584
    %v4616 = vmul.f32 %v4584, %v4615
    %v4617 = vsub.f32 1.0, %v4616
    %v4618 = vmul.f32 %v4615, %v4617
    %v4619 = vadd.f32 %v4615, %v4618
    %vm4620 = vweird.f32 %v4584
    %vm4621 = vweird.f32 %v4615
    %vm4622 = vmor %vm4620, %vm4621
    %v4623 = vsel %vm4622, %v4615, %v4619
    %v4624 = vand.u32 2147483647, %v4584
    %vm4625 = vcmp.eq.f32.partialorder %v4624, 8.507059e+37
    %v4626 = vand.u32 %v4584, 2147483648
    %v4627 = vor.u32 1.1754944e-38, %v4626
    %v4628 = vsel %vm4625, %v4627, %v4623
    %v4629 = vmul.f32 1.0, %v4628
    %v4630 = vtanh.pop %v4572
    %v4631 = vmul.f32 %v4614, %v4485
    %v4632 = vmul.f32 %v4599, %v4630
    %v4633 = vadd.f32 %v4631, %v4632
    %v4634 = vtanh.pop %v4633
    %v4635 = vmul.f32 %v4629, %v4634
    %4636 = vst [vmem:[#allocation2 + $0x30] sm:$0xff] %v4635
    %4637 = vmatpush.msra.mxu0 %v3593
    %4638 = vmatpush.msra.mxu0 %v3589
    %4639 = vmatpush.msra.mxu0 %v3585
    %4640 = vmatpush.msra.mxu0 %v3581
    %4641 = vmatpush.msra.mxu0 %v3577
    %4642 = vmatpush.msra.mxu0 %v3573
    %4643 = vmatpush.msra.mxu0 %v3569
    %4644 = vmatpush.msra.mxu0 %v3565
    %4645 = vmatpush.msra.mxu0 %v3561
    %4646 = vmatpush.msra.mxu0 %v3557
    %4647 = vmatpush.msra.mxu0 %v3553
    %4648 = vmatpush.msra.mxu0 %v3549
    %4649 = vmatpush.msra.mxu0 %v3545
    %4650 = vmatpush.msra.mxu0 %v3541
    %4651 = vmatpush.msra.mxu0 %v3537
    %4652 = vmatpush.msra.mxu0 %v3533
    %4653 = vmatmul.f32.gmra.mxu0 %v4635
    %v4654 = vpop.f32.mrf.mxu0
    %v4655 = vadd.f32 0.0, %v4654
    %4656 = vdwg.mxu0
    %4657 = vmatpush.msra.mxu0 %v3594
    %4658 = vmatpush.msra.mxu0 %v3590
    %4659 = vmatpush.msra.mxu0 %v3586
    %4660 = vmatpush.msra.mxu0 %v3582
    %4661 = vmatpush.msra.mxu0 %v3578
    %4662 = vmatpush.msra.mxu0 %v3574
    %4663 = vmatpush.msra.mxu0 %v3570
    %4664 = vmatpush.msra.mxu0 %v3566
    %4665 = vmatpush.msra.mxu0 %v3562
    %4666 = vmatpush.msra.mxu0 %v3558
    %4667 = vmatpush.msra.mxu0 %v3554
    %4668 = vmatpush.msra.mxu0 %v3550
    %4669 = vmatpush.msra.mxu0 %v3546
    %4670 = vmatpush.msra.mxu0 %v3542
    %4671 = vmatpush.msra.mxu0 %v3538
    %4672 = vmatpush.msra.mxu0 %v3534
    %4673 = vmatmul.f32.gmra.mxu0 %v4635
    %v4674 = vpop.f32.mrf.mxu0
    %v4675 = vadd.f32 0.0, %v4674
    %4676 = vdwg.mxu0
    %4677 = vmatpush.msra.mxu0 %v3595
    %4678 = vmatpush.msra.mxu0 %v3591
    %4679 = vmatpush.msra.mxu0 %v3587
    %4680 = vmatpush.msra.mxu0 %v3583
    %4681 = vmatpush.msra.mxu0 %v3579
    %4682 = vmatpush.msra.mxu0 %v3575
    %4683 = vmatpush.msra.mxu0 %v3571
    %4684 = vmatpush.msra.mxu0 %v3567
    %4685 = vmatpush.msra.mxu0 %v3563
    %4686 = vmatpush.msra.mxu0 %v3559
    %4687 = vmatpush.msra.mxu0 %v3555
    %4688 = vmatpush.msra.mxu0 %v3551
    %4689 = vmatpush.msra.mxu0 %v3547
    %4690 = vmatpush.msra.mxu0 %v3543
    %4691 = vmatpush.msra.mxu0 %v3539
    %4692 = vmatpush.msra.mxu0 %v3535
    %4693 = vmatmul.f32.gmra.mxu0 %v4635
    %v4694 = vpop.f32.mrf.mxu0
    %v4695 = vadd.f32 0.0, %v4694
    %4696 = vdwg.mxu0
    %4697 = vmatpush.msra.mxu0 %v3596
    %4698 = vmatpush.msra.mxu0 %v3592
    %4699 = vmatpush.msra.mxu0 %v3588
    %4700 = vmatpush.msra.mxu0 %v3584
    %4701 = vmatpush.msra.mxu0 %v3580
    %4702 = vmatpush.msra.mxu0 %v3576
    %4703 = vmatpush.msra.mxu0 %v3572
    %4704 = vmatpush.msra.mxu0 %v3568
    %4705 = vmatpush.msra.mxu0 %v3564
    %4706 = vmatpush.msra.mxu0 %v3560
    %4707 = vmatpush.msra.mxu0 %v3556
    %4708 = vmatpush.msra.mxu0 %v3552
    %4709 = vmatpush.msra.mxu0 %v3548
    %4710 = vmatpush.msra.mxu0 %v3544
    %4711 = vmatpush.msra.mxu0 %v3540
    %4712 = vmatpush.msra.mxu0 %v3536
    %4713 = vmatmul.f32.gmra.mxu0 %v4635
    %v4714 = vpop.f32.mrf.mxu0
    %v4715 = vadd.f32 0.0, %v4714
    %4716 = vdwg.mxu0
    %v4717 = vadd.f32 %v3408, %v4655
    %v4718 = vadd.f32 %v3449, %v4675
    %v4719 = vadd.f32 %v3490, %v4695
    %v4720 = vadd.f32 %v3531, %v4715
    %v4721 = vxor.u32 %v4717, 2147483648
    %v4722 = vxor.u32 %v4718, 2147483648
    %v4723 = vxor.u32 %v4719, 2147483648
    %v4724 = vmul.f32 %v4721, 1.442695
    %v4725 = vpow.pop %v4724
    %v4726 = vmul.f32 %v4722, 1.442695
    %v4727 = vpow.pop %v4726
    %v4728 = vmul.f32 %v4723, 1.442695
    %v4729 = vpow.pop %v4728
    %v4730 = vadd.f32 %v4725, 1.0
    %v4731 = vadd.f32 %v4727, 1.0
    %v4732 = vadd.f32 %v4729, 1.0
    %v4733 = vrcp.pop %v4730
    %v4734 = vmul.f32 %v4730, %v4733
    %v4735 = vsub.f32 1.0, %v4734
    %v4736 = vmul.f32 %v4733, %v4735
    %v4737 = vadd.f32 %v4733, %v4736
    %vm4738 = vweird.f32 %v4730
    %vm4739 = vweird.f32 %v4733
    %vm4740 = vmor %vm4738, %vm4739
    %v4741 = vsel %vm4740, %v4733, %v4737
    %v4742 = vand.u32 2147483647, %v4730
    %vm4743 = vcmp.eq.f32.partialorder %v4742, 8.507059e+37
    %v4744 = vand.u32 %v4730, 2147483648
    %v4745 = vor.u32 1.1754944e-38, %v4744
    %v4746 = vsel %vm4743, %v4745, %v4741
    %v4747 = vmul.f32 1.0, %v4746
    %v4748 = vrcp.pop %v4731
    %v4749 = vmul.f32 %v4731, %v4748
    %v4750 = vsub.f32 1.0, %v4749
    %v4751 = vmul.f32 %v4748, %v4750
    %v4752 = vadd.f32 %v4748, %v4751
    %vm4753 = vweird.f32 %v4731
    %vm4754 = vweird.f32 %v4748
    %vm4755 = vmor %vm4753, %vm4754
    %v4756 = vsel %vm4755, %v4748, %v4752
    %v4757 = vand.u32 2147483647, %v4731
    %vm4758 = vcmp.eq.f32.partialorder %v4757, 8.507059e+37
    %v4759 = vand.u32 %v4731, 2147483648
    %v4760 = vor.u32 1.1754944e-38, %v4759
    %v4761 = vsel %vm4758, %v4760, %v4756
    %v4762 = vmul.f32 1.0, %v4761
    %v4763 = vrcp.pop %v4732
    %v4764 = vmul.f32 %v4732, %v4763
    %v4765 = vsub.f32 1.0, %v4764
    %v4766 = vmul.f32 %v4763, %v4765
    %v4767 = vadd.f32 %v4763, %v4766
    %vm4768 = vweird.f32 %v4732
    %vm4769 = vweird.f32 %v4763
    %vm4770 = vmor %vm4768, %vm4769
    %v4771 = vsel %vm4770, %v4763, %v4767
    %v4772 = vand.u32 2147483647, %v4732
    %vm4773 = vcmp.eq.f32.partialorder %v4772, 8.507059e+37
    %v4774 = vand.u32 %v4732, 2147483648
    %v4775 = vor.u32 1.1754944e-38, %v4774
    %v4776 = vsel %vm4773, %v4775, %v4771
    %v4777 = vmul.f32 1.0, %v4776
    %v4778 = vtanh.pop %v4720
    %v4779 = vmul.f32 %v4762, %v4633
    %v4780 = vmul.f32 %v4747, %v4778
    %v4781 = vadd.f32 %v4779, %v4780
    %v4782 = vtanh.pop %v4781
    %v4783 = vmul.f32 %v4777, %v4782
    %4784 = vst [vmem:[#allocation2 + $0x38] sm:$0xff] %v4783
    %s4785 = scalar_lea.vmem [#allocation18], 16
    %4786 = vst [vmem:[%s4785] sm:$0xff] %v4783
    %s4787 = scalar_lea.vmem [#allocation20], 16
    %4788 = vst [vmem:[%s4787] sm:$0xff] %v4781
    %v4789 = vld [vmem:[#allocation2] sm:$0xff]
    %v4790 = vld [vmem:[#allocation2 + $0x8] sm:$0xff]
    %v4791 = vld [vmem:[#allocation2 + $0x10] sm:$0xff]
    %v4792 = vld [vmem:[#allocation2 + $0x18] sm:$0xff]
    %v4793 = vld [vmem:[#allocation2 + $0x20] sm:$0xff]
    %v4794 = vld [vmem:[#allocation2 + $0x28] sm:$0xff]
    %v4795 = vld [vmem:[#allocation2 + $0x30] sm:$0xff]
    %v4796 = vld [vmem:[#allocation2 + $0x38] sm:$0xff]
    %v4797 = vld [vmem:[#allocation15] sm:$0xff]
    %v4798 = vld [vmem:[#allocation15 + $0x8] sm:$0xff]
    %v4799 = vld [vmem:[#allocation15 + $0x10] sm:$0xff]
    %v4800 = vld [vmem:[#allocation15 + $0x18] sm:$0xff]
    %v4801 = vld [vmem:[#allocation15 + $0x20] sm:$0xff]
    %v4802 = vld [vmem:[#allocation15 + $0x28] sm:$0xff]
    %v4803 = vld [vmem:[#allocation15 + $0x30] sm:$0xff]
    %v4804 = vld [vmem:[#allocation15 + $0x38] sm:$0xff]
    %v4805 = vld [vmem:[#allocation15 + $0x40] sm:$0xff]
    %v4806 = vld [vmem:[#allocation15 + $0x48] sm:$0xff]
    %v4807 = vld [vmem:[#allocation15 + $0x50] sm:$0xff]
    %v4808 = vld [vmem:[#allocation15 + $0x58] sm:$0xff]
    %v4809 = vld [vmem:[#allocation15 + $0x60] sm:$0xff]
    %v4810 = vld [vmem:[#allocation15 + $0x68] sm:$0xff]
    %v4811 = vld [vmem:[#allocation15 + $0x70] sm:$0xff]
    %v4812 = vld [vmem:[#allocation15 + $0x78] sm:$0xff]
    %v4813 = vld [vmem:[%s12] sm:$0x1]
    %v4815 = vperm.slane %v4813, 0
    %4817 = vmatpush.msra.mxu0 %v4812
    %4818 = vmatpush.msra.mxu0 %v4811
    %4819 = vmatpush.msra.mxu0 %v4810
    %4820 = vmatpush.msra.mxu0 %v4809
    %4821 = vmatpush.msra.mxu0 %v4808
    %4822 = vmatpush.msra.mxu0 %v4807
    %4823 = vmatpush.msra.mxu0 %v4806
    %4824 = vmatpush.msra.mxu0 %v4805
    %4825 = vmatpush.msra.mxu0 %v4804
    %4826 = vmatpush.msra.mxu0 %v4803
    %4827 = vmatpush.msra.mxu0 %v4802
    %4828 = vmatpush.msra.mxu0 %v4801
    %4829 = vmatpush.msra.mxu0 %v4800
    %4830 = vmatpush.msra.mxu0 %v4799
    %4831 = vmatpush.msra.mxu0 %v4798
    %4832 = vmatpush.msra.mxu0 %v4797
    %4833 = vmatmul.f32.gmra.mxu0 %v4789
    %v4834 = vpop.f32.mrf.mxu0
    %v4835 = vadd.f32 %v4815, %v4834
    %4836 = vmatmul.f32.gmra.mxu0 %v4790
    %v4837 = vpop.f32.mrf.mxu0
    %v4838 = vadd.f32 %v4815, %v4837
    %4839 = vmatmul.f32.gmra.mxu0 %v4791
    %v4840 = vpop.f32.mrf.mxu0
    %v4841 = vadd.f32 %v4815, %v4840
    %4842 = vmatmul.f32.gmra.mxu0 %v4792
    %v4843 = vpop.f32.mrf.mxu0
    %v4844 = vadd.f32 %v4815, %v4843
    %4845 = vmatmul.f32.gmra.mxu0 %v4793
    %v4846 = vpop.f32.mrf.mxu0
    %v4847 = vadd.f32 %v4815, %v4846
    %4848 = vmatmul.f32.gmra.mxu0 %v4794
    %v4849 = vpop.f32.mrf.mxu0
    %v4850 = vadd.f32 %v4815, %v4849
    %4851 = vmatmul.f32.gmra.mxu0 %v4795
    %v4852 = vpop.f32.mrf.mxu0
    %v4853 = vadd.f32 %v4815, %v4852
    %4854 = vmatmul.f32.gmra.mxu0 %v4796
    %v4855 = vpop.f32.mrf.mxu0
    %v4856 = vadd.f32 %v4815, %v4855
    %4857 = vdwg.mxu0
    %4858 = vst [vmem:[#allocation17] sm:$0xff] %v4835
    %4859 = vst [vmem:[#allocation17 + $0x8] sm:$0xff] %v4838
    %4860 = vst [vmem:[#allocation17 + $0x10] sm:$0xff] %v4841
    %4861 = vst [vmem:[#allocation17 + $0x18] sm:$0xff] %v4844
    %4862 = vst [vmem:[#allocation17 + $0x20] sm:$0xff] %v4847
    %4863 = vst [vmem:[#allocation17 + $0x28] sm:$0xff] %v4850
    %4864 = vst [vmem:[#allocation17 + $0x30] sm:$0xff] %v4853
    %4865 = vst [vmem:[#allocation17 + $0x38] sm:$0xff] %v4856
    // Predicated region
    $region94: #{poetry_model_forward.1} parent=1 // pred_check
      _
    $region95: #{poetry_model_forward.1} parent=1 // pred_check_branch
      %4867 = sbr.rel (0) target = $region97
    $region96: #{poetry_model_forward.1} parent=1 // pred_region
      %4869 = vsyncadd [#allocation5], 0
      %s4870 = sshll.u32 [#allocation17], 4
      %s4871 = int_to_ptr.vmem [resolvable:$true] %s4870
      %s4872 = sshll.u32 %s15, 4
      %s4873 = int_to_ptr.hbm [resolvable:$true] %s4872
      %4878 = dma.vmem_to_hbm [thread:$0]  %s4871, 1024, %s4873, [#allocation5], 128, 128, 8
    $region97: #{poetry_model_forward.1} parent=1 // pred_fallthru
      _
    // Predicated region
    $region98: #{poetry_model_forward.1} parent=1 // pred_check
      _
    $region99: #{poetry_model_forward.1} parent=1 // pred_check_branch
      %4880 = sbr.rel (0) target = $region101
    $region100: #{poetry_model_forward.1} parent=1 // pred_region
      %4882 = vsyncadd [#allocation19], 0
      %s4883 = sshll.u32 [#allocation18], 4
      %s4884 = int_to_ptr.vmem [resolvable:$true] %s4883
      %s4885 = sshll.u32 %s16, 4
      %s4886 = int_to_ptr.hbm [resolvable:$true] %s4885
      %4891 = dma.vmem_to_hbm [thread:$0]  %s4884, 384, %s4886, [#allocation19], 128, 128, 8
    $region101: #{poetry_model_forward.1} parent=1 // pred_fallthru
      _
    // Predicated region
    $region102: #{poetry_model_forward.1} parent=1 // pred_check
      _
    $region103: #{poetry_model_forward.1} parent=1 // pred_check_branch
      %4893 = sbr.rel (0) target = $region105
    $region104: #{poetry_model_forward.1} parent=1 // pred_region
      %4895 = vsyncadd [#allocation19], 0
      %s4896 = sshll.u32 [#allocation20], 4
      %s4897 = int_to_ptr.vmem [resolvable:$true] %s4896
      %s4898 = sshll.u32 %s17, 4
      %s4899 = int_to_ptr.hbm [resolvable:$true] %s4898
      %4904 = dma.vmem_to_hbm [thread:$0]  %s4897, 384, %s4899, [#allocation19], 128, 128, 8
    $region105: #{poetry_model_forward.1} parent=1 // pred_fallthru
      _
    // Predicated region
    $region106: #{poetry_model_forward.1} parent=1 // pred_check
      _
    $region107: #{poetry_model_forward.1} parent=1 // pred_check_branch
      %4906 = sbr.rel (0) target = $region109
    $region108: #{poetry_model_forward.1} parent=1 // pred_region
      %4908 = dma.done [#allocation5], 1024
    $region109: #{poetry_model_forward.1} parent=1 // pred_fallthru
      _
    // Predicated region
    $region110: #{poetry_model_forward.1} parent=1 // pred_check
      _
    $region111: #{poetry_model_forward.1} parent=1 // pred_check_branch
      %4910 = sbr.rel (0) target = $region113
    $region112: #{poetry_model_forward.1} parent=1 // pred_region
      %4912 = dma.done [#allocation19], 384
    $region113: #{poetry_model_forward.1} parent=1 // pred_fallthru
      _
    // Predicated region
    $region114: #{poetry_model_forward.1} parent=1 // pred_check
      _
    $region115: #{poetry_model_forward.1} parent=1 // pred_check_branch
      %4914 = sbr.rel (0) target = $region117
    $region116: #{poetry_model_forward.1} parent=1 // pred_region
      %4916 = dma.done [#allocation19], 384
    $region117: #{poetry_model_forward.1} parent=1 // pred_fallthru
      _
    %4917 = vsyncpa [#allocation4], 1
    %4918 = vsyncpa [#allocation7], 1
    %4919 = vsyncpa [#allocation10], 1
    %4920 = vsyncpa [#allocation13], 1
    %4921 = vsyncpa [#allocation16], 1
    %4922 = vsyncpa [#allocation5], 1
    %4923 = vsyncpa [#allocation19], 1

</llo_original>
